<compile_context>
chip_gen: v7x
topology: tpu7x:2x2x1
jax: 0.10.0
libtpu: 0.0.40
codegen_flags: <defaults>
</compile_context>

<pallas_src>
import jax
import jax.numpy as jnp
from jax.experimental import pallas as pl
from jax.experimental.pallas import tpu as pltpu


# --------------------------------------------------------------------------- #
# Kernels
# --------------------------------------------------------------------------- #
def _slm_phase_kernel(fr_ref, fi_ref, ph_ref, or_ref, oi_ref):
    """Complex rotation with in-kernel sin/cos (HBM-bound chips: v5e/v6e)."""
    phi = ph_ref[...]
    c = jnp.cos(phi)
    s = jnp.sin(phi)
    fr = fr_ref[...]
    fi = fi_ref[...]
    or_ref[...] = fr * c - fi * s
    oi_ref[...] = fr * s + fi * c


def _slm_trig_kernel(fr_ref, fi_ref, c_ref, s_ref, or_ref, oi_ref):
    """Complex rotation with precomputed cos/sin (VALU-bound chips: v7x)."""
    c = c_ref[...]
    s = s_ref[...]
    fr = fr_ref[...]
    fi = fi_ref[...]
    or_ref[...] = fr * c - fi * s
    oi_ref[...] = fr * s + fi * c


# --------------------------------------------------------------------------- #
# Generation / layout / tiling helpers
# --------------------------------------------------------------------------- #
def _tpu_generation():
    """Best-effort TPU generation from device_kind; None if unknown."""
    try:
        kind = jax.devices()[0].device_kind.lower()
    except Exception:  # pragma: no cover - no devices / non-TPU backend
        return None
    for tag, gen in (("v7", 7), ("v6", 6), ("v5", 5), ("v4", 4), ("v3", 3)):
        if tag in kind:
            return gen
    return None


def _chip_prefers_precomputed_trig():
    gen = _tpu_generation()
    return gen is not None and gen >= 7


def _plan_layout(M, N):
    """Lane-dense flatten when possible: (M, N) -> (rows, L), L multiple of 128."""
    total = M * N
    for L in (4096, 2048, 1024, 512, 256, 128):
        if total % L == 0:
            return "flat", total // L, L
    return "2d", M, N


def _choose_tiles(R, L, max_tile_bytes):
    """Pick a large, VMEM-safe (tm, tn) tile and the resulting grid."""
    # Lane (last) dim: full width when reasonable, else a multiple of 128
    # (ragged edge blocks are masked by Pallas).
    tn = L if L <= 4096 else 2048
    max_rows = max(8, (max_tile_bytes // 4) // max(tn, 1))
    if max_rows >= R:
        tm = R                       # full-extent block (legal for any R)
    else:
        tm = max(8, (max_rows // 8) * 8)
    grid = (pl.cdiv(R, tm), pl.cdiv(L, tn))
    return tm, tn, grid


def _slm_elementwise_call(kernel, planes, transcendentals_per_elem):
    """Run an elementwise (..., re, im) kernel over same-shaped f32 planes."""
    M, N = planes[0].shape
    planes = [p.astype(jnp.float32) for p in planes]

    layout, R, L = _plan_layout(M, N)
    ops = [p.reshape(R, L) for p in planes] if layout == "flat" else planes

    gen = _tpu_generation()
    conservative = gen is None or gen >= 7       # v7x: 64 MiB per-TC VMEM
    max_tile_bytes = (2 << 20) if conservative else (4 << 20)
    vmem_cap = (48 << 20) if conservative else (96 << 20)

    tm, tn, grid = _choose_tiles(R, L, max_tile_bytes)
    spec = pl.BlockSpec((tm, tn), lambda i, j: (i, j))

    n_arrays = len(ops) + 2                       # inputs + two outputs
    vmem_needed = n_arrays * 2 * tm * tn * 4      # double-buffered pipeline
    vmem_limit = min(vmem_needed + (8 << 20), vmem_cap)

    cost = pl.CostEstimate(
        flops=6 * M * N,                               # 4 mul + 2 add / elem
        transcendentals=transcendentals_per_elem * M * N,
        bytes_accessed=n_arrays * 4 * M * N,
    )

    out_re, out_im = pl.pallas_call(
        kernel,
        out_shape=(
            jax.ShapeDtypeStruct(ops[0].shape, jnp.float32),
            jax.ShapeDtypeStruct(ops[0].shape, jnp.float32),
        ),
        grid_spec=pltpu.PrefetchScalarGridSpec(
            num_scalar_prefetch=0,
            grid=grid,
            in_specs=[spec] * len(ops),
            out_specs=[spec, spec],
        ),
        compiler_params=pltpu.CompilerParams(
            dimension_semantics=("parallel", "parallel"),
            vmem_limit_bytes=vmem_limit,
        ),
        cost_estimate=cost,
    )(*ops)

    if layout == "flat":
        out_re = out_re.reshape(M, N)
        out_im = out_im.reshape(M, N)
    return out_re, out_im


# --------------------------------------------------------------------------- #
# Public API
# --------------------------------------------------------------------------- #
def slm_forward_planar(field_re, field_im, phase_delay):
    """Fused SLM forward on planar (re, im) f32 planes, sin/cos in-kernel.

    Preferred on HBM-bound chips (v5e / v6e): 3 reads + 2 writes per element.
    """
    assert field_re.ndim == 2
    assert field_re.shape == field_im.shape == phase_delay.shape
    return _slm_elementwise_call(
        _slm_phase_kernel, [field_re, field_im, phase_delay],
        transcendentals_per_elem=2)


def slm_forward_planar_trig(field_re, field_im, cos_phi, sin_phi):
    """Fused SLM forward with precomputed cos/sin of the phase mask.

    Preferred on VALU-bound chips (v7x) when the same mask is reused across
    fields: 4 reads + 2 writes per element, no in-kernel transcendentals.
    """
    assert field_re.ndim == 2
    assert field_re.shape == field_im.shape == cos_phi.shape == sin_phi.shape
    return _slm_elementwise_call(
        _slm_trig_kernel, [field_re, field_im, cos_phi, sin_phi],
        transcendentals_per_elem=0)


class SLM:
    """JAX/Pallas port of the torch `SLM` module (forward pass only).

    Stores the phase mask at construction.  On chips where the kernel is
    VALU-bound (v7x), cos/sin of the mask are precomputed once here and reused
    across forward calls; on v5e/v6e the in-kernel sin/cos path is used.
    """

    def __init__(self, phase_delay, precompute_trig=None):
        self.phase_delay = jnp.asarray(phase_delay, jnp.float32)
        if precompute_trig is None:
            precompute_trig = _chip_prefers_precomputed_trig()
        self.precompute_trig = bool(precompute_trig)
        self._trig = None
        if self.precompute_trig:
            self._trig = (jnp.cos(self.phase_delay), jnp.sin(self.phase_delay))

    def forward_planar(self, field_re, field_im):
        """Hot path: planar f32 in, planar f32 out (no complex HBM traffic)."""
        if self._trig is not None:
            return slm_forward_planar_trig(field_re, field_im, *self._trig)
        return slm_forward_planar(field_re, field_im, self.phase_delay)

    def __call__(self, field):
        """Complex-in / complex-out, module-faithful.

        NOTE: the real/imag split and lax.complex recombine are extra XLA
        passes over HBM; prefer `forward_planar` in memory-bound pipelines.
        """
        assert field.ndim == 2 and field.shape == self.phase_delay.shape
        out_re, out_im = self.forward_planar(jnp.real(field), jnp.imag(field))
        # torch does Eout.squeeze() for 2-D inputs; same (no-op for M, N > 1).
        return jnp.squeeze(jax.lax.complex(out_re, out_im))


def slm_forward(field, phase_delay):
    """One-shot complex wrapper matching the torch module's forward."""
    return SLM(phase_delay, precompute_trig=False)(field)


# --------------------------------------------------------------------------- #
# Self-test
# --------------------------------------------------------------------------- #
if __name__ == "__main__":
    key = jax.random.PRNGKey(0)
    k1, k2, k3 = jax.random.split(key, 3)

    # Small MxN field (the module operates on a 2-D MxN complex field).
    M, N = 64, 256
    field_re = jax.random.normal(k1, (M, N), dtype=jnp.float32)
    field_im = jax.random.normal(k2, (M, N), dtype=jnp.float32)
    phase_delay = jax.random.uniform(
        k3, (M, N), dtype=jnp.float32, minval=0.0, maxval=2.0 * jnp.pi
    )

    field = jax.lax.complex(field_re, field_im)
    ref = field * jnp.exp(1j * phase_delay.astype(jnp.complex64))

    # 1) Planar fast path, in-kernel sin/cos (lane-dense flattened layout).
    out_re, out_im = jax.block_until_ready(
        slm_forward_planar(field_re, field_im, phase_delay))
    assert out_re.shape == (M, N) and out_im.shape == (M, N)
    assert jnp.allclose(out_re, jnp.real(ref), atol=1e-5, rtol=1e-5)
    assert jnp.allclose(out_im, jnp.imag(ref), atol=1e-5, rtol=1e-5)

    # 2) Precomputed-trig path (v7x-preferred kernel), exercised explicitly.
    cos_phi, sin_phi = jnp.cos(phase_delay), jnp.sin(phase_delay)
    out_re_t, out_im_t = jax.block_until_ready(
        slm_forward_planar_trig(field_re, field_im, cos_phi, sin_phi))
    assert jnp.allclose(out_re_t, jnp.real(ref), atol=1e-5, rtol=1e-5)
    assert jnp.allclose(out_im_t, jnp.imag(ref), atol=1e-5, rtol=1e-5)

    # 3) Module-style wrapper (generation-gated trig precompute) + complex API.
    slm = SLM(phase_delay)
    out_c = jax.block_until_ready(slm(field))
    assert out_c.shape == (M, N)
    assert jnp.allclose(out_c, ref, atol=1e-5, rtol=1e-5)

    # 4) Ragged shape exercising the 2-D fallback path (M*N not % 128).
    Mr, Nr = 60, 200
    frr = jax.random.normal(k1, (Mr, Nr), dtype=jnp.float32)
    fir = jax.random.normal(k2, (Mr, Nr), dtype=jnp.float32)
    phr = jax.random.uniform(k3, (Mr, Nr), dtype=jnp.float32,
                             minval=0.0, maxval=2.0 * jnp.pi)
    orr, oir = jax.block_until_ready(slm_forward_planar(frr, fir, phr))
    refr = jax.lax.complex(frr, fir) * jnp.exp(1j * phr.astype(jnp.complex64))
    assert jnp.allclose(orr, jnp.real(refr), atol=1e-5, rtol=1e-5)
    assert jnp.allclose(oir, jnp.imag(refr), atol=1e-5, rtol=1e-5)

    print("KERNEL_OK")
</pallas_src>

<mosaic_0001>
module attributes {stable_mosaic.version = 11 : i64} {
  func.func @_slm_phase_kernel(%arg0: i32, %arg1: i32, %arg2: memref<4x4096xf32, #tpu.memory_space<vmem>>, %arg3: memref<4x4096xf32, #tpu.memory_space<vmem>>, %arg4: memref<4x4096xf32, #tpu.memory_space<vmem>>, %arg5: memref<4x4096xf32, #tpu.memory_space<vmem>>, %arg6: memref<4x4096xf32, #tpu.memory_space<vmem>>) attributes {dimension_semantics = [#tpu.dimension_semantics<parallel>, #tpu.dimension_semantics<parallel>], iteration_bounds = array<i64: 1, 1>, scalar_prefetch = 0 : i64, scratch_operands = 0 : i64, tpu.core_type = #tpu.core_type<tc>, window_params = [{transform_indices = @transform_0, window_bounds = array<i64: 4, 4096>}, {transform_indices = @transform_1, window_bounds = array<i64: 4, 4096>}, {transform_indices = @transform_2, window_bounds = array<i64: 4, 4096>}, {transform_indices = @transform_3, window_bounds = array<i64: 4, 4096>}, {transform_indices = @transform_4, window_bounds = array<i64: 4, 4096>}]} {
    %c0 = arith.constant 0 : index
    %c0_0 = arith.constant 0 : index
    %0 = vector.load %arg4[%c0, %c0_0] : memref<4x4096xf32, #tpu.memory_space<vmem>>, vector<4x4096xf32>
    %1 = math.cos %0 : vector<4x4096xf32>
    %2 = math.sin %0 : vector<4x4096xf32>
    %c0_1 = arith.constant 0 : index
    %c0_2 = arith.constant 0 : index
    %3 = vector.load %arg2[%c0_1, %c0_2] : memref<4x4096xf32, #tpu.memory_space<vmem>>, vector<4x4096xf32>
    %c0_3 = arith.constant 0 : index
    %c0_4 = arith.constant 0 : index
    %4 = vector.load %arg3[%c0_3, %c0_4] : memref<4x4096xf32, #tpu.memory_space<vmem>>, vector<4x4096xf32>
    %5 = arith.mulf %3, %1 : vector<4x4096xf32>
    %6 = arith.mulf %4, %2 : vector<4x4096xf32>
    %7 = arith.subf %5, %6 : vector<4x4096xf32>
    %c0_5 = arith.constant 0 : index
    %c0_6 = arith.constant 0 : index
    %8 = vector.load %arg5[%c0_5, %c0_6] : memref<4x4096xf32, #tpu.memory_space<vmem>>, vector<4x4096xf32>
    tpu.vector_store %arg5[%c0_5, %c0_6], %7 {strides = array<i32>} : memref<4x4096xf32, #tpu.memory_space<vmem>>, vector<4x4096xf32>,
    %9 = arith.mulf %3, %2 : vector<4x4096xf32>
    %10 = arith.mulf %4, %1 : vector<4x4096xf32>
    %11 = arith.addf %9, %10 : vector<4x4096xf32>
    %c0_7 = arith.constant 0 : index
    %c0_8 = arith.constant 0 : index
    %12 = vector.load %arg6[%c0_7, %c0_8] : memref<4x4096xf32, #tpu.memory_space<vmem>>, vector<4x4096xf32>
    tpu.vector_store %arg6[%c0_7, %c0_8], %11 {strides = array<i32>} : memref<4x4096xf32, #tpu.memory_space<vmem>>, vector<4x4096xf32>,
    return
  }
  func.func @transform_0(%arg0: i32, %arg1: i32) -> (i32, i32) {
    %c0_i32 = arith.constant 0 : i32
    return %arg0, %arg1 : i32, i32
  }
  func.func @transform_1(%arg0: i32, %arg1: i32) -> (i32, i32) {
    %c0_i32 = arith.constant 0 : i32
    return %arg0, %arg1 : i32, i32
  }
  func.func @transform_2(%arg0: i32, %arg1: i32) -> (i32, i32) {
    %c0_i32 = arith.constant 0 : i32
    return %arg0, %arg1 : i32, i32
  }
  func.func @transform_3(%arg0: i32, %arg1: i32) -> (i32, i32) {
    %c0_i32 = arith.constant 0 : i32
    return %arg0, %arg1 : i32, i32
  }
  func.func @transform_4(%arg0: i32, %arg1: i32) -> (i32, i32) {
    %c0_i32 = arith.constant 0 : i32
    return %arg0, %arg1 : i32, i32
  }
}

</mosaic_0001>

<llo_original>
// kernel: tpu_custom_call.1
$region0: #{tpu_custom_call.1}
  #allocation0 [shape = 'u32[]', space=smem, size = 0x4, offset = 0x4, fixed_abs, tag = 'smem constant byte address 0x4 - core index']
  #allocation1 [shape = 'u32[144,128]{1,0:T(1,128)}', space=vmem, size = 0x12000, scoped, tag = 'internal scratch']
  %s0 = inlined_call_operand.hbm [shape: f32[4,4096], index: 0, kind: input, shape index: {}]
  %s1 = inlined_call_operand.hbm [shape: f32[4,4096], index: 1, kind: input, shape index: {}]
  %s2 = inlined_call_operand.hbm [shape: f32[4,4096], index: 2, kind: input, shape index: {}]
  %s3 = inlined_call_operand.hbm [shape: f32[4,4096], index: 3, kind: output, shape index: {0}]
  %s4 = inlined_call_operand.hbm [shape: f32[4,4096], index: 4, kind: output, shape index: {1}]
  %5 = xla_tuple %s3, %s4
  %s6 = sld [smem:[#allocation0]]
  $region42: #{tpu_custom_call.1} parent=0
    _
  %s8 = ssub.s32 1, %s6
  %s9 = scalar_select 0, %s8, %s6
  $region1: #{tpu_custom_call.1} parent=0
    #allocation2 [shape = 'u8[65536]{0}', space=vmem, size = 0x10000, scoped, tag = 'input window, operand 0, single buffered']
    #allocation3 [shape = 's32[1]{0}', space=sflag, size = 0x4, scoped, tag = 'scoped memory for tpu_custom_call.1']
    #allocation4 [shape = 's32[1]{0}', space=sflag, size = 0x4, scoped, tag = 'scoped memory for tpu_custom_call.1']
    #allocation5 [shape = 'u8[65536]{0}', space=vmem, size = 0x10000, scoped, tag = 'input window, operand 1, single buffered']
    #allocation6 [shape = 's32[1]{0}', space=sflag, size = 0x4, scoped, tag = 'scoped memory for tpu_custom_call.1']
    #allocation7 [shape = 'u8[65536]{0}', space=vmem, size = 0x10000, scoped, tag = 'input window, operand 2, single buffered']
    #allocation8 [shape = 'u8[65536]{0}', space=vmem, size = 0x10000, scoped, tag = 'output window, operand 0, single buffered']
    #allocation9 [shape = 'u8[65536]{0}', space=vmem, size = 0x10000, scoped, tag = 'output window, operand 1, single buffered']
    #allocation10 [shape = 's32[1]{0}', space=sflag, size = 0x4, scoped, tag = 'scoped memory for tpu_custom_call.1']
    %10 = vsyncpa [#allocation3], 0
    %11 = vsyncpa [#allocation6], 0
    %12 = vsyncpa [#allocation4], 0
    %13 = vsyncpa [#allocation10], 0
    // Predicated region
    $region2: #{tpu_custom_call.1} parent=1 // pred_check
      _
    $region3: #{tpu_custom_call.1} parent=1 // pred_check_branch
      %15 = sbr.rel (0) target = $region5
    $region4: #{tpu_custom_call.1} parent=1 // pred_region
      %s17 = ssub.s32 2048, 2048
      %18 = vsyncadd [#allocation3], %s17
      %s20 = sshll.u32 [#allocation2], 4
      %s21 = int_to_ptr.vmem [resolvable:$true] %s20
      %23 = dma.hbm_to_vmem [thread:$0]  %s0, 2048, %s21, [#allocation3]
    $region5: #{tpu_custom_call.1} parent=1 // pred_fallthru
      _
    // Predicated region
    $region6: #{tpu_custom_call.1} parent=1 // pred_check
      _
    $region7: #{tpu_custom_call.1} parent=1 // pred_check_branch
      %25 = sbr.rel (0) target = $region9
    $region8: #{tpu_custom_call.1} parent=1 // pred_region
      %s27 = ssub.s32 2048, 2048
      %28 = vsyncadd [#allocation6], %s27
      %s30 = sshll.u32 [#allocation5], 4
      %s31 = int_to_ptr.vmem [resolvable:$true] %s30
      %33 = dma.hbm_to_vmem [thread:$0]  %s1, 2048, %s31, [#allocation6]
    $region9: #{tpu_custom_call.1} parent=1 // pred_fallthru
      _
    // Predicated region
    $region10: #{tpu_custom_call.1} parent=1 // pred_check
      _
    $region11: #{tpu_custom_call.1} parent=1 // pred_check_branch
      %35 = sbr.rel (0) target = $region13
    $region12: #{tpu_custom_call.1} parent=1 // pred_region
      %s37 = ssub.s32 2048, 2048
      %38 = vsyncadd [#allocation6], %s37
      %s40 = sshll.u32 [#allocation7], 4
      %s41 = int_to_ptr.vmem [resolvable:$true] %s40
      %43 = dma.hbm_to_vmem [thread:$0]  %s2, 2048, %s41, [#allocation6]
    $region13: #{tpu_custom_call.1} parent=1 // pred_fallthru
      _
    // Predicated region
    $region14: #{tpu_custom_call.1} parent=1 // pred_check
      _
    $region15: #{tpu_custom_call.1} parent=1 // pred_check_branch
      %45 = sbr.rel (0) target = $region17
    $region16: #{tpu_custom_call.1} parent=1 // pred_region
      %46 = dma.done [#allocation3], 2048
    $region17: #{tpu_custom_call.1} parent=1 // pred_fallthru
      _
    // Predicated region
    $region18: #{tpu_custom_call.1} parent=1 // pred_check
      _
    $region19: #{tpu_custom_call.1} parent=1 // pred_check_branch
      %48 = sbr.rel (0) target = $region21
    $region20: #{tpu_custom_call.1} parent=1 // pred_region
      %49 = dma.done [#allocation6], 2048
    $region21: #{tpu_custom_call.1} parent=1 // pred_fallthru
      _
    // Predicated region
    $region22: #{tpu_custom_call.1} parent=1 // pred_check
      _
    $region23: #{tpu_custom_call.1} parent=1 // pred_check_branch
      %51 = sbr.rel (0) target = $region25
    $region24: #{tpu_custom_call.1} parent=1 // pred_region
      %52 = dma.done [#allocation6], 2048
    $region25: #{tpu_custom_call.1} parent=1 // pred_fallthru
      _
    %v53 = vld [vmem:[#allocation7] sm:$0xff]
    %v54 = vld [vmem:[#allocation7 + $0x8] sm:$0xff]
    %v55 = vld [vmem:[#allocation7 + $0x10] sm:$0xff]
    %v56 = vld [vmem:[#allocation7 + $0x18] sm:$0xff]
    %v57 = vld [vmem:[#allocation7 + $0x20] sm:$0xff]
    %v58 = vld [vmem:[#allocation7 + $0x28] sm:$0xff]
    %v59 = vld [vmem:[#allocation7 + $0x30] sm:$0xff]
    %v60 = vld [vmem:[#allocation7 + $0x38] sm:$0xff]
    %v61 = vld [vmem:[#allocation7 + $0x40] sm:$0xff]
    %v62 = vld [vmem:[#allocation7 + $0x48] sm:$0xff]
    %v63 = vld [vmem:[#allocation7 + $0x50] sm:$0xff]
    %v64 = vld [vmem:[#allocation7 + $0x58] sm:$0xff]
    %v65 = vld [vmem:[#allocation7 + $0x60] sm:$0xff]
    %v66 = vld [vmem:[#allocation7 + $0x68] sm:$0xff]
    %v67 = vld [vmem:[#allocation7 + $0x70] sm:$0xff]
    %v68 = vld [vmem:[#allocation7 + $0x78] sm:$0xff]
    %v69 = vand.u32 2147483647, %v53
    %vm70 = vcmp.le.f32.partialorder %v69, 0.7853982
    %vm71 = vcmp.lt.s32.totalorder %v53, 0
    %v72 = vand.u32 %v53, 2139095040
    %v73 = vshrl.u32 %v72, 23
    %v74 = vsub.s32 %v73, 127
    %v75 = vand.u32 2147483647, %v53
    %v76 = vand.u32 %v75, 8388607
    %v77 = vor.u32 %v76, 8388608
    %v78 = vsub.s32 0, %v77
    %v79 = vadd.s32 %v74, 1
    %vm80 = vcmp.gt.s32.totalorder %v79, 0
    %v81 = vsel %vm80, %v79, 0
    %v82 = vshrl.u32 %v81, 5
    %v83 = vand.u32 %v81, 31
    %v84 = vsub.s32 32, %v83
    %v85 = vshrl.u32 683565275, %v84
    %v86 = vshll.u32 683565275, %v83
    %v87 = vshrl.u32 2475754826, %v84
    %v88 = vor.u32 %v86, %v87
    %v89 = vshll.u32 2475754826, %v83
    %v90 = vshrl.u32 2131351028, %v84
    %v91 = vor.u32 %v89, %v90
    %v92 = vshll.u32 2131351028, %v83
    %v93 = vshrl.u32 2102212464, %v84
    %v94 = vor.u32 %v92, %v93
    %v95 = vshll.u32 2102212464, %v83
    %v96 = vshrl.u32 920167782, %v84
    %v97 = vor.u32 %v95, %v96
    %v98 = vshll.u32 920167782, %v83
    %v99 = vshrl.u32 1326507024, %v84
    %v100 = vor.u32 %v98, %v99
    %vm101 = vcmp.lt.s32.totalorder %v82, 1
    %vm102 = vcmp.lt.s32.totalorder %v82, 2
    %vm103 = vcmp.lt.s32.totalorder %v82, 3
    %vm104 = vcmp.lt.s32.totalorder %v82, 4
    %v105 = vsel %vm101, %v85, %v88
    %v106 = vsel %vm104, %v94, 2102212464
    %v107 = vsel %vm103, %v91, %v106
    %v108 = vsel %vm102, %v105, %v107
    %v109 = vsel %vm101, %v88, %v91
    %v110 = vsel %vm104, %v97, 920167782
    %v111 = vsel %vm103, %v94, %v110
    %v112 = vsel %vm102, %v109, %v111
    %v113 = vsel %vm101, %v91, %v94
    %v114 = vsel %vm104, %v100, 1326507024
    %v115 = vsel %vm103, %v97, %v114
    %v116 = vsel %vm102, %v113, %v115
    %v117 = vshll.u32 %v77, 8
    %v118 = vmul.u32.u64.compose %v117, %v116
    %v119 = vextract.low.u32 %v118
    %v120 = vextract.high.u32 %v118
    %v121 = vmul.u32.u64.compose %v117, %v112
    %v122 = vextract.low.u32 %v121
    %v123 = vextract.high.u32 %v121
    %v124 = vmul.u32 %v117, %v108
    %v125 = vadd.s32 %v120, %v122
    %vm126 = vc.u32 %v120, %v122
    %v127 = vadd.s32 %v123, 1
    %v128 = vsel %vm126, %v127, %v123
    %v129 = vadd.s32 %v124, %v128
    %v130 = vadd.s32 %v129, 536870912
    %v131 = vshrl.u32 %v130, 30
    %v132 = vshll.u32 %v131, 30
    %v133 = vsub.s32 %v129, %v132
    %vm134 = vcmp.lt.s32.totalorder %v133, 0
    %v135 = vsub.s32 0, %v133
    %v136 = vsel %vm134, %v135, %v133
    %v137 = vclz %v136
    %v138 = vsub.s32 %v137, 2
    %vm139 = vcmp.gt.s32.totalorder 0, %v138
    %v140 = vsel %vm139, 0, %v138
    %v141 = vsub.s32 32, %v140
    %v142 = vshll.u32 %v133, %v140
    %v143 = vshrl.u32 %v125, %v141
    %v144 = vor.u32 %v142, %v143
    %v145 = vsub.s32 4294967266, %v140
    %v146 = vadd.s32 %v145, 127
    %v147 = vshll.u32 %v146, 23
    %v148 = vor.u32 4788187, %v147
    %v149 = vand.u32 2147483647, %v148
    %v151 = vcvt.s32.f32 %v144
    %v152 = vmul.f32 %v151, %v149
    %v153 = vxor.u32 %v152, 2147483648
    %v154 = vsel %vm71, %v153, %v152
    %v155 = vsub.s32 4, %v131
    %v156 = vsel %vm71, %v155, %v131
    %v157 = vsel %vm70, %v53, %v154
    %v158 = vsel %vm70, 0, %v156
    %v159 = vcosq.f32.pop %v157
    %v160 = vsinq.f32.pop %v157
    %vm161 = vweird.f32 %v53
    %v162 = vand.u32 %v158, 3
    %vm163 = vcmp.lt.s32.totalorder %v162, 2
    %vm164 = vcmp.eq.s32.totalorder %v162, 0
    %v165 = vxor.u32 %v160, 2147483648
    %v166 = vsel %vm164, %v159, %v165
    %vm167 = vcmp.eq.s32.totalorder %v162, 2
    %v168 = vxor.u32 %v159, 2147483648
    %v169 = vsel %vm167, %v168, %v160
    %v170 = vsel %vm163, %v166, %v169
    %v171 = vsel %vm161, nan, %v170
    %v172 = vand.u32 2147483647, %v54
    %vm173 = vcmp.le.f32.partialorder %v172, 0.7853982
    %vm174 = vcmp.lt.s32.totalorder %v54, 0
    %v175 = vand.u32 %v54, 2139095040
    %v176 = vshrl.u32 %v175, 23
    %v177 = vsub.s32 %v176, 127
    %v178 = vand.u32 2147483647, %v54
    %v179 = vand.u32 %v178, 8388607
    %v180 = vor.u32 %v179, 8388608
    %v181 = vsub.s32 0, %v180
    %v182 = vadd.s32 %v177, 1
    %vm183 = vcmp.gt.s32.totalorder %v182, 0
    %v184 = vsel %vm183, %v182, 0
    %v185 = vshrl.u32 %v184, 5
    %v186 = vand.u32 %v184, 31
    %v187 = vsub.s32 32, %v186
    %v188 = vshrl.u32 683565275, %v187
    %v189 = vshll.u32 683565275, %v186
    %v190 = vshrl.u32 2475754826, %v187
    %v191 = vor.u32 %v189, %v190
    %v192 = vshll.u32 2475754826, %v186
    %v193 = vshrl.u32 2131351028, %v187
    %v194 = vor.u32 %v192, %v193
    %v195 = vshll.u32 2131351028, %v186
    %v196 = vshrl.u32 2102212464, %v187
    %v197 = vor.u32 %v195, %v196
    %v198 = vshll.u32 2102212464, %v186
    %v199 = vshrl.u32 920167782, %v187
    %v200 = vor.u32 %v198, %v199
    %v201 = vshll.u32 920167782, %v186
    %v202 = vshrl.u32 1326507024, %v187
    %v203 = vor.u32 %v201, %v202
    %vm204 = vcmp.lt.s32.totalorder %v185, 1
    %vm205 = vcmp.lt.s32.totalorder %v185, 2
    %vm206 = vcmp.lt.s32.totalorder %v185, 3
    %vm207 = vcmp.lt.s32.totalorder %v185, 4
    %v208 = vsel %vm204, %v188, %v191
    %v209 = vsel %vm207, %v197, 2102212464
    %v210 = vsel %vm206, %v194, %v209
    %v211 = vsel %vm205, %v208, %v210
    %v212 = vsel %vm204, %v191, %v194
    %v213 = vsel %vm207, %v200, 920167782
    %v214 = vsel %vm206, %v197, %v213
    %v215 = vsel %vm205, %v212, %v214
    %v216 = vsel %vm204, %v194, %v197
    %v217 = vsel %vm207, %v203, 1326507024
    %v218 = vsel %vm206, %v200, %v217
    %v219 = vsel %vm205, %v216, %v218
    %v220 = vshll.u32 %v180, 8
    %v221 = vmul.u32.u64.compose %v220, %v219
    %v222 = vextract.low.u32 %v221
    %v223 = vextract.high.u32 %v221
    %v224 = vmul.u32.u64.compose %v220, %v215
    %v225 = vextract.low.u32 %v224
    %v226 = vextract.high.u32 %v224
    %v227 = vmul.u32 %v220, %v211
    %v228 = vadd.s32 %v223, %v225
    %vm229 = vc.u32 %v223, %v225
    %v230 = vadd.s32 %v226, 1
    %v231 = vsel %vm229, %v230, %v226
    %v232 = vadd.s32 %v227, %v231
    %v233 = vadd.s32 %v232, 536870912
    %v234 = vshrl.u32 %v233, 30
    %v235 = vshll.u32 %v234, 30
    %v236 = vsub.s32 %v232, %v235
    %vm237 = vcmp.lt.s32.totalorder %v236, 0
    %v238 = vsub.s32 0, %v236
    %v239 = vsel %vm237, %v238, %v236
    %v240 = vclz %v239
    %v241 = vsub.s32 %v240, 2
    %vm242 = vcmp.gt.s32.totalorder 0, %v241
    %v243 = vsel %vm242, 0, %v241
    %v244 = vsub.s32 32, %v243
    %v245 = vshll.u32 %v236, %v243
    %v246 = vshrl.u32 %v228, %v244
    %v247 = vor.u32 %v245, %v246
    %v248 = vsub.s32 4294967266, %v243
    %v249 = vadd.s32 %v248, 127
    %v250 = vshll.u32 %v249, 23
    %v251 = vor.u32 4788187, %v250
    %v252 = vand.u32 2147483647, %v251
    %v254 = vcvt.s32.f32 %v247
    %v255 = vmul.f32 %v254, %v252
    %v256 = vxor.u32 %v255, 2147483648
    %v257 = vsel %vm174, %v256, %v255
    %v258 = vsub.s32 4, %v234
    %v259 = vsel %vm174, %v258, %v234
    %v260 = vsel %vm173, %v54, %v257
    %v261 = vsel %vm173, 0, %v259
    %v262 = vcosq.f32.pop %v260
    %v263 = vsinq.f32.pop %v260
    %vm264 = vweird.f32 %v54
    %v265 = vand.u32 %v261, 3
    %vm266 = vcmp.lt.s32.totalorder %v265, 2
    %vm267 = vcmp.eq.s32.totalorder %v265, 0
    %v268 = vxor.u32 %v263, 2147483648
    %v269 = vsel %vm267, %v262, %v268
    %vm270 = vcmp.eq.s32.totalorder %v265, 2
    %v271 = vxor.u32 %v262, 2147483648
    %v272 = vsel %vm270, %v271, %v263
    %v273 = vsel %vm266, %v269, %v272
    %v274 = vsel %vm264, nan, %v273
    %v275 = vand.u32 2147483647, %v55
    %vm276 = vcmp.le.f32.partialorder %v275, 0.7853982
    %vm277 = vcmp.lt.s32.totalorder %v55, 0
    %v278 = vand.u32 %v55, 2139095040
    %v279 = vshrl.u32 %v278, 23
    %v280 = vsub.s32 %v279, 127
    %v281 = vand.u32 2147483647, %v55
    %v282 = vand.u32 %v281, 8388607
    %v283 = vor.u32 %v282, 8388608
    %v284 = vsub.s32 0, %v283
    %v285 = vadd.s32 %v280, 1
    %vm286 = vcmp.gt.s32.totalorder %v285, 0
    %v287 = vsel %vm286, %v285, 0
    %v288 = vshrl.u32 %v287, 5
    %v289 = vand.u32 %v287, 31
    %v290 = vsub.s32 32, %v289
    %v291 = vshrl.u32 683565275, %v290
    %v292 = vshll.u32 683565275, %v289
    %v293 = vshrl.u32 2475754826, %v290
    %v294 = vor.u32 %v292, %v293
    %v295 = vshll.u32 2475754826, %v289
    %v296 = vshrl.u32 2131351028, %v290
    %v297 = vor.u32 %v295, %v296
    %v298 = vshll.u32 2131351028, %v289
    %v299 = vshrl.u32 2102212464, %v290
    %v300 = vor.u32 %v298, %v299
    %v301 = vshll.u32 2102212464, %v289
    %v302 = vshrl.u32 920167782, %v290
    %v303 = vor.u32 %v301, %v302
    %v304 = vshll.u32 920167782, %v289
    %v305 = vshrl.u32 1326507024, %v290
    %v306 = vor.u32 %v304, %v305
    %vm307 = vcmp.lt.s32.totalorder %v288, 1
    %vm308 = vcmp.lt.s32.totalorder %v288, 2
    %vm309 = vcmp.lt.s32.totalorder %v288, 3
    %vm310 = vcmp.lt.s32.totalorder %v288, 4
    %v311 = vsel %vm307, %v291, %v294
    %v312 = vsel %vm310, %v300, 2102212464
    %v313 = vsel %vm309, %v297, %v312
    %v314 = vsel %vm308, %v311, %v313
    %v315 = vsel %vm307, %v294, %v297
    %v316 = vsel %vm310, %v303, 920167782
    %v317 = vsel %vm309, %v300, %v316
    %v318 = vsel %vm308, %v315, %v317
    %v319 = vsel %vm307, %v297, %v300
    %v320 = vsel %vm310, %v306, 1326507024
    %v321 = vsel %vm309, %v303, %v320
    %v322 = vsel %vm308, %v319, %v321
    %v323 = vshll.u32 %v283, 8
    %v324 = vmul.u32.u64.compose %v323, %v322
    %v325 = vextract.low.u32 %v324
    %v326 = vextract.high.u32 %v324
    %v327 = vmul.u32.u64.compose %v323, %v318
    %v328 = vextract.low.u32 %v327
    %v329 = vextract.high.u32 %v327
    %v330 = vmul.u32 %v323, %v314
    %v331 = vadd.s32 %v326, %v328
    %vm332 = vc.u32 %v326, %v328
    %v333 = vadd.s32 %v329, 1
    %v334 = vsel %vm332, %v333, %v329
    %v335 = vadd.s32 %v330, %v334
    %v336 = vadd.s32 %v335, 536870912
    %v337 = vshrl.u32 %v336, 30
    %v338 = vshll.u32 %v337, 30
    %v339 = vsub.s32 %v335, %v338
    %vm340 = vcmp.lt.s32.totalorder %v339, 0
    %v341 = vsub.s32 0, %v339
    %v342 = vsel %vm340, %v341, %v339
    %v343 = vclz %v342
    %v344 = vsub.s32 %v343, 2
    %vm345 = vcmp.gt.s32.totalorder 0, %v344
    %v346 = vsel %vm345, 0, %v344
    %v347 = vsub.s32 32, %v346
    %v348 = vshll.u32 %v339, %v346
    %v349 = vshrl.u32 %v331, %v347
    %v350 = vor.u32 %v348, %v349
    %v351 = vsub.s32 4294967266, %v346
    %v352 = vadd.s32 %v351, 127
    %v353 = vshll.u32 %v352, 23
    %v354 = vor.u32 4788187, %v353
    %v355 = vand.u32 2147483647, %v354
    %v357 = vcvt.s32.f32 %v350
    %v358 = vmul.f32 %v357, %v355
    %v359 = vxor.u32 %v358, 2147483648
    %v360 = vsel %vm277, %v359, %v358
    %v361 = vsub.s32 4, %v337
    %v362 = vsel %vm277, %v361, %v337
    %v363 = vsel %vm276, %v55, %v360
    %v364 = vsel %vm276, 0, %v362
    %v365 = vcosq.f32.pop %v363
    %v366 = vsinq.f32.pop %v363
    %vm367 = vweird.f32 %v55
    %v368 = vand.u32 %v364, 3
    %vm369 = vcmp.lt.s32.totalorder %v368, 2
    %vm370 = vcmp.eq.s32.totalorder %v368, 0
    %v371 = vxor.u32 %v366, 2147483648
    %v372 = vsel %vm370, %v365, %v371
    %vm373 = vcmp.eq.s32.totalorder %v368, 2
    %v374 = vxor.u32 %v365, 2147483648
    %v375 = vsel %vm373, %v374, %v366
    %v376 = vsel %vm369, %v372, %v375
    %v377 = vsel %vm367, nan, %v376
    %v378 = vand.u32 2147483647, %v56
    %vm379 = vcmp.le.f32.partialorder %v378, 0.7853982
    %vm380 = vcmp.lt.s32.totalorder %v56, 0
    %v381 = vand.u32 %v56, 2139095040
    %v382 = vshrl.u32 %v381, 23
    %v383 = vsub.s32 %v382, 127
    %v384 = vand.u32 2147483647, %v56
    %v385 = vand.u32 %v384, 8388607
    %v386 = vor.u32 %v385, 8388608
    %v387 = vsub.s32 0, %v386
    %v388 = vadd.s32 %v383, 1
    %vm389 = vcmp.gt.s32.totalorder %v388, 0
    %v390 = vsel %vm389, %v388, 0
    %v391 = vshrl.u32 %v390, 5
    %v392 = vand.u32 %v390, 31
    %v393 = vsub.s32 32, %v392
    %v394 = vshrl.u32 683565275, %v393
    %v395 = vshll.u32 683565275, %v392
    %v396 = vshrl.u32 2475754826, %v393
    %v397 = vor.u32 %v395, %v396
    %v398 = vshll.u32 2475754826, %v392
    %v399 = vshrl.u32 2131351028, %v393
    %v400 = vor.u32 %v398, %v399
    %v401 = vshll.u32 2131351028, %v392
    %v402 = vshrl.u32 2102212464, %v393
    %v403 = vor.u32 %v401, %v402
    %v404 = vshll.u32 2102212464, %v392
    %v405 = vshrl.u32 920167782, %v393
    %v406 = vor.u32 %v404, %v405
    %v407 = vshll.u32 920167782, %v392
    %v408 = vshrl.u32 1326507024, %v393
    %v409 = vor.u32 %v407, %v408
    %vm410 = vcmp.lt.s32.totalorder %v391, 1
    %vm411 = vcmp.lt.s32.totalorder %v391, 2
    %vm412 = vcmp.lt.s32.totalorder %v391, 3
    %vm413 = vcmp.lt.s32.totalorder %v391, 4
    %v414 = vsel %vm410, %v394, %v397
    %v415 = vsel %vm413, %v403, 2102212464
    %v416 = vsel %vm412, %v400, %v415
    %v417 = vsel %vm411, %v414, %v416
    %v418 = vsel %vm410, %v397, %v400
    %v419 = vsel %vm413, %v406, 920167782
    %v420 = vsel %vm412, %v403, %v419
    %v421 = vsel %vm411, %v418, %v420
    %v422 = vsel %vm410, %v400, %v403
    %v423 = vsel %vm413, %v409, 1326507024
    %v424 = vsel %vm412, %v406, %v423
    %v425 = vsel %vm411, %v422, %v424
    %v426 = vshll.u32 %v386, 8
    %v427 = vmul.u32.u64.compose %v426, %v425
    %v428 = vextract.low.u32 %v427
    %v429 = vextract.high.u32 %v427
    %v430 = vmul.u32.u64.compose %v426, %v421
    %v431 = vextract.low.u32 %v430
    %v432 = vextract.high.u32 %v430
    %v433 = vmul.u32 %v426, %v417
    %v434 = vadd.s32 %v429, %v431
    %vm435 = vc.u32 %v429, %v431
    %v436 = vadd.s32 %v432, 1
    %v437 = vsel %vm435, %v436, %v432
    %v438 = vadd.s32 %v433, %v437
    %v439 = vadd.s32 %v438, 536870912
    %v440 = vshrl.u32 %v439, 30
    %v441 = vshll.u32 %v440, 30
    %v442 = vsub.s32 %v438, %v441
    %vm443 = vcmp.lt.s32.totalorder %v442, 0
    %v444 = vsub.s32 0, %v442
    %v445 = vsel %vm443, %v444, %v442
    %v446 = vclz %v445
    %v447 = vsub.s32 %v446, 2
    %vm448 = vcmp.gt.s32.totalorder 0, %v447
    %v449 = vsel %vm448, 0, %v447
    %v450 = vsub.s32 32, %v449
    %v451 = vshll.u32 %v442, %v449
    %v452 = vshrl.u32 %v434, %v450
    %v453 = vor.u32 %v451, %v452
    %v454 = vsub.s32 4294967266, %v449
    %v455 = vadd.s32 %v454, 127
    %v456 = vshll.u32 %v455, 23
    %v457 = vor.u32 4788187, %v456
    %v458 = vand.u32 2147483647, %v457
    %v460 = vcvt.s32.f32 %v453
    %v461 = vmul.f32 %v460, %v458
    %v462 = vxor.u32 %v461, 2147483648
    %v463 = vsel %vm380, %v462, %v461
    %v464 = vsub.s32 4, %v440
    %v465 = vsel %vm380, %v464, %v440
    %v466 = vsel %vm379, %v56, %v463
    %v467 = vsel %vm379, 0, %v465
    %v468 = vcosq.f32.pop %v466
    %v469 = vsinq.f32.pop %v466
    %vm470 = vweird.f32 %v56
    %v471 = vand.u32 %v467, 3
    %vm472 = vcmp.lt.s32.totalorder %v471, 2
    %vm473 = vcmp.eq.s32.totalorder %v471, 0
    %v474 = vxor.u32 %v469, 2147483648
    %v475 = vsel %vm473, %v468, %v474
    %vm476 = vcmp.eq.s32.totalorder %v471, 2
    %v477 = vxor.u32 %v468, 2147483648
    %v478 = vsel %vm476, %v477, %v469
    %v479 = vsel %vm472, %v475, %v478
    %v480 = vsel %vm470, nan, %v479
    %v481 = vand.u32 2147483647, %v57
    %vm482 = vcmp.le.f32.partialorder %v481, 0.7853982
    %vm483 = vcmp.lt.s32.totalorder %v57, 0
    %v484 = vand.u32 %v57, 2139095040
    %v485 = vshrl.u32 %v484, 23
    %v486 = vsub.s32 %v485, 127
    %v487 = vand.u32 2147483647, %v57
    %v488 = vand.u32 %v487, 8388607
    %v489 = vor.u32 %v488, 8388608
    %v490 = vsub.s32 0, %v489
    %v491 = vadd.s32 %v486, 1
    %vm492 = vcmp.gt.s32.totalorder %v491, 0
    %v493 = vsel %vm492, %v491, 0
    %v494 = vshrl.u32 %v493, 5
    %v495 = vand.u32 %v493, 31
    %v496 = vsub.s32 32, %v495
    %v497 = vshrl.u32 683565275, %v496
    %v498 = vshll.u32 683565275, %v495
    %v499 = vshrl.u32 2475754826, %v496
    %v500 = vor.u32 %v498, %v499
    %v501 = vshll.u32 2475754826, %v495
    %v502 = vshrl.u32 2131351028, %v496
    %v503 = vor.u32 %v501, %v502
    %v504 = vshll.u32 2131351028, %v495
    %v505 = vshrl.u32 2102212464, %v496
    %v506 = vor.u32 %v504, %v505
    %v507 = vshll.u32 2102212464, %v495
    %v508 = vshrl.u32 920167782, %v496
    %v509 = vor.u32 %v507, %v508
    %v510 = vshll.u32 920167782, %v495
    %v511 = vshrl.u32 1326507024, %v496
    %v512 = vor.u32 %v510, %v511
    %vm513 = vcmp.lt.s32.totalorder %v494, 1
    %vm514 = vcmp.lt.s32.totalorder %v494, 2
    %vm515 = vcmp.lt.s32.totalorder %v494, 3
    %vm516 = vcmp.lt.s32.totalorder %v494, 4
    %v517 = vsel %vm513, %v497, %v500
    %v518 = vsel %vm516, %v506, 2102212464
    %v519 = vsel %vm515, %v503, %v518
    %v520 = vsel %vm514, %v517, %v519
    %v521 = vsel %vm513, %v500, %v503
    %v522 = vsel %vm516, %v509, 920167782
    %v523 = vsel %vm515, %v506, %v522
    %v524 = vsel %vm514, %v521, %v523
    %v525 = vsel %vm513, %v503, %v506
    %v526 = vsel %vm516, %v512, 1326507024
    %v527 = vsel %vm515, %v509, %v526
    %v528 = vsel %vm514, %v525, %v527
    %v529 = vshll.u32 %v489, 8
    %v530 = vmul.u32.u64.compose %v529, %v528
    %v531 = vextract.low.u32 %v530
    %v532 = vextract.high.u32 %v530
    %v533 = vmul.u32.u64.compose %v529, %v524
    %v534 = vextract.low.u32 %v533
    %v535 = vextract.high.u32 %v533
    %v536 = vmul.u32 %v529, %v520
    %v537 = vadd.s32 %v532, %v534
    %vm538 = vc.u32 %v532, %v534
    %v539 = vadd.s32 %v535, 1
    %v540 = vsel %vm538, %v539, %v535
    %v541 = vadd.s32 %v536, %v540
    %v542 = vadd.s32 %v541, 536870912
    %v543 = vshrl.u32 %v542, 30
    %v544 = vshll.u32 %v543, 30
    %v545 = vsub.s32 %v541, %v544
    %vm546 = vcmp.lt.s32.totalorder %v545, 0
    %v547 = vsub.s32 0, %v545
    %v548 = vsel %vm546, %v547, %v545
    %v549 = vclz %v548
    %v550 = vsub.s32 %v549, 2
    %vm551 = vcmp.gt.s32.totalorder 0, %v550
    %v552 = vsel %vm551, 0, %v550
    %v553 = vsub.s32 32, %v552
    %v554 = vshll.u32 %v545, %v552
    %v555 = vshrl.u32 %v537, %v553
    %v556 = vor.u32 %v554, %v555
    %v557 = vsub.s32 4294967266, %v552
    %v558 = vadd.s32 %v557, 127
    %v559 = vshll.u32 %v558, 23
    %v560 = vor.u32 4788187, %v559
    %v561 = vand.u32 2147483647, %v560
    %v563 = vcvt.s32.f32 %v556
    %v564 = vmul.f32 %v563, %v561
    %v565 = vxor.u32 %v564, 2147483648
    %v566 = vsel %vm483, %v565, %v564
    %v567 = vsub.s32 4, %v543
    %v568 = vsel %vm483, %v567, %v543
    %v569 = vsel %vm482, %v57, %v566
    %v570 = vsel %vm482, 0, %v568
    %v571 = vcosq.f32.pop %v569
    %v572 = vsinq.f32.pop %v569
    %vm573 = vweird.f32 %v57
    %v574 = vand.u32 %v570, 3
    %vm575 = vcmp.lt.s32.totalorder %v574, 2
    %vm576 = vcmp.eq.s32.totalorder %v574, 0
    %v577 = vxor.u32 %v572, 2147483648
    %v578 = vsel %vm576, %v571, %v577
    %vm579 = vcmp.eq.s32.totalorder %v574, 2
    %v580 = vxor.u32 %v571, 2147483648
    %v581 = vsel %vm579, %v580, %v572
    %v582 = vsel %vm575, %v578, %v581
    %v583 = vsel %vm573, nan, %v582
    %v584 = vand.u32 2147483647, %v58
    %vm585 = vcmp.le.f32.partialorder %v584, 0.7853982
    %vm586 = vcmp.lt.s32.totalorder %v58, 0
    %v587 = vand.u32 %v58, 2139095040
    %v588 = vshrl.u32 %v587, 23
    %v589 = vsub.s32 %v588, 127
    %v590 = vand.u32 2147483647, %v58
    %v591 = vand.u32 %v590, 8388607
    %v592 = vor.u32 %v591, 8388608
    %v593 = vsub.s32 0, %v592
    %v594 = vadd.s32 %v589, 1
    %vm595 = vcmp.gt.s32.totalorder %v594, 0
    %v596 = vsel %vm595, %v594, 0
    %v597 = vshrl.u32 %v596, 5
    %v598 = vand.u32 %v596, 31
    %v599 = vsub.s32 32, %v598
    %v600 = vshrl.u32 683565275, %v599
    %v601 = vshll.u32 683565275, %v598
    %v602 = vshrl.u32 2475754826, %v599
    %v603 = vor.u32 %v601, %v602
    %v604 = vshll.u32 2475754826, %v598
    %v605 = vshrl.u32 2131351028, %v599
    %v606 = vor.u32 %v604, %v605
    %v607 = vshll.u32 2131351028, %v598
    %v608 = vshrl.u32 2102212464, %v599
    %v609 = vor.u32 %v607, %v608
    %v610 = vshll.u32 2102212464, %v598
    %v611 = vshrl.u32 920167782, %v599
    %v612 = vor.u32 %v610, %v611
    %v613 = vshll.u32 920167782, %v598
    %v614 = vshrl.u32 1326507024, %v599
    %v615 = vor.u32 %v613, %v614
    %vm616 = vcmp.lt.s32.totalorder %v597, 1
    %vm617 = vcmp.lt.s32.totalorder %v597, 2
    %vm618 = vcmp.lt.s32.totalorder %v597, 3
    %vm619 = vcmp.lt.s32.totalorder %v597, 4
    %v620 = vsel %vm616, %v600, %v603
    %v621 = vsel %vm619, %v609, 2102212464
    %v622 = vsel %vm618, %v606, %v621
    %v623 = vsel %vm617, %v620, %v622
    %v624 = vsel %vm616, %v603, %v606
    %v625 = vsel %vm619, %v612, 920167782
    %v626 = vsel %vm618, %v609, %v625
    %v627 = vsel %vm617, %v624, %v626
    %v628 = vsel %vm616, %v606, %v609
    %v629 = vsel %vm619, %v615, 1326507024
    %v630 = vsel %vm618, %v612, %v629
    %v631 = vsel %vm617, %v628, %v630
    %v632 = vshll.u32 %v592, 8
    %v633 = vmul.u32.u64.compose %v632, %v631
    %v634 = vextract.low.u32 %v633
    %v635 = vextract.high.u32 %v633
    %v636 = vmul.u32.u64.compose %v632, %v627
    %v637 = vextract.low.u32 %v636
    %v638 = vextract.high.u32 %v636
    %v639 = vmul.u32 %v632, %v623
    %v640 = vadd.s32 %v635, %v637
    %vm641 = vc.u32 %v635, %v637
    %v642 = vadd.s32 %v638, 1
    %v643 = vsel %vm641, %v642, %v638
    %v644 = vadd.s32 %v639, %v643
    %v645 = vadd.s32 %v644, 536870912
    %v646 = vshrl.u32 %v645, 30
    %v647 = vshll.u32 %v646, 30
    %v648 = vsub.s32 %v644, %v647
    %vm649 = vcmp.lt.s32.totalorder %v648, 0
    %v650 = vsub.s32 0, %v648
    %v651 = vsel %vm649, %v650, %v648
    %v652 = vclz %v651
    %v653 = vsub.s32 %v652, 2
    %vm654 = vcmp.gt.s32.totalorder 0, %v653
    %v655 = vsel %vm654, 0, %v653
    %v656 = vsub.s32 32, %v655
    %v657 = vshll.u32 %v648, %v655
    %v658 = vshrl.u32 %v640, %v656
    %v659 = vor.u32 %v657, %v658
    %v660 = vsub.s32 4294967266, %v655
    %v661 = vadd.s32 %v660, 127
    %v662 = vshll.u32 %v661, 23
    %v663 = vor.u32 4788187, %v662
    %v664 = vand.u32 2147483647, %v663
    %v666 = vcvt.s32.f32 %v659
    %v667 = vmul.f32 %v666, %v664
    %v668 = vxor.u32 %v667, 2147483648
    %v669 = vsel %vm586, %v668, %v667
    %v670 = vsub.s32 4, %v646
    %v671 = vsel %vm586, %v670, %v646
    %v672 = vsel %vm585, %v58, %v669
    %v673 = vsel %vm585, 0, %v671
    %v674 = vcosq.f32.pop %v672
    %v675 = vsinq.f32.pop %v672
    %vm676 = vweird.f32 %v58
    %v677 = vand.u32 %v673, 3
    %vm678 = vcmp.lt.s32.totalorder %v677, 2
    %vm679 = vcmp.eq.s32.totalorder %v677, 0
    %v680 = vxor.u32 %v675, 2147483648
    %v681 = vsel %vm679, %v674, %v680
    %vm682 = vcmp.eq.s32.totalorder %v677, 2
    %v683 = vxor.u32 %v674, 2147483648
    %v684 = vsel %vm682, %v683, %v675
    %v685 = vsel %vm678, %v681, %v684
    %v686 = vsel %vm676, nan, %v685
    %v687 = vand.u32 2147483647, %v59
    %vm688 = vcmp.le.f32.partialorder %v687, 0.7853982
    %vm689 = vcmp.lt.s32.totalorder %v59, 0
    %v690 = vand.u32 %v59, 2139095040
    %v691 = vshrl.u32 %v690, 23
    %v692 = vsub.s32 %v691, 127
    %v693 = vand.u32 2147483647, %v59
    %v694 = vand.u32 %v693, 8388607
    %v695 = vor.u32 %v694, 8388608
    %v696 = vsub.s32 0, %v695
    %v697 = vadd.s32 %v692, 1
    %vm698 = vcmp.gt.s32.totalorder %v697, 0
    %v699 = vsel %vm698, %v697, 0
    %v700 = vshrl.u32 %v699, 5
    %v701 = vand.u32 %v699, 31
    %v702 = vsub.s32 32, %v701
    %v703 = vshrl.u32 683565275, %v702
    %v704 = vshll.u32 683565275, %v701
    %v705 = vshrl.u32 2475754826, %v702
    %v706 = vor.u32 %v704, %v705
    %v707 = vshll.u32 2475754826, %v701
    %v708 = vshrl.u32 2131351028, %v702
    %v709 = vor.u32 %v707, %v708
    %v710 = vshll.u32 2131351028, %v701
    %v711 = vshrl.u32 2102212464, %v702
    %v712 = vor.u32 %v710, %v711
    %v713 = vshll.u32 2102212464, %v701
    %v714 = vshrl.u32 920167782, %v702
    %v715 = vor.u32 %v713, %v714
    %v716 = vshll.u32 920167782, %v701
    %v717 = vshrl.u32 1326507024, %v702
    %v718 = vor.u32 %v716, %v717
    %vm719 = vcmp.lt.s32.totalorder %v700, 1
    %vm720 = vcmp.lt.s32.totalorder %v700, 2
    %vm721 = vcmp.lt.s32.totalorder %v700, 3
    %vm722 = vcmp.lt.s32.totalorder %v700, 4
    %v723 = vsel %vm719, %v703, %v706
    %v724 = vsel %vm722, %v712, 2102212464
    %v725 = vsel %vm721, %v709, %v724
    %v726 = vsel %vm720, %v723, %v725
    %v727 = vsel %vm719, %v706, %v709
    %v728 = vsel %vm722, %v715, 920167782
    %v729 = vsel %vm721, %v712, %v728
    %v730 = vsel %vm720, %v727, %v729
    %v731 = vsel %vm719, %v709, %v712
    %v732 = vsel %vm722, %v718, 1326507024
    %v733 = vsel %vm721, %v715, %v732
    %v734 = vsel %vm720, %v731, %v733
    %v735 = vshll.u32 %v695, 8
    %v736 = vmul.u32.u64.compose %v735, %v734
    %v737 = vextract.low.u32 %v736
    %v738 = vextract.high.u32 %v736
    %v739 = vmul.u32.u64.compose %v735, %v730
    %v740 = vextract.low.u32 %v739
    %v741 = vextract.high.u32 %v739
    %v742 = vmul.u32 %v735, %v726
    %v743 = vadd.s32 %v738, %v740
    %vm744 = vc.u32 %v738, %v740
    %v745 = vadd.s32 %v741, 1
    %v746 = vsel %vm744, %v745, %v741
    %v747 = vadd.s32 %v742, %v746
    %v748 = vadd.s32 %v747, 536870912
    %v749 = vshrl.u32 %v748, 30
    %v750 = vshll.u32 %v749, 30
    %v751 = vsub.s32 %v747, %v750
    %vm752 = vcmp.lt.s32.totalorder %v751, 0
    %v753 = vsub.s32 0, %v751
    %v754 = vsel %vm752, %v753, %v751
    %v755 = vclz %v754
    %v756 = vsub.s32 %v755, 2
    %vm757 = vcmp.gt.s32.totalorder 0, %v756
    %v758 = vsel %vm757, 0, %v756
    %v759 = vsub.s32 32, %v758
    %v760 = vshll.u32 %v751, %v758
    %v761 = vshrl.u32 %v743, %v759
    %v762 = vor.u32 %v760, %v761
    %v763 = vsub.s32 4294967266, %v758
    %v764 = vadd.s32 %v763, 127
    %v765 = vshll.u32 %v764, 23
    %v766 = vor.u32 4788187, %v765
    %v767 = vand.u32 2147483647, %v766
    %v769 = vcvt.s32.f32 %v762
    %v770 = vmul.f32 %v769, %v767
    %v771 = vxor.u32 %v770, 2147483648
    %v772 = vsel %vm689, %v771, %v770
    %v773 = vsub.s32 4, %v749
    %v774 = vsel %vm689, %v773, %v749
    %v775 = vsel %vm688, %v59, %v772
    %v776 = vsel %vm688, 0, %v774
    %v777 = vcosq.f32.pop %v775
    %v778 = vsinq.f32.pop %v775
    %vm779 = vweird.f32 %v59
    %v780 = vand.u32 %v776, 3
    %vm781 = vcmp.lt.s32.totalorder %v780, 2
    %vm782 = vcmp.eq.s32.totalorder %v780, 0
    %v783 = vxor.u32 %v778, 2147483648
    %v784 = vsel %vm782, %v777, %v783
    %vm785 = vcmp.eq.s32.totalorder %v780, 2
    %v786 = vxor.u32 %v777, 2147483648
    %v787 = vsel %vm785, %v786, %v778
    %v788 = vsel %vm781, %v784, %v787
    %v789 = vsel %vm779, nan, %v788
    %v790 = vand.u32 2147483647, %v60
    %vm791 = vcmp.le.f32.partialorder %v790, 0.7853982
    %vm792 = vcmp.lt.s32.totalorder %v60, 0
    %v793 = vand.u32 %v60, 2139095040
    %v794 = vshrl.u32 %v793, 23
    %v795 = vsub.s32 %v794, 127
    %v796 = vand.u32 2147483647, %v60
    %v797 = vand.u32 %v796, 8388607
    %v798 = vor.u32 %v797, 8388608
    %v799 = vsub.s32 0, %v798
    %v800 = vadd.s32 %v795, 1
    %vm801 = vcmp.gt.s32.totalorder %v800, 0
    %v802 = vsel %vm801, %v800, 0
    %v803 = vshrl.u32 %v802, 5
    %v804 = vand.u32 %v802, 31
    %v805 = vsub.s32 32, %v804
    %v806 = vshrl.u32 683565275, %v805
    %v807 = vshll.u32 683565275, %v804
    %v808 = vshrl.u32 2475754826, %v805
    %v809 = vor.u32 %v807, %v808
    %v810 = vshll.u32 2475754826, %v804
    %v811 = vshrl.u32 2131351028, %v805
    %v812 = vor.u32 %v810, %v811
    %v813 = vshll.u32 2131351028, %v804
    %v814 = vshrl.u32 2102212464, %v805
    %v815 = vor.u32 %v813, %v814
    %v816 = vshll.u32 2102212464, %v804
    %v817 = vshrl.u32 920167782, %v805
    %v818 = vor.u32 %v816, %v817
    %v819 = vshll.u32 920167782, %v804
    %v820 = vshrl.u32 1326507024, %v805
    %v821 = vor.u32 %v819, %v820
    %vm822 = vcmp.lt.s32.totalorder %v803, 1
    %vm823 = vcmp.lt.s32.totalorder %v803, 2
    %vm824 = vcmp.lt.s32.totalorder %v803, 3
    %vm825 = vcmp.lt.s32.totalorder %v803, 4
    %v826 = vsel %vm822, %v806, %v809
    %v827 = vsel %vm825, %v815, 2102212464
    %v828 = vsel %vm824, %v812, %v827
    %v829 = vsel %vm823, %v826, %v828
    %v830 = vsel %vm822, %v809, %v812
    %v831 = vsel %vm825, %v818, 920167782
    %v832 = vsel %vm824, %v815, %v831
    %v833 = vsel %vm823, %v830, %v832
    %v834 = vsel %vm822, %v812, %v815
    %v835 = vsel %vm825, %v821, 1326507024
    %v836 = vsel %vm824, %v818, %v835
    %v837 = vsel %vm823, %v834, %v836
    %v838 = vshll.u32 %v798, 8
    %v839 = vmul.u32.u64.compose %v838, %v837
    %v840 = vextract.low.u32 %v839
    %v841 = vextract.high.u32 %v839
    %v842 = vmul.u32.u64.compose %v838, %v833
    %v843 = vextract.low.u32 %v842
    %v844 = vextract.high.u32 %v842
    %v845 = vmul.u32 %v838, %v829
    %v846 = vadd.s32 %v841, %v843
    %vm847 = vc.u32 %v841, %v843
    %v848 = vadd.s32 %v844, 1
    %v849 = vsel %vm847, %v848, %v844
    %v850 = vadd.s32 %v845, %v849
    %v851 = vadd.s32 %v850, 536870912
    %v852 = vshrl.u32 %v851, 30
    %v853 = vshll.u32 %v852, 30
    %v854 = vsub.s32 %v850, %v853
    %vm855 = vcmp.lt.s32.totalorder %v854, 0
    %v856 = vsub.s32 0, %v854
    %v857 = vsel %vm855, %v856, %v854
    %v858 = vclz %v857
    %v859 = vsub.s32 %v858, 2
    %vm860 = vcmp.gt.s32.totalorder 0, %v859
    %v861 = vsel %vm860, 0, %v859
    %v862 = vsub.s32 32, %v861
    %v863 = vshll.u32 %v854, %v861
    %v864 = vshrl.u32 %v846, %v862
    %v865 = vor.u32 %v863, %v864
    %v866 = vsub.s32 4294967266, %v861
    %v867 = vadd.s32 %v866, 127
    %v868 = vshll.u32 %v867, 23
    %v869 = vor.u32 4788187, %v868
    %v870 = vand.u32 2147483647, %v869
    %v872 = vcvt.s32.f32 %v865
    %v873 = vmul.f32 %v872, %v870
    %v874 = vxor.u32 %v873, 2147483648
    %v875 = vsel %vm792, %v874, %v873
    %v876 = vsub.s32 4, %v852
    %v877 = vsel %vm792, %v876, %v852
    %v878 = vsel %vm791, %v60, %v875
    %v879 = vsel %vm791, 0, %v877
    %v880 = vcosq.f32.pop %v878
    %v881 = vsinq.f32.pop %v878
    %vm882 = vweird.f32 %v60
    %v883 = vand.u32 %v879, 3
    %vm884 = vcmp.lt.s32.totalorder %v883, 2
    %vm885 = vcmp.eq.s32.totalorder %v883, 0
    %v886 = vxor.u32 %v881, 2147483648
    %v887 = vsel %vm885, %v880, %v886
    %vm888 = vcmp.eq.s32.totalorder %v883, 2
    %v889 = vxor.u32 %v880, 2147483648
    %v890 = vsel %vm888, %v889, %v881
    %v891 = vsel %vm884, %v887, %v890
    %v892 = vsel %vm882, nan, %v891
    %v893 = vand.u32 2147483647, %v61
    %vm894 = vcmp.le.f32.partialorder %v893, 0.7853982
    %vm895 = vcmp.lt.s32.totalorder %v61, 0
    %v896 = vand.u32 %v61, 2139095040
    %v897 = vshrl.u32 %v896, 23
    %v898 = vsub.s32 %v897, 127
    %v899 = vand.u32 2147483647, %v61
    %v900 = vand.u32 %v899, 8388607
    %v901 = vor.u32 %v900, 8388608
    %v902 = vsub.s32 0, %v901
    %v903 = vadd.s32 %v898, 1
    %vm904 = vcmp.gt.s32.totalorder %v903, 0
    %v905 = vsel %vm904, %v903, 0
    %v906 = vshrl.u32 %v905, 5
    %v907 = vand.u32 %v905, 31
    %v908 = vsub.s32 32, %v907
    %v909 = vshrl.u32 683565275, %v908
    %v910 = vshll.u32 683565275, %v907
    %v911 = vshrl.u32 2475754826, %v908
    %v912 = vor.u32 %v910, %v911
    %v913 = vshll.u32 2475754826, %v907
    %v914 = vshrl.u32 2131351028, %v908
    %v915 = vor.u32 %v913, %v914
    %v916 = vshll.u32 2131351028, %v907
    %v917 = vshrl.u32 2102212464, %v908
    %v918 = vor.u32 %v916, %v917
    %v919 = vshll.u32 2102212464, %v907
    %v920 = vshrl.u32 920167782, %v908
    %v921 = vor.u32 %v919, %v920
    %v922 = vshll.u32 920167782, %v907
    %v923 = vshrl.u32 1326507024, %v908
    %v924 = vor.u32 %v922, %v923
    %vm925 = vcmp.lt.s32.totalorder %v906, 1
    %vm926 = vcmp.lt.s32.totalorder %v906, 2
    %vm927 = vcmp.lt.s32.totalorder %v906, 3
    %vm928 = vcmp.lt.s32.totalorder %v906, 4
    %v929 = vsel %vm925, %v909, %v912
    %v930 = vsel %vm928, %v918, 2102212464
    %v931 = vsel %vm927, %v915, %v930
    %v932 = vsel %vm926, %v929, %v931
    %v933 = vsel %vm925, %v912, %v915
    %v934 = vsel %vm928, %v921, 920167782
    %v935 = vsel %vm927, %v918, %v934
    %v936 = vsel %vm926, %v933, %v935
    %v937 = vsel %vm925, %v915, %v918
    %v938 = vsel %vm928, %v924, 1326507024
    %v939 = vsel %vm927, %v921, %v938
    %v940 = vsel %vm926, %v937, %v939
    %v941 = vshll.u32 %v901, 8
    %v942 = vmul.u32.u64.compose %v941, %v940
    %v943 = vextract.low.u32 %v942
    %v944 = vextract.high.u32 %v942
    %v945 = vmul.u32.u64.compose %v941, %v936
    %v946 = vextract.low.u32 %v945
    %v947 = vextract.high.u32 %v945
    %v948 = vmul.u32 %v941, %v932
    %v949 = vadd.s32 %v944, %v946
    %vm950 = vc.u32 %v944, %v946
    %v951 = vadd.s32 %v947, 1
    %v952 = vsel %vm950, %v951, %v947
    %v953 = vadd.s32 %v948, %v952
    %v954 = vadd.s32 %v953, 536870912
    %v955 = vshrl.u32 %v954, 30
    %v956 = vshll.u32 %v955, 30
    %v957 = vsub.s32 %v953, %v956
    %vm958 = vcmp.lt.s32.totalorder %v957, 0
    %v959 = vsub.s32 0, %v957
    %v960 = vsel %vm958, %v959, %v957
    %v961 = vclz %v960
    %v962 = vsub.s32 %v961, 2
    %vm963 = vcmp.gt.s32.totalorder 0, %v962
    %v964 = vsel %vm963, 0, %v962
    %v965 = vsub.s32 32, %v964
    %v966 = vshll.u32 %v957, %v964
    %v967 = vshrl.u32 %v949, %v965
    %v968 = vor.u32 %v966, %v967
    %v969 = vsub.s32 4294967266, %v964
    %v970 = vadd.s32 %v969, 127
    %v971 = vshll.u32 %v970, 23
    %v972 = vor.u32 4788187, %v971
    %v973 = vand.u32 2147483647, %v972
    %v975 = vcvt.s32.f32 %v968
    %v976 = vmul.f32 %v975, %v973
    %v977 = vxor.u32 %v976, 2147483648
    %v978 = vsel %vm895, %v977, %v976
    %v979 = vsub.s32 4, %v955
    %v980 = vsel %vm895, %v979, %v955
    %v981 = vsel %vm894, %v61, %v978
    %v982 = vsel %vm894, 0, %v980
    %v983 = vcosq.f32.pop %v981
    %v984 = vsinq.f32.pop %v981
    %vm985 = vweird.f32 %v61
    %v986 = vand.u32 %v982, 3
    %vm987 = vcmp.lt.s32.totalorder %v986, 2
    %vm988 = vcmp.eq.s32.totalorder %v986, 0
    %v989 = vxor.u32 %v984, 2147483648
    %v990 = vsel %vm988, %v983, %v989
    %vm991 = vcmp.eq.s32.totalorder %v986, 2
    %v992 = vxor.u32 %v983, 2147483648
    %v993 = vsel %vm991, %v992, %v984
    %v994 = vsel %vm987, %v990, %v993
    %v995 = vsel %vm985, nan, %v994
    %v996 = vand.u32 2147483647, %v62
    %vm997 = vcmp.le.f32.partialorder %v996, 0.7853982
    %vm998 = vcmp.lt.s32.totalorder %v62, 0
    %v999 = vand.u32 %v62, 2139095040
    %v1000 = vshrl.u32 %v999, 23
    %v1001 = vsub.s32 %v1000, 127
    %v1002 = vand.u32 2147483647, %v62
    %v1003 = vand.u32 %v1002, 8388607
    %v1004 = vor.u32 %v1003, 8388608
    %v1005 = vsub.s32 0, %v1004
    %v1006 = vadd.s32 %v1001, 1
    %vm1007 = vcmp.gt.s32.totalorder %v1006, 0
    %v1008 = vsel %vm1007, %v1006, 0
    %v1009 = vshrl.u32 %v1008, 5
    %v1010 = vand.u32 %v1008, 31
    %v1011 = vsub.s32 32, %v1010
    %v1012 = vshrl.u32 683565275, %v1011
    %v1013 = vshll.u32 683565275, %v1010
    %v1014 = vshrl.u32 2475754826, %v1011
    %v1015 = vor.u32 %v1013, %v1014
    %v1016 = vshll.u32 2475754826, %v1010
    %v1017 = vshrl.u32 2131351028, %v1011
    %v1018 = vor.u32 %v1016, %v1017
    %v1019 = vshll.u32 2131351028, %v1010
    %v1020 = vshrl.u32 2102212464, %v1011
    %v1021 = vor.u32 %v1019, %v1020
    %v1022 = vshll.u32 2102212464, %v1010
    %v1023 = vshrl.u32 920167782, %v1011
    %v1024 = vor.u32 %v1022, %v1023
    %v1025 = vshll.u32 920167782, %v1010
    %v1026 = vshrl.u32 1326507024, %v1011
    %v1027 = vor.u32 %v1025, %v1026
    %vm1028 = vcmp.lt.s32.totalorder %v1009, 1
    %vm1029 = vcmp.lt.s32.totalorder %v1009, 2
    %vm1030 = vcmp.lt.s32.totalorder %v1009, 3
    %vm1031 = vcmp.lt.s32.totalorder %v1009, 4
    %v1032 = vsel %vm1028, %v1012, %v1015
    %v1033 = vsel %vm1031, %v1021, 2102212464
    %v1034 = vsel %vm1030, %v1018, %v1033
    %v1035 = vsel %vm1029, %v1032, %v1034
    %v1036 = vsel %vm1028, %v1015, %v1018
    %v1037 = vsel %vm1031, %v1024, 920167782
    %v1038 = vsel %vm1030, %v1021, %v1037
    %v1039 = vsel %vm1029, %v1036, %v1038
    %v1040 = vsel %vm1028, %v1018, %v1021
    %v1041 = vsel %vm1031, %v1027, 1326507024
    %v1042 = vsel %vm1030, %v1024, %v1041
    %v1043 = vsel %vm1029, %v1040, %v1042
    %v1044 = vshll.u32 %v1004, 8
    %v1045 = vmul.u32.u64.compose %v1044, %v1043
    %v1046 = vextract.low.u32 %v1045
    %v1047 = vextract.high.u32 %v1045
    %v1048 = vmul.u32.u64.compose %v1044, %v1039
    %v1049 = vextract.low.u32 %v1048
    %v1050 = vextract.high.u32 %v1048
    %v1051 = vmul.u32 %v1044, %v1035
    %v1052 = vadd.s32 %v1047, %v1049
    %vm1053 = vc.u32 %v1047, %v1049
    %v1054 = vadd.s32 %v1050, 1
    %v1055 = vsel %vm1053, %v1054, %v1050
    %v1056 = vadd.s32 %v1051, %v1055
    %v1057 = vadd.s32 %v1056, 536870912
    %v1058 = vshrl.u32 %v1057, 30
    %v1059 = vshll.u32 %v1058, 30
    %v1060 = vsub.s32 %v1056, %v1059
    %vm1061 = vcmp.lt.s32.totalorder %v1060, 0
    %v1062 = vsub.s32 0, %v1060
    %v1063 = vsel %vm1061, %v1062, %v1060
    %v1064 = vclz %v1063
    %v1065 = vsub.s32 %v1064, 2
    %vm1066 = vcmp.gt.s32.totalorder 0, %v1065
    %v1067 = vsel %vm1066, 0, %v1065
    %v1068 = vsub.s32 32, %v1067
    %v1069 = vshll.u32 %v1060, %v1067
    %v1070 = vshrl.u32 %v1052, %v1068
    %v1071 = vor.u32 %v1069, %v1070
    %v1072 = vsub.s32 4294967266, %v1067
    %v1073 = vadd.s32 %v1072, 127
    %v1074 = vshll.u32 %v1073, 23
    %v1075 = vor.u32 4788187, %v1074
    %v1076 = vand.u32 2147483647, %v1075
    %v1078 = vcvt.s32.f32 %v1071
    %v1079 = vmul.f32 %v1078, %v1076
    %v1080 = vxor.u32 %v1079, 2147483648
    %v1081 = vsel %vm998, %v1080, %v1079
    %v1082 = vsub.s32 4, %v1058
    %v1083 = vsel %vm998, %v1082, %v1058
    %v1084 = vsel %vm997, %v62, %v1081
    %v1085 = vsel %vm997, 0, %v1083
    %v1086 = vcosq.f32.pop %v1084
    %v1087 = vsinq.f32.pop %v1084
    %vm1088 = vweird.f32 %v62
    %v1089 = vand.u32 %v1085, 3
    %vm1090 = vcmp.lt.s32.totalorder %v1089, 2
    %vm1091 = vcmp.eq.s32.totalorder %v1089, 0
    %v1092 = vxor.u32 %v1087, 2147483648
    %v1093 = vsel %vm1091, %v1086, %v1092
    %vm1094 = vcmp.eq.s32.totalorder %v1089, 2
    %v1095 = vxor.u32 %v1086, 2147483648
    %v1096 = vsel %vm1094, %v1095, %v1087
    %v1097 = vsel %vm1090, %v1093, %v1096
    %v1098 = vsel %vm1088, nan, %v1097
    %v1099 = vand.u32 2147483647, %v63
    %vm1100 = vcmp.le.f32.partialorder %v1099, 0.7853982
    %vm1101 = vcmp.lt.s32.totalorder %v63, 0
    %v1102 = vand.u32 %v63, 2139095040
    %v1103 = vshrl.u32 %v1102, 23
    %v1104 = vsub.s32 %v1103, 127
    %v1105 = vand.u32 2147483647, %v63
    %v1106 = vand.u32 %v1105, 8388607
    %v1107 = vor.u32 %v1106, 8388608
    %v1108 = vsub.s32 0, %v1107
    %v1109 = vadd.s32 %v1104, 1
    %vm1110 = vcmp.gt.s32.totalorder %v1109, 0
    %v1111 = vsel %vm1110, %v1109, 0
    %v1112 = vshrl.u32 %v1111, 5
    %v1113 = vand.u32 %v1111, 31
    %v1114 = vsub.s32 32, %v1113
    %v1115 = vshrl.u32 683565275, %v1114
    %v1116 = vshll.u32 683565275, %v1113
    %v1117 = vshrl.u32 2475754826, %v1114
    %v1118 = vor.u32 %v1116, %v1117
    %v1119 = vshll.u32 2475754826, %v1113
    %v1120 = vshrl.u32 2131351028, %v1114
    %v1121 = vor.u32 %v1119, %v1120
    %v1122 = vshll.u32 2131351028, %v1113
    %v1123 = vshrl.u32 2102212464, %v1114
    %v1124 = vor.u32 %v1122, %v1123
    %v1125 = vshll.u32 2102212464, %v1113
    %v1126 = vshrl.u32 920167782, %v1114
    %v1127 = vor.u32 %v1125, %v1126
    %v1128 = vshll.u32 920167782, %v1113
    %v1129 = vshrl.u32 1326507024, %v1114
    %v1130 = vor.u32 %v1128, %v1129
    %vm1131 = vcmp.lt.s32.totalorder %v1112, 1
    %vm1132 = vcmp.lt.s32.totalorder %v1112, 2
    %vm1133 = vcmp.lt.s32.totalorder %v1112, 3
    %vm1134 = vcmp.lt.s32.totalorder %v1112, 4
    %v1135 = vsel %vm1131, %v1115, %v1118
    %v1136 = vsel %vm1134, %v1124, 2102212464
    %v1137 = vsel %vm1133, %v1121, %v1136
    %v1138 = vsel %vm1132, %v1135, %v1137
    %v1139 = vsel %vm1131, %v1118, %v1121
    %v1140 = vsel %vm1134, %v1127, 920167782
    %v1141 = vsel %vm1133, %v1124, %v1140
    %v1142 = vsel %vm1132, %v1139, %v1141
    %v1143 = vsel %vm1131, %v1121, %v1124
    %v1144 = vsel %vm1134, %v1130, 1326507024
    %v1145 = vsel %vm1133, %v1127, %v1144
    %v1146 = vsel %vm1132, %v1143, %v1145
    %v1147 = vshll.u32 %v1107, 8
    %v1148 = vmul.u32.u64.compose %v1147, %v1146
    %v1149 = vextract.low.u32 %v1148
    %v1150 = vextract.high.u32 %v1148
    %v1151 = vmul.u32.u64.compose %v1147, %v1142
    %v1152 = vextract.low.u32 %v1151
    %v1153 = vextract.high.u32 %v1151
    %v1154 = vmul.u32 %v1147, %v1138
    %v1155 = vadd.s32 %v1150, %v1152
    %vm1156 = vc.u32 %v1150, %v1152
    %v1157 = vadd.s32 %v1153, 1
    %v1158 = vsel %vm1156, %v1157, %v1153
    %v1159 = vadd.s32 %v1154, %v1158
    %v1160 = vadd.s32 %v1159, 536870912
    %v1161 = vshrl.u32 %v1160, 30
    %v1162 = vshll.u32 %v1161, 30
    %v1163 = vsub.s32 %v1159, %v1162
    %vm1164 = vcmp.lt.s32.totalorder %v1163, 0
    %v1165 = vsub.s32 0, %v1163
    %v1166 = vsel %vm1164, %v1165, %v1163
    %v1167 = vclz %v1166
    %v1168 = vsub.s32 %v1167, 2
    %vm1169 = vcmp.gt.s32.totalorder 0, %v1168
    %v1170 = vsel %vm1169, 0, %v1168
    %v1171 = vsub.s32 32, %v1170
    %v1172 = vshll.u32 %v1163, %v1170
    %v1173 = vshrl.u32 %v1155, %v1171
    %v1174 = vor.u32 %v1172, %v1173
    %v1175 = vsub.s32 4294967266, %v1170
    %v1176 = vadd.s32 %v1175, 127
    %v1177 = vshll.u32 %v1176, 23
    %v1178 = vor.u32 4788187, %v1177
    %v1179 = vand.u32 2147483647, %v1178
    %v1181 = vcvt.s32.f32 %v1174
    %v1182 = vmul.f32 %v1181, %v1179
    %v1183 = vxor.u32 %v1182, 2147483648
    %v1184 = vsel %vm1101, %v1183, %v1182
    %v1185 = vsub.s32 4, %v1161
    %v1186 = vsel %vm1101, %v1185, %v1161
    %v1187 = vsel %vm1100, %v63, %v1184
    %v1188 = vsel %vm1100, 0, %v1186
    %v1189 = vcosq.f32.pop %v1187
    %v1190 = vsinq.f32.pop %v1187
    %vm1191 = vweird.f32 %v63
    %v1192 = vand.u32 %v1188, 3
    %vm1193 = vcmp.lt.s32.totalorder %v1192, 2
    %vm1194 = vcmp.eq.s32.totalorder %v1192, 0
    %v1195 = vxor.u32 %v1190, 2147483648
    %v1196 = vsel %vm1194, %v1189, %v1195
    %vm1197 = vcmp.eq.s32.totalorder %v1192, 2
    %v1198 = vxor.u32 %v1189, 2147483648
    %v1199 = vsel %vm1197, %v1198, %v1190
    %v1200 = vsel %vm1193, %v1196, %v1199
    %v1201 = vsel %vm1191, nan, %v1200
    %v1202 = vand.u32 2147483647, %v64
    %vm1203 = vcmp.le.f32.partialorder %v1202, 0.7853982
    %vm1204 = vcmp.lt.s32.totalorder %v64, 0
    %v1205 = vand.u32 %v64, 2139095040
    %v1206 = vshrl.u32 %v1205, 23
    %v1207 = vsub.s32 %v1206, 127
    %v1208 = vand.u32 2147483647, %v64
    %v1209 = vand.u32 %v1208, 8388607
    %v1210 = vor.u32 %v1209, 8388608
    %v1211 = vsub.s32 0, %v1210
    %v1212 = vadd.s32 %v1207, 1
    %vm1213 = vcmp.gt.s32.totalorder %v1212, 0
    %v1214 = vsel %vm1213, %v1212, 0
    %v1215 = vshrl.u32 %v1214, 5
    %v1216 = vand.u32 %v1214, 31
    %v1217 = vsub.s32 32, %v1216
    %v1218 = vshrl.u32 683565275, %v1217
    %v1219 = vshll.u32 683565275, %v1216
    %v1220 = vshrl.u32 2475754826, %v1217
    %v1221 = vor.u32 %v1219, %v1220
    %v1222 = vshll.u32 2475754826, %v1216
    %v1223 = vshrl.u32 2131351028, %v1217
    %v1224 = vor.u32 %v1222, %v1223
    %v1225 = vshll.u32 2131351028, %v1216
    %v1226 = vshrl.u32 2102212464, %v1217
    %v1227 = vor.u32 %v1225, %v1226
    %v1228 = vshll.u32 2102212464, %v1216
    %v1229 = vshrl.u32 920167782, %v1217
    %v1230 = vor.u32 %v1228, %v1229
    %v1231 = vshll.u32 920167782, %v1216
    %v1232 = vshrl.u32 1326507024, %v1217
    %v1233 = vor.u32 %v1231, %v1232
    %vm1234 = vcmp.lt.s32.totalorder %v1215, 1
    %vm1235 = vcmp.lt.s32.totalorder %v1215, 2
    %vm1236 = vcmp.lt.s32.totalorder %v1215, 3
    %vm1237 = vcmp.lt.s32.totalorder %v1215, 4
    %v1238 = vsel %vm1234, %v1218, %v1221
    %v1239 = vsel %vm1237, %v1227, 2102212464
    %v1240 = vsel %vm1236, %v1224, %v1239
    %v1241 = vsel %vm1235, %v1238, %v1240
    %v1242 = vsel %vm1234, %v1221, %v1224
    %v1243 = vsel %vm1237, %v1230, 920167782
    %v1244 = vsel %vm1236, %v1227, %v1243
    %v1245 = vsel %vm1235, %v1242, %v1244
    %v1246 = vsel %vm1234, %v1224, %v1227
    %v1247 = vsel %vm1237, %v1233, 1326507024
    %v1248 = vsel %vm1236, %v1230, %v1247
    %v1249 = vsel %vm1235, %v1246, %v1248
    %v1250 = vshll.u32 %v1210, 8
    %v1251 = vmul.u32.u64.compose %v1250, %v1249
    %v1252 = vextract.low.u32 %v1251
    %v1253 = vextract.high.u32 %v1251
    %v1254 = vmul.u32.u64.compose %v1250, %v1245
    %v1255 = vextract.low.u32 %v1254
    %v1256 = vextract.high.u32 %v1254
    %v1257 = vmul.u32 %v1250, %v1241
    %v1258 = vadd.s32 %v1253, %v1255
    %vm1259 = vc.u32 %v1253, %v1255
    %v1260 = vadd.s32 %v1256, 1
    %v1261 = vsel %vm1259, %v1260, %v1256
    %v1262 = vadd.s32 %v1257, %v1261
    %v1263 = vadd.s32 %v1262, 536870912
    %v1264 = vshrl.u32 %v1263, 30
    %v1265 = vshll.u32 %v1264, 30
    %v1266 = vsub.s32 %v1262, %v1265
    %vm1267 = vcmp.lt.s32.totalorder %v1266, 0
    %v1268 = vsub.s32 0, %v1266
    %v1269 = vsel %vm1267, %v1268, %v1266
    %v1270 = vclz %v1269
    %v1271 = vsub.s32 %v1270, 2
    %vm1272 = vcmp.gt.s32.totalorder 0, %v1271
    %v1273 = vsel %vm1272, 0, %v1271
    %v1274 = vsub.s32 32, %v1273
    %v1275 = vshll.u32 %v1266, %v1273
    %v1276 = vshrl.u32 %v1258, %v1274
    %v1277 = vor.u32 %v1275, %v1276
    %v1278 = vsub.s32 4294967266, %v1273
    %v1279 = vadd.s32 %v1278, 127
    %v1280 = vshll.u32 %v1279, 23
    %v1281 = vor.u32 4788187, %v1280
    %v1282 = vand.u32 2147483647, %v1281
    %v1284 = vcvt.s32.f32 %v1277
    %v1285 = vmul.f32 %v1284, %v1282
    %v1286 = vxor.u32 %v1285, 2147483648
    %v1287 = vsel %vm1204, %v1286, %v1285
    %v1288 = vsub.s32 4, %v1264
    %v1289 = vsel %vm1204, %v1288, %v1264
    %v1290 = vsel %vm1203, %v64, %v1287
    %v1291 = vsel %vm1203, 0, %v1289
    %v1292 = vcosq.f32.pop %v1290
    %v1293 = vsinq.f32.pop %v1290
    %vm1294 = vweird.f32 %v64
    %v1295 = vand.u32 %v1291, 3
    %vm1296 = vcmp.lt.s32.totalorder %v1295, 2
    %vm1297 = vcmp.eq.s32.totalorder %v1295, 0
    %v1298 = vxor.u32 %v1293, 2147483648
    %v1299 = vsel %vm1297, %v1292, %v1298
    %vm1300 = vcmp.eq.s32.totalorder %v1295, 2
    %v1301 = vxor.u32 %v1292, 2147483648
    %v1302 = vsel %vm1300, %v1301, %v1293
    %v1303 = vsel %vm1296, %v1299, %v1302
    %v1304 = vsel %vm1294, nan, %v1303
    %v1305 = vand.u32 2147483647, %v65
    %vm1306 = vcmp.le.f32.partialorder %v1305, 0.7853982
    %vm1307 = vcmp.lt.s32.totalorder %v65, 0
    %v1308 = vand.u32 %v65, 2139095040
    %v1309 = vshrl.u32 %v1308, 23
    %v1310 = vsub.s32 %v1309, 127
    %v1311 = vand.u32 2147483647, %v65
    %v1312 = vand.u32 %v1311, 8388607
    %v1313 = vor.u32 %v1312, 8388608
    %v1314 = vsub.s32 0, %v1313
    %v1315 = vadd.s32 %v1310, 1
    %vm1316 = vcmp.gt.s32.totalorder %v1315, 0
    %v1317 = vsel %vm1316, %v1315, 0
    %v1318 = vshrl.u32 %v1317, 5
    %v1319 = vand.u32 %v1317, 31
    %v1320 = vsub.s32 32, %v1319
    %v1321 = vshrl.u32 683565275, %v1320
    %v1322 = vshll.u32 683565275, %v1319
    %v1323 = vshrl.u32 2475754826, %v1320
    %v1324 = vor.u32 %v1322, %v1323
    %v1325 = vshll.u32 2475754826, %v1319
    %v1326 = vshrl.u32 2131351028, %v1320
    %v1327 = vor.u32 %v1325, %v1326
    %v1328 = vshll.u32 2131351028, %v1319
    %v1329 = vshrl.u32 2102212464, %v1320
    %v1330 = vor.u32 %v1328, %v1329
    %v1331 = vshll.u32 2102212464, %v1319
    %v1332 = vshrl.u32 920167782, %v1320
    %v1333 = vor.u32 %v1331, %v1332
    %v1334 = vshll.u32 920167782, %v1319
    %v1335 = vshrl.u32 1326507024, %v1320
    %v1336 = vor.u32 %v1334, %v1335
    %vm1337 = vcmp.lt.s32.totalorder %v1318, 1
    %vm1338 = vcmp.lt.s32.totalorder %v1318, 2
    %vm1339 = vcmp.lt.s32.totalorder %v1318, 3
    %vm1340 = vcmp.lt.s32.totalorder %v1318, 4
    %v1341 = vsel %vm1337, %v1321, %v1324
    %v1342 = vsel %vm1340, %v1330, 2102212464
    %v1343 = vsel %vm1339, %v1327, %v1342
    %v1344 = vsel %vm1338, %v1341, %v1343
    %v1345 = vsel %vm1337, %v1324, %v1327
    %v1346 = vsel %vm1340, %v1333, 920167782
    %v1347 = vsel %vm1339, %v1330, %v1346
    %v1348 = vsel %vm1338, %v1345, %v1347
    %v1349 = vsel %vm1337, %v1327, %v1330
    %v1350 = vsel %vm1340, %v1336, 1326507024
    %v1351 = vsel %vm1339, %v1333, %v1350
    %v1352 = vsel %vm1338, %v1349, %v1351
    %v1353 = vshll.u32 %v1313, 8
    %v1354 = vmul.u32.u64.compose %v1353, %v1352
    %v1355 = vextract.low.u32 %v1354
    %v1356 = vextract.high.u32 %v1354
    %v1357 = vmul.u32.u64.compose %v1353, %v1348
    %v1358 = vextract.low.u32 %v1357
    %v1359 = vextract.high.u32 %v1357
    %v1360 = vmul.u32 %v1353, %v1344
    %v1361 = vadd.s32 %v1356, %v1358
    %vm1362 = vc.u32 %v1356, %v1358
    %v1363 = vadd.s32 %v1359, 1
    %v1364 = vsel %vm1362, %v1363, %v1359
    %v1365 = vadd.s32 %v1360, %v1364
    %v1366 = vadd.s32 %v1365, 536870912
    %v1367 = vshrl.u32 %v1366, 30
    %v1368 = vshll.u32 %v1367, 30
    %v1369 = vsub.s32 %v1365, %v1368
    %vm1370 = vcmp.lt.s32.totalorder %v1369, 0
    %v1371 = vsub.s32 0, %v1369
    %v1372 = vsel %vm1370, %v1371, %v1369
    %v1373 = vclz %v1372
    %v1374 = vsub.s32 %v1373, 2
    %vm1375 = vcmp.gt.s32.totalorder 0, %v1374
    %v1376 = vsel %vm1375, 0, %v1374
    %v1377 = vsub.s32 32, %v1376
    %v1378 = vshll.u32 %v1369, %v1376
    %v1379 = vshrl.u32 %v1361, %v1377
    %v1380 = vor.u32 %v1378, %v1379
    %v1381 = vsub.s32 4294967266, %v1376
    %v1382 = vadd.s32 %v1381, 127
    %v1383 = vshll.u32 %v1382, 23
    %v1384 = vor.u32 4788187, %v1383
    %v1385 = vand.u32 2147483647, %v1384
    %v1387 = vcvt.s32.f32 %v1380
    %v1388 = vmul.f32 %v1387, %v1385
    %v1389 = vxor.u32 %v1388, 2147483648
    %v1390 = vsel %vm1307, %v1389, %v1388
    %v1391 = vsub.s32 4, %v1367
    %v1392 = vsel %vm1307, %v1391, %v1367
    %v1393 = vsel %vm1306, %v65, %v1390
    %v1394 = vsel %vm1306, 0, %v1392
    %v1395 = vcosq.f32.pop %v1393
    %v1396 = vsinq.f32.pop %v1393
    %vm1397 = vweird.f32 %v65
    %v1398 = vand.u32 %v1394, 3
    %vm1399 = vcmp.lt.s32.totalorder %v1398, 2
    %vm1400 = vcmp.eq.s32.totalorder %v1398, 0
    %v1401 = vxor.u32 %v1396, 2147483648
    %v1402 = vsel %vm1400, %v1395, %v1401
    %vm1403 = vcmp.eq.s32.totalorder %v1398, 2
    %v1404 = vxor.u32 %v1395, 2147483648
    %v1405 = vsel %vm1403, %v1404, %v1396
    %v1406 = vsel %vm1399, %v1402, %v1405
    %v1407 = vsel %vm1397, nan, %v1406
    %v1408 = vand.u32 2147483647, %v66
    %vm1409 = vcmp.le.f32.partialorder %v1408, 0.7853982
    %vm1410 = vcmp.lt.s32.totalorder %v66, 0
    %v1411 = vand.u32 %v66, 2139095040
    %v1412 = vshrl.u32 %v1411, 23
    %v1413 = vsub.s32 %v1412, 127
    %v1414 = vand.u32 2147483647, %v66
    %v1415 = vand.u32 %v1414, 8388607
    %v1416 = vor.u32 %v1415, 8388608
    %v1417 = vsub.s32 0, %v1416
    %v1418 = vadd.s32 %v1413, 1
    %vm1419 = vcmp.gt.s32.totalorder %v1418, 0
    %v1420 = vsel %vm1419, %v1418, 0
    %v1421 = vshrl.u32 %v1420, 5
    %v1422 = vand.u32 %v1420, 31
    %v1423 = vsub.s32 32, %v1422
    %v1424 = vshrl.u32 683565275, %v1423
    %v1425 = vshll.u32 683565275, %v1422
    %v1426 = vshrl.u32 2475754826, %v1423
    %v1427 = vor.u32 %v1425, %v1426
    %v1428 = vshll.u32 2475754826, %v1422
    %v1429 = vshrl.u32 2131351028, %v1423
    %v1430 = vor.u32 %v1428, %v1429
    %v1431 = vshll.u32 2131351028, %v1422
    %v1432 = vshrl.u32 2102212464, %v1423
    %v1433 = vor.u32 %v1431, %v1432
    %v1434 = vshll.u32 2102212464, %v1422
    %v1435 = vshrl.u32 920167782, %v1423
    %v1436 = vor.u32 %v1434, %v1435
    %v1437 = vshll.u32 920167782, %v1422
    %v1438 = vshrl.u32 1326507024, %v1423
    %v1439 = vor.u32 %v1437, %v1438
    %vm1440 = vcmp.lt.s32.totalorder %v1421, 1
    %vm1441 = vcmp.lt.s32.totalorder %v1421, 2
    %vm1442 = vcmp.lt.s32.totalorder %v1421, 3
    %vm1443 = vcmp.lt.s32.totalorder %v1421, 4
    %v1444 = vsel %vm1440, %v1424, %v1427
    %v1445 = vsel %vm1443, %v1433, 2102212464
    %v1446 = vsel %vm1442, %v1430, %v1445
    %v1447 = vsel %vm1441, %v1444, %v1446
    %v1448 = vsel %vm1440, %v1427, %v1430
    %v1449 = vsel %vm1443, %v1436, 920167782
    %v1450 = vsel %vm1442, %v1433, %v1449
    %v1451 = vsel %vm1441, %v1448, %v1450
    %v1452 = vsel %vm1440, %v1430, %v1433
    %v1453 = vsel %vm1443, %v1439, 1326507024
    %v1454 = vsel %vm1442, %v1436, %v1453
    %v1455 = vsel %vm1441, %v1452, %v1454
    %v1456 = vshll.u32 %v1416, 8
    %v1457 = vmul.u32.u64.compose %v1456, %v1455
    %v1458 = vextract.low.u32 %v1457
    %v1459 = vextract.high.u32 %v1457
    %v1460 = vmul.u32.u64.compose %v1456, %v1451
    %v1461 = vextract.low.u32 %v1460
    %v1462 = vextract.high.u32 %v1460
    %v1463 = vmul.u32 %v1456, %v1447
    %v1464 = vadd.s32 %v1459, %v1461
    %vm1465 = vc.u32 %v1459, %v1461
    %v1466 = vadd.s32 %v1462, 1
    %v1467 = vsel %vm1465, %v1466, %v1462
    %v1468 = vadd.s32 %v1463, %v1467
    %v1469 = vadd.s32 %v1468, 536870912
    %v1470 = vshrl.u32 %v1469, 30
    %v1471 = vshll.u32 %v1470, 30
    %v1472 = vsub.s32 %v1468, %v1471
    %vm1473 = vcmp.lt.s32.totalorder %v1472, 0
    %v1474 = vsub.s32 0, %v1472
    %v1475 = vsel %vm1473, %v1474, %v1472
    %v1476 = vclz %v1475
    %v1477 = vsub.s32 %v1476, 2
    %vm1478 = vcmp.gt.s32.totalorder 0, %v1477
    %v1479 = vsel %vm1478, 0, %v1477
    %v1480 = vsub.s32 32, %v1479
    %v1481 = vshll.u32 %v1472, %v1479
    %v1482 = vshrl.u32 %v1464, %v1480
    %v1483 = vor.u32 %v1481, %v1482
    %v1484 = vsub.s32 4294967266, %v1479
    %v1485 = vadd.s32 %v1484, 127
    %v1486 = vshll.u32 %v1485, 23
    %v1487 = vor.u32 4788187, %v1486
    %v1488 = vand.u32 2147483647, %v1487
    %v1490 = vcvt.s32.f32 %v1483
    %v1491 = vmul.f32 %v1490, %v1488
    %v1492 = vxor.u32 %v1491, 2147483648
    %v1493 = vsel %vm1410, %v1492, %v1491
    %v1494 = vsub.s32 4, %v1470
    %v1495 = vsel %vm1410, %v1494, %v1470
    %v1496 = vsel %vm1409, %v66, %v1493
    %v1497 = vsel %vm1409, 0, %v1495
    %v1498 = vcosq.f32.pop %v1496
    %v1499 = vsinq.f32.pop %v1496
    %vm1500 = vweird.f32 %v66
    %v1501 = vand.u32 %v1497, 3
    %vm1502 = vcmp.lt.s32.totalorder %v1501, 2
    %vm1503 = vcmp.eq.s32.totalorder %v1501, 0
    %v1504 = vxor.u32 %v1499, 2147483648
    %v1505 = vsel %vm1503, %v1498, %v1504
    %vm1506 = vcmp.eq.s32.totalorder %v1501, 2
    %v1507 = vxor.u32 %v1498, 2147483648
    %v1508 = vsel %vm1506, %v1507, %v1499
    %v1509 = vsel %vm1502, %v1505, %v1508
    %v1510 = vsel %vm1500, nan, %v1509
    %v1511 = vand.u32 2147483647, %v67
    %vm1512 = vcmp.le.f32.partialorder %v1511, 0.7853982
    %vm1513 = vcmp.lt.s32.totalorder %v67, 0
    %v1514 = vand.u32 %v67, 2139095040
    %v1515 = vshrl.u32 %v1514, 23
    %v1516 = vsub.s32 %v1515, 127
    %v1517 = vand.u32 2147483647, %v67
    %v1518 = vand.u32 %v1517, 8388607
    %v1519 = vor.u32 %v1518, 8388608
    %v1520 = vsub.s32 0, %v1519
    %v1521 = vadd.s32 %v1516, 1
    %vm1522 = vcmp.gt.s32.totalorder %v1521, 0
    %v1523 = vsel %vm1522, %v1521, 0
    %v1524 = vshrl.u32 %v1523, 5
    %v1525 = vand.u32 %v1523, 31
    %v1526 = vsub.s32 32, %v1525
    %v1527 = vshrl.u32 683565275, %v1526
    %v1528 = vshll.u32 683565275, %v1525
    %v1529 = vshrl.u32 2475754826, %v1526
    %v1530 = vor.u32 %v1528, %v1529
    %v1531 = vshll.u32 2475754826, %v1525
    %v1532 = vshrl.u32 2131351028, %v1526
    %v1533 = vor.u32 %v1531, %v1532
    %v1534 = vshll.u32 2131351028, %v1525
    %v1535 = vshrl.u32 2102212464, %v1526
    %v1536 = vor.u32 %v1534, %v1535
    %v1537 = vshll.u32 2102212464, %v1525
    %v1538 = vshrl.u32 920167782, %v1526
    %v1539 = vor.u32 %v1537, %v1538
    %v1540 = vshll.u32 920167782, %v1525
    %v1541 = vshrl.u32 1326507024, %v1526
    %v1542 = vor.u32 %v1540, %v1541
    %vm1543 = vcmp.lt.s32.totalorder %v1524, 1
    %vm1544 = vcmp.lt.s32.totalorder %v1524, 2
    %vm1545 = vcmp.lt.s32.totalorder %v1524, 3
    %vm1546 = vcmp.lt.s32.totalorder %v1524, 4
    %v1547 = vsel %vm1543, %v1527, %v1530
    %v1548 = vsel %vm1546, %v1536, 2102212464
    %v1549 = vsel %vm1545, %v1533, %v1548
    %v1550 = vsel %vm1544, %v1547, %v1549
    %v1551 = vsel %vm1543, %v1530, %v1533
    %v1552 = vsel %vm1546, %v1539, 920167782
    %v1553 = vsel %vm1545, %v1536, %v1552
    %v1554 = vsel %vm1544, %v1551, %v1553
    %v1555 = vsel %vm1543, %v1533, %v1536
    %v1556 = vsel %vm1546, %v1542, 1326507024
    %v1557 = vsel %vm1545, %v1539, %v1556
    %v1558 = vsel %vm1544, %v1555, %v1557
    %v1559 = vshll.u32 %v1519, 8
    %v1560 = vmul.u32.u64.compose %v1559, %v1558
    %v1561 = vextract.low.u32 %v1560
    %v1562 = vextract.high.u32 %v1560
    %v1563 = vmul.u32.u64.compose %v1559, %v1554
    %v1564 = vextract.low.u32 %v1563
    %v1565 = vextract.high.u32 %v1563
    %v1566 = vmul.u32 %v1559, %v1550
    %v1567 = vadd.s32 %v1562, %v1564
    %vm1568 = vc.u32 %v1562, %v1564
    %v1569 = vadd.s32 %v1565, 1
    %v1570 = vsel %vm1568, %v1569, %v1565
    %v1571 = vadd.s32 %v1566, %v1570
    %v1572 = vadd.s32 %v1571, 536870912
    %v1573 = vshrl.u32 %v1572, 30
    %v1574 = vshll.u32 %v1573, 30
    %v1575 = vsub.s32 %v1571, %v1574
    %vm1576 = vcmp.lt.s32.totalorder %v1575, 0
    %v1577 = vsub.s32 0, %v1575
    %v1578 = vsel %vm1576, %v1577, %v1575
    %v1579 = vclz %v1578
    %v1580 = vsub.s32 %v1579, 2
    %vm1581 = vcmp.gt.s32.totalorder 0, %v1580
    %v1582 = vsel %vm1581, 0, %v1580
    %v1583 = vsub.s32 32, %v1582
    %v1584 = vshll.u32 %v1575, %v1582
    %v1585 = vshrl.u32 %v1567, %v1583
    %v1586 = vor.u32 %v1584, %v1585
    %v1587 = vsub.s32 4294967266, %v1582
    %v1588 = vadd.s32 %v1587, 127
    %v1589 = vshll.u32 %v1588, 23
    %v1590 = vor.u32 4788187, %v1589
    %v1591 = vand.u32 2147483647, %v1590
    %v1593 = vcvt.s32.f32 %v1586
    %v1594 = vmul.f32 %v1593, %v1591
    %v1595 = vxor.u32 %v1594, 2147483648
    %v1596 = vsel %vm1513, %v1595, %v1594
    %v1597 = vsub.s32 4, %v1573
    %v1598 = vsel %vm1513, %v1597, %v1573
    %v1599 = vsel %vm1512, %v67, %v1596
    %v1600 = vsel %vm1512, 0, %v1598
    %v1601 = vcosq.f32.pop %v1599
    %v1602 = vsinq.f32.pop %v1599
    %vm1603 = vweird.f32 %v67
    %v1604 = vand.u32 %v1600, 3
    %vm1605 = vcmp.lt.s32.totalorder %v1604, 2
    %vm1606 = vcmp.eq.s32.totalorder %v1604, 0
    %v1607 = vxor.u32 %v1602, 2147483648
    %v1608 = vsel %vm1606, %v1601, %v1607
    %vm1609 = vcmp.eq.s32.totalorder %v1604, 2
    %v1610 = vxor.u32 %v1601, 2147483648
    %v1611 = vsel %vm1609, %v1610, %v1602
    %v1612 = vsel %vm1605, %v1608, %v1611
    %v1613 = vsel %vm1603, nan, %v1612
    %v1614 = vand.u32 2147483647, %v68
    %vm1615 = vcmp.le.f32.partialorder %v1614, 0.7853982
    %vm1616 = vcmp.lt.s32.totalorder %v68, 0
    %v1617 = vand.u32 %v68, 2139095040
    %v1618 = vshrl.u32 %v1617, 23
    %v1619 = vsub.s32 %v1618, 127
    %v1620 = vand.u32 2147483647, %v68
    %v1621 = vand.u32 %v1620, 8388607
    %v1622 = vor.u32 %v1621, 8388608
    %v1623 = vsub.s32 0, %v1622
    %v1624 = vadd.s32 %v1619, 1
    %vm1625 = vcmp.gt.s32.totalorder %v1624, 0
    %v1626 = vsel %vm1625, %v1624, 0
    %v1627 = vshrl.u32 %v1626, 5
    %v1628 = vand.u32 %v1626, 31
    %v1629 = vsub.s32 32, %v1628
    %v1630 = vshrl.u32 683565275, %v1629
    %v1631 = vshll.u32 683565275, %v1628
    %v1632 = vshrl.u32 2475754826, %v1629
    %v1633 = vor.u32 %v1631, %v1632
    %v1634 = vshll.u32 2475754826, %v1628
    %v1635 = vshrl.u32 2131351028, %v1629
    %v1636 = vor.u32 %v1634, %v1635
    %v1637 = vshll.u32 2131351028, %v1628
    %v1638 = vshrl.u32 2102212464, %v1629
    %v1639 = vor.u32 %v1637, %v1638
    %v1640 = vshll.u32 2102212464, %v1628
    %v1641 = vshrl.u32 920167782, %v1629
    %v1642 = vor.u32 %v1640, %v1641
    %v1643 = vshll.u32 920167782, %v1628
    %v1644 = vshrl.u32 1326507024, %v1629
    %v1645 = vor.u32 %v1643, %v1644
    %vm1646 = vcmp.lt.s32.totalorder %v1627, 1
    %vm1647 = vcmp.lt.s32.totalorder %v1627, 2
    %vm1648 = vcmp.lt.s32.totalorder %v1627, 3
    %vm1649 = vcmp.lt.s32.totalorder %v1627, 4
    %v1650 = vsel %vm1646, %v1630, %v1633
    %v1651 = vsel %vm1649, %v1639, 2102212464
    %v1652 = vsel %vm1648, %v1636, %v1651
    %v1653 = vsel %vm1647, %v1650, %v1652
    %v1654 = vsel %vm1646, %v1633, %v1636
    %v1655 = vsel %vm1649, %v1642, 920167782
    %v1656 = vsel %vm1648, %v1639, %v1655
    %v1657 = vsel %vm1647, %v1654, %v1656
    %v1658 = vsel %vm1646, %v1636, %v1639
    %v1659 = vsel %vm1649, %v1645, 1326507024
    %v1660 = vsel %vm1648, %v1642, %v1659
    %v1661 = vsel %vm1647, %v1658, %v1660
    %v1662 = vshll.u32 %v1622, 8
    %v1663 = vmul.u32.u64.compose %v1662, %v1661
    %v1664 = vextract.low.u32 %v1663
    %v1665 = vextract.high.u32 %v1663
    %v1666 = vmul.u32.u64.compose %v1662, %v1657
    %v1667 = vextract.low.u32 %v1666
    %v1668 = vextract.high.u32 %v1666
    %v1669 = vmul.u32 %v1662, %v1653
    %v1670 = vadd.s32 %v1665, %v1667
    %vm1671 = vc.u32 %v1665, %v1667
    %v1672 = vadd.s32 %v1668, 1
    %v1673 = vsel %vm1671, %v1672, %v1668
    %v1674 = vadd.s32 %v1669, %v1673
    %v1675 = vadd.s32 %v1674, 536870912
    %v1676 = vshrl.u32 %v1675, 30
    %v1677 = vshll.u32 %v1676, 30
    %v1678 = vsub.s32 %v1674, %v1677
    %vm1679 = vcmp.lt.s32.totalorder %v1678, 0
    %v1680 = vsub.s32 0, %v1678
    %v1681 = vsel %vm1679, %v1680, %v1678
    %v1682 = vclz %v1681
    %v1683 = vsub.s32 %v1682, 2
    %vm1684 = vcmp.gt.s32.totalorder 0, %v1683
    %v1685 = vsel %vm1684, 0, %v1683
    %v1686 = vsub.s32 32, %v1685
    %v1687 = vshll.u32 %v1678, %v1685
    %v1688 = vshrl.u32 %v1670, %v1686
    %v1689 = vor.u32 %v1687, %v1688
    %v1690 = vsub.s32 4294967266, %v1685
    %v1691 = vadd.s32 %v1690, 127
    %v1692 = vshll.u32 %v1691, 23
    %v1693 = vor.u32 4788187, %v1692
    %v1694 = vand.u32 2147483647, %v1693
    %v1696 = vcvt.s32.f32 %v1689
    %v1697 = vmul.f32 %v1696, %v1694
    %v1698 = vxor.u32 %v1697, 2147483648
    %v1699 = vsel %vm1616, %v1698, %v1697
    %v1700 = vsub.s32 4, %v1676
    %v1701 = vsel %vm1616, %v1700, %v1676
    %v1702 = vsel %vm1615, %v68, %v1699
    %v1703 = vsel %vm1615, 0, %v1701
    %v1704 = vcosq.f32.pop %v1702
    %v1705 = vsinq.f32.pop %v1702
    %vm1706 = vweird.f32 %v68
    %v1707 = vand.u32 %v1703, 3
    %vm1708 = vcmp.lt.s32.totalorder %v1707, 2
    %vm1709 = vcmp.eq.s32.totalorder %v1707, 0
    %v1710 = vxor.u32 %v1705, 2147483648
    %v1711 = vsel %vm1709, %v1704, %v1710
    %vm1712 = vcmp.eq.s32.totalorder %v1707, 2
    %v1713 = vxor.u32 %v1704, 2147483648
    %v1714 = vsel %vm1712, %v1713, %v1705
    %v1715 = vsel %vm1708, %v1711, %v1714
    %v1716 = vsel %vm1706, nan, %v1715
    %v1717 = vand.u32 2147483647, %v53
    %vm1718 = vcmp.le.f32.partialorder %v1717, 0.7853982
    %vm1719 = vcmp.lt.s32.totalorder %v53, 0
    %v1720 = vand.u32 %v53, 2139095040
    %v1721 = vshrl.u32 %v1720, 23
    %v1722 = vsub.s32 %v1721, 127
    %v1723 = vand.u32 2147483647, %v53
    %v1724 = vand.u32 %v1723, 8388607
    %v1725 = vor.u32 %v1724, 8388608
    %v1726 = vsub.s32 0, %v1725
    %v1727 = vadd.s32 %v1722, 1
    %vm1728 = vcmp.gt.s32.totalorder %v1727, 0
    %v1729 = vsel %vm1728, %v1727, 0
    %v1730 = vshrl.u32 %v1729, 5
    %v1731 = vand.u32 %v1729, 31
    %v1732 = vsub.s32 32, %v1731
    %v1733 = vshrl.u32 683565275, %v1732
    %v1734 = vshll.u32 683565275, %v1731
    %v1735 = vshrl.u32 2475754826, %v1732
    %v1736 = vor.u32 %v1734, %v1735
    %v1737 = vshll.u32 2475754826, %v1731
    %v1738 = vshrl.u32 2131351028, %v1732
    %v1739 = vor.u32 %v1737, %v1738
    %v1740 = vshll.u32 2131351028, %v1731
    %v1741 = vshrl.u32 2102212464, %v1732
    %v1742 = vor.u32 %v1740, %v1741
    %v1743 = vshll.u32 2102212464, %v1731
    %v1744 = vshrl.u32 920167782, %v1732
    %v1745 = vor.u32 %v1743, %v1744
    %v1746 = vshll.u32 920167782, %v1731
    %v1747 = vshrl.u32 1326507024, %v1732
    %v1748 = vor.u32 %v1746, %v1747
    %vm1749 = vcmp.lt.s32.totalorder %v1730, 1
    %vm1750 = vcmp.lt.s32.totalorder %v1730, 2
    %vm1751 = vcmp.lt.s32.totalorder %v1730, 3
    %vm1752 = vcmp.lt.s32.totalorder %v1730, 4
    %v1753 = vsel %vm1749, %v1733, %v1736
    %v1754 = vsel %vm1752, %v1742, 2102212464
    %v1755 = vsel %vm1751, %v1739, %v1754
    %v1756 = vsel %vm1750, %v1753, %v1755
    %v1757 = vsel %vm1749, %v1736, %v1739
    %v1758 = vsel %vm1752, %v1745, 920167782
    %v1759 = vsel %vm1751, %v1742, %v1758
    %v1760 = vsel %vm1750, %v1757, %v1759
    %v1761 = vsel %vm1749, %v1739, %v1742
    %v1762 = vsel %vm1752, %v1748, 1326507024
    %v1763 = vsel %vm1751, %v1745, %v1762
    %v1764 = vsel %vm1750, %v1761, %v1763
    %v1765 = vshll.u32 %v1725, 8
    %v1766 = vmul.u32.u64.compose %v1765, %v1764
    %v1767 = vextract.low.u32 %v1766
    %v1768 = vextract.high.u32 %v1766
    %v1769 = vmul.u32.u64.compose %v1765, %v1760
    %v1770 = vextract.low.u32 %v1769
    %v1771 = vextract.high.u32 %v1769
    %v1772 = vmul.u32 %v1765, %v1756
    %v1773 = vadd.s32 %v1768, %v1770
    %vm1774 = vc.u32 %v1768, %v1770
    %v1775 = vadd.s32 %v1771, 1
    %v1776 = vsel %vm1774, %v1775, %v1771
    %v1777 = vadd.s32 %v1772, %v1776
    %v1778 = vadd.s32 %v1777, 536870912
    %v1779 = vshrl.u32 %v1778, 30
    %v1780 = vshll.u32 %v1779, 30
    %v1781 = vsub.s32 %v1777, %v1780
    %vm1782 = vcmp.lt.s32.totalorder %v1781, 0
    %v1783 = vsub.s32 0, %v1781
    %v1784 = vsel %vm1782, %v1783, %v1781
    %v1785 = vclz %v1784
    %v1786 = vsub.s32 %v1785, 2
    %vm1787 = vcmp.gt.s32.totalorder 0, %v1786
    %v1788 = vsel %vm1787, 0, %v1786
    %v1789 = vsub.s32 32, %v1788
    %v1790 = vshll.u32 %v1781, %v1788
    %v1791 = vshrl.u32 %v1773, %v1789
    %v1792 = vor.u32 %v1790, %v1791
    %v1793 = vsub.s32 4294967266, %v1788
    %v1794 = vadd.s32 %v1793, 127
    %v1795 = vshll.u32 %v1794, 23
    %v1796 = vor.u32 4788187, %v1795
    %v1797 = vand.u32 2147483647, %v1796
    %v1799 = vcvt.s32.f32 %v1792
    %v1800 = vmul.f32 %v1799, %v1797
    %v1801 = vxor.u32 %v1800, 2147483648
    %v1802 = vsel %vm1719, %v1801, %v1800
    %v1803 = vsub.s32 4, %v1779
    %v1804 = vsel %vm1719, %v1803, %v1779
    %v1805 = vsel %vm1718, %v53, %v1802
    %v1806 = vsel %vm1718, 0, %v1804
    %v1807 = vcosq.f32.pop %v1805
    %v1808 = vsinq.f32.pop %v1805
    %vm1809 = vweird.f32 %v53
    %v1810 = vadd.s32 %v1806, 3
    %v1811 = vand.u32 %v1810, 3
    %vm1812 = vcmp.lt.s32.totalorder %v1811, 2
    %vm1813 = vcmp.eq.s32.totalorder %v1811, 0
    %v1814 = vxor.u32 %v1808, 2147483648
    %v1815 = vsel %vm1813, %v1807, %v1814
    %vm1816 = vcmp.eq.s32.totalorder %v1811, 2
    %v1817 = vxor.u32 %v1807, 2147483648
    %v1818 = vsel %vm1816, %v1817, %v1808
    %v1819 = vsel %vm1812, %v1815, %v1818
    %v1820 = vsel %vm1809, nan, %v1819
    %v1821 = vand.u32 2147483647, %v54
    %vm1822 = vcmp.le.f32.partialorder %v1821, 0.7853982
    %vm1823 = vcmp.lt.s32.totalorder %v54, 0
    %v1824 = vand.u32 %v54, 2139095040
    %v1825 = vshrl.u32 %v1824, 23
    %v1826 = vsub.s32 %v1825, 127
    %v1827 = vand.u32 2147483647, %v54
    %v1828 = vand.u32 %v1827, 8388607
    %v1829 = vor.u32 %v1828, 8388608
    %v1830 = vsub.s32 0, %v1829
    %v1831 = vadd.s32 %v1826, 1
    %vm1832 = vcmp.gt.s32.totalorder %v1831, 0
    %v1833 = vsel %vm1832, %v1831, 0
    %v1834 = vshrl.u32 %v1833, 5
    %v1835 = vand.u32 %v1833, 31
    %v1836 = vsub.s32 32, %v1835
    %v1837 = vshrl.u32 683565275, %v1836
    %v1838 = vshll.u32 683565275, %v1835
    %v1839 = vshrl.u32 2475754826, %v1836
    %v1840 = vor.u32 %v1838, %v1839
    %v1841 = vshll.u32 2475754826, %v1835
    %v1842 = vshrl.u32 2131351028, %v1836
    %v1843 = vor.u32 %v1841, %v1842
    %v1844 = vshll.u32 2131351028, %v1835
    %v1845 = vshrl.u32 2102212464, %v1836
    %v1846 = vor.u32 %v1844, %v1845
    %v1847 = vshll.u32 2102212464, %v1835
    %v1848 = vshrl.u32 920167782, %v1836
    %v1849 = vor.u32 %v1847, %v1848
    %v1850 = vshll.u32 920167782, %v1835
    %v1851 = vshrl.u32 1326507024, %v1836
    %v1852 = vor.u32 %v1850, %v1851
    %vm1853 = vcmp.lt.s32.totalorder %v1834, 1
    %vm1854 = vcmp.lt.s32.totalorder %v1834, 2
    %vm1855 = vcmp.lt.s32.totalorder %v1834, 3
    %vm1856 = vcmp.lt.s32.totalorder %v1834, 4
    %v1857 = vsel %vm1853, %v1837, %v1840
    %v1858 = vsel %vm1856, %v1846, 2102212464
    %v1859 = vsel %vm1855, %v1843, %v1858
    %v1860 = vsel %vm1854, %v1857, %v1859
    %v1861 = vsel %vm1853, %v1840, %v1843
    %v1862 = vsel %vm1856, %v1849, 920167782
    %v1863 = vsel %vm1855, %v1846, %v1862
    %v1864 = vsel %vm1854, %v1861, %v1863
    %v1865 = vsel %vm1853, %v1843, %v1846
    %v1866 = vsel %vm1856, %v1852, 1326507024
    %v1867 = vsel %vm1855, %v1849, %v1866
    %v1868 = vsel %vm1854, %v1865, %v1867
    %v1869 = vshll.u32 %v1829, 8
    %v1870 = vmul.u32.u64.compose %v1869, %v1868
    %v1871 = vextract.low.u32 %v1870
    %v1872 = vextract.high.u32 %v1870
    %v1873 = vmul.u32.u64.compose %v1869, %v1864
    %v1874 = vextract.low.u32 %v1873
    %v1875 = vextract.high.u32 %v1873
    %v1876 = vmul.u32 %v1869, %v1860
    %v1877 = vadd.s32 %v1872, %v1874
    %vm1878 = vc.u32 %v1872, %v1874
    %v1879 = vadd.s32 %v1875, 1
    %v1880 = vsel %vm1878, %v1879, %v1875
    %v1881 = vadd.s32 %v1876, %v1880
    %v1882 = vadd.s32 %v1881, 536870912
    %v1883 = vshrl.u32 %v1882, 30
    %v1884 = vshll.u32 %v1883, 30
    %v1885 = vsub.s32 %v1881, %v1884
    %vm1886 = vcmp.lt.s32.totalorder %v1885, 0
    %v1887 = vsub.s32 0, %v1885
    %v1888 = vsel %vm1886, %v1887, %v1885
    %v1889 = vclz %v1888
    %v1890 = vsub.s32 %v1889, 2
    %vm1891 = vcmp.gt.s32.totalorder 0, %v1890
    %v1892 = vsel %vm1891, 0, %v1890
    %v1893 = vsub.s32 32, %v1892
    %v1894 = vshll.u32 %v1885, %v1892
    %v1895 = vshrl.u32 %v1877, %v1893
    %v1896 = vor.u32 %v1894, %v1895
    %v1897 = vsub.s32 4294967266, %v1892
    %v1898 = vadd.s32 %v1897, 127
    %v1899 = vshll.u32 %v1898, 23
    %v1900 = vor.u32 4788187, %v1899
    %v1901 = vand.u32 2147483647, %v1900
    %v1903 = vcvt.s32.f32 %v1896
    %v1904 = vmul.f32 %v1903, %v1901
    %v1905 = vxor.u32 %v1904, 2147483648
    %v1906 = vsel %vm1823, %v1905, %v1904
    %v1907 = vsub.s32 4, %v1883
    %v1908 = vsel %vm1823, %v1907, %v1883
    %v1909 = vsel %vm1822, %v54, %v1906
    %v1910 = vsel %vm1822, 0, %v1908
    %v1911 = vcosq.f32.pop %v1909
    %v1912 = vsinq.f32.pop %v1909
    %vm1913 = vweird.f32 %v54
    %v1914 = vadd.s32 %v1910, 3
    %v1915 = vand.u32 %v1914, 3
    %vm1916 = vcmp.lt.s32.totalorder %v1915, 2
    %vm1917 = vcmp.eq.s32.totalorder %v1915, 0
    %v1918 = vxor.u32 %v1912, 2147483648
    %v1919 = vsel %vm1917, %v1911, %v1918
    %vm1920 = vcmp.eq.s32.totalorder %v1915, 2
    %v1921 = vxor.u32 %v1911, 2147483648
    %v1922 = vsel %vm1920, %v1921, %v1912
    %v1923 = vsel %vm1916, %v1919, %v1922
    %v1924 = vsel %vm1913, nan, %v1923
    %v1925 = vand.u32 2147483647, %v55
    %vm1926 = vcmp.le.f32.partialorder %v1925, 0.7853982
    %vm1927 = vcmp.lt.s32.totalorder %v55, 0
    %v1928 = vand.u32 %v55, 2139095040
    %v1929 = vshrl.u32 %v1928, 23
    %v1930 = vsub.s32 %v1929, 127
    %v1931 = vand.u32 2147483647, %v55
    %v1932 = vand.u32 %v1931, 8388607
    %v1933 = vor.u32 %v1932, 8388608
    %v1934 = vsub.s32 0, %v1933
    %v1935 = vadd.s32 %v1930, 1
    %vm1936 = vcmp.gt.s32.totalorder %v1935, 0
    %v1937 = vsel %vm1936, %v1935, 0
    %v1938 = vshrl.u32 %v1937, 5
    %v1939 = vand.u32 %v1937, 31
    %v1940 = vsub.s32 32, %v1939
    %v1941 = vshrl.u32 683565275, %v1940
    %v1942 = vshll.u32 683565275, %v1939
    %v1943 = vshrl.u32 2475754826, %v1940
    %v1944 = vor.u32 %v1942, %v1943
    %v1945 = vshll.u32 2475754826, %v1939
    %v1946 = vshrl.u32 2131351028, %v1940
    %v1947 = vor.u32 %v1945, %v1946
    %v1948 = vshll.u32 2131351028, %v1939
    %v1949 = vshrl.u32 2102212464, %v1940
    %v1950 = vor.u32 %v1948, %v1949
    %v1951 = vshll.u32 2102212464, %v1939
    %v1952 = vshrl.u32 920167782, %v1940
    %v1953 = vor.u32 %v1951, %v1952
    %v1954 = vshll.u32 920167782, %v1939
    %v1955 = vshrl.u32 1326507024, %v1940
    %v1956 = vor.u32 %v1954, %v1955
    %vm1957 = vcmp.lt.s32.totalorder %v1938, 1
    %vm1958 = vcmp.lt.s32.totalorder %v1938, 2
    %vm1959 = vcmp.lt.s32.totalorder %v1938, 3
    %vm1960 = vcmp.lt.s32.totalorder %v1938, 4
    %v1961 = vsel %vm1957, %v1941, %v1944
    %v1962 = vsel %vm1960, %v1950, 2102212464
    %v1963 = vsel %vm1959, %v1947, %v1962
    %v1964 = vsel %vm1958, %v1961, %v1963
    %v1965 = vsel %vm1957, %v1944, %v1947
    %v1966 = vsel %vm1960, %v1953, 920167782
    %v1967 = vsel %vm1959, %v1950, %v1966
    %v1968 = vsel %vm1958, %v1965, %v1967
    %v1969 = vsel %vm1957, %v1947, %v1950
    %v1970 = vsel %vm1960, %v1956, 1326507024
    %v1971 = vsel %vm1959, %v1953, %v1970
    %v1972 = vsel %vm1958, %v1969, %v1971
    %v1973 = vshll.u32 %v1933, 8
    %v1974 = vmul.u32.u64.compose %v1973, %v1972
    %v1975 = vextract.low.u32 %v1974
    %v1976 = vextract.high.u32 %v1974
    %v1977 = vmul.u32.u64.compose %v1973, %v1968
    %v1978 = vextract.low.u32 %v1977
    %v1979 = vextract.high.u32 %v1977
    %v1980 = vmul.u32 %v1973, %v1964
    %v1981 = vadd.s32 %v1976, %v1978
    %vm1982 = vc.u32 %v1976, %v1978
    %v1983 = vadd.s32 %v1979, 1
    %v1984 = vsel %vm1982, %v1983, %v1979
    %v1985 = vadd.s32 %v1980, %v1984
    %v1986 = vadd.s32 %v1985, 536870912
    %v1987 = vshrl.u32 %v1986, 30
    %v1988 = vshll.u32 %v1987, 30
    %v1989 = vsub.s32 %v1985, %v1988
    %vm1990 = vcmp.lt.s32.totalorder %v1989, 0
    %v1991 = vsub.s32 0, %v1989
    %v1992 = vsel %vm1990, %v1991, %v1989
    %v1993 = vclz %v1992
    %v1994 = vsub.s32 %v1993, 2
    %vm1995 = vcmp.gt.s32.totalorder 0, %v1994
    %v1996 = vsel %vm1995, 0, %v1994
    %v1997 = vsub.s32 32, %v1996
    %v1998 = vshll.u32 %v1989, %v1996
    %v1999 = vshrl.u32 %v1981, %v1997
    %v2000 = vor.u32 %v1998, %v1999
    %v2001 = vsub.s32 4294967266, %v1996
    %v2002 = vadd.s32 %v2001, 127
    %v2003 = vshll.u32 %v2002, 23
    %v2004 = vor.u32 4788187, %v2003
    %v2005 = vand.u32 2147483647, %v2004
    %v2007 = vcvt.s32.f32 %v2000
    %v2008 = vmul.f32 %v2007, %v2005
    %v2009 = vxor.u32 %v2008, 2147483648
    %v2010 = vsel %vm1927, %v2009, %v2008
    %v2011 = vsub.s32 4, %v1987
    %v2012 = vsel %vm1927, %v2011, %v1987
    %v2013 = vsel %vm1926, %v55, %v2010
    %v2014 = vsel %vm1926, 0, %v2012
    %v2015 = vcosq.f32.pop %v2013
    %v2016 = vsinq.f32.pop %v2013
    %vm2017 = vweird.f32 %v55
    %v2018 = vadd.s32 %v2014, 3
    %v2019 = vand.u32 %v2018, 3
    %vm2020 = vcmp.lt.s32.totalorder %v2019, 2
    %vm2021 = vcmp.eq.s32.totalorder %v2019, 0
    %v2022 = vxor.u32 %v2016, 2147483648
    %v2023 = vsel %vm2021, %v2015, %v2022
    %vm2024 = vcmp.eq.s32.totalorder %v2019, 2
    %v2025 = vxor.u32 %v2015, 2147483648
    %v2026 = vsel %vm2024, %v2025, %v2016
    %v2027 = vsel %vm2020, %v2023, %v2026
    %v2028 = vsel %vm2017, nan, %v2027
    %v2029 = vand.u32 2147483647, %v56
    %vm2030 = vcmp.le.f32.partialorder %v2029, 0.7853982
    %vm2031 = vcmp.lt.s32.totalorder %v56, 0
    %v2032 = vand.u32 %v56, 2139095040
    %v2033 = vshrl.u32 %v2032, 23
    %v2034 = vsub.s32 %v2033, 127
    %v2035 = vand.u32 2147483647, %v56
    %v2036 = vand.u32 %v2035, 8388607
    %v2037 = vor.u32 %v2036, 8388608
    %v2038 = vsub.s32 0, %v2037
    %v2039 = vadd.s32 %v2034, 1
    %vm2040 = vcmp.gt.s32.totalorder %v2039, 0
    %v2041 = vsel %vm2040, %v2039, 0
    %v2042 = vshrl.u32 %v2041, 5
    %v2043 = vand.u32 %v2041, 31
    %v2044 = vsub.s32 32, %v2043
    %v2045 = vshrl.u32 683565275, %v2044
    %v2046 = vshll.u32 683565275, %v2043
    %v2047 = vshrl.u32 2475754826, %v2044
    %v2048 = vor.u32 %v2046, %v2047
    %v2049 = vshll.u32 2475754826, %v2043
    %v2050 = vshrl.u32 2131351028, %v2044
    %v2051 = vor.u32 %v2049, %v2050
    %v2052 = vshll.u32 2131351028, %v2043
    %v2053 = vshrl.u32 2102212464, %v2044
    %v2054 = vor.u32 %v2052, %v2053
    %v2055 = vshll.u32 2102212464, %v2043
    %v2056 = vshrl.u32 920167782, %v2044
    %v2057 = vor.u32 %v2055, %v2056
    %v2058 = vshll.u32 920167782, %v2043
    %v2059 = vshrl.u32 1326507024, %v2044
    %v2060 = vor.u32 %v2058, %v2059
    %vm2061 = vcmp.lt.s32.totalorder %v2042, 1
    %vm2062 = vcmp.lt.s32.totalorder %v2042, 2
    %vm2063 = vcmp.lt.s32.totalorder %v2042, 3
    %vm2064 = vcmp.lt.s32.totalorder %v2042, 4
    %v2065 = vsel %vm2061, %v2045, %v2048
    %v2066 = vsel %vm2064, %v2054, 2102212464
    %v2067 = vsel %vm2063, %v2051, %v2066
    %v2068 = vsel %vm2062, %v2065, %v2067
    %v2069 = vsel %vm2061, %v2048, %v2051
    %v2070 = vsel %vm2064, %v2057, 920167782
    %v2071 = vsel %vm2063, %v2054, %v2070
    %v2072 = vsel %vm2062, %v2069, %v2071
    %v2073 = vsel %vm2061, %v2051, %v2054
    %v2074 = vsel %vm2064, %v2060, 1326507024
    %v2075 = vsel %vm2063, %v2057, %v2074
    %v2076 = vsel %vm2062, %v2073, %v2075
    %v2077 = vshll.u32 %v2037, 8
    %v2078 = vmul.u32.u64.compose %v2077, %v2076
    %v2079 = vextract.low.u32 %v2078
    %v2080 = vextract.high.u32 %v2078
    %v2081 = vmul.u32.u64.compose %v2077, %v2072
    %v2082 = vextract.low.u32 %v2081
    %v2083 = vextract.high.u32 %v2081
    %v2084 = vmul.u32 %v2077, %v2068
    %v2085 = vadd.s32 %v2080, %v2082
    %vm2086 = vc.u32 %v2080, %v2082
    %v2087 = vadd.s32 %v2083, 1
    %v2088 = vsel %vm2086, %v2087, %v2083
    %v2089 = vadd.s32 %v2084, %v2088
    %v2090 = vadd.s32 %v2089, 536870912
    %v2091 = vshrl.u32 %v2090, 30
    %v2092 = vshll.u32 %v2091, 30
    %v2093 = vsub.s32 %v2089, %v2092
    %vm2094 = vcmp.lt.s32.totalorder %v2093, 0
    %v2095 = vsub.s32 0, %v2093
    %v2096 = vsel %vm2094, %v2095, %v2093
    %v2097 = vclz %v2096
    %v2098 = vsub.s32 %v2097, 2
    %vm2099 = vcmp.gt.s32.totalorder 0, %v2098
    %v2100 = vsel %vm2099, 0, %v2098
    %v2101 = vsub.s32 32, %v2100
    %v2102 = vshll.u32 %v2093, %v2100
    %v2103 = vshrl.u32 %v2085, %v2101
    %v2104 = vor.u32 %v2102, %v2103
    %v2105 = vsub.s32 4294967266, %v2100
    %v2106 = vadd.s32 %v2105, 127
    %v2107 = vshll.u32 %v2106, 23
    %v2108 = vor.u32 4788187, %v2107
    %v2109 = vand.u32 2147483647, %v2108
    %v2111 = vcvt.s32.f32 %v2104
    %v2112 = vmul.f32 %v2111, %v2109
    %v2113 = vxor.u32 %v2112, 2147483648
    %v2114 = vsel %vm2031, %v2113, %v2112
    %v2115 = vsub.s32 4, %v2091
    %v2116 = vsel %vm2031, %v2115, %v2091
    %v2117 = vsel %vm2030, %v56, %v2114
    %v2118 = vsel %vm2030, 0, %v2116
    %v2119 = vcosq.f32.pop %v2117
    %v2120 = vsinq.f32.pop %v2117
    %vm2121 = vweird.f32 %v56
    %v2122 = vadd.s32 %v2118, 3
    %v2123 = vand.u32 %v2122, 3
    %vm2124 = vcmp.lt.s32.totalorder %v2123, 2
    %vm2125 = vcmp.eq.s32.totalorder %v2123, 0
    %v2126 = vxor.u32 %v2120, 2147483648
    %v2127 = vsel %vm2125, %v2119, %v2126
    %vm2128 = vcmp.eq.s32.totalorder %v2123, 2
    %v2129 = vxor.u32 %v2119, 2147483648
    %v2130 = vsel %vm2128, %v2129, %v2120
    %v2131 = vsel %vm2124, %v2127, %v2130
    %v2132 = vsel %vm2121, nan, %v2131
    %v2133 = vand.u32 2147483647, %v57
    %vm2134 = vcmp.le.f32.partialorder %v2133, 0.7853982
    %vm2135 = vcmp.lt.s32.totalorder %v57, 0
    %v2136 = vand.u32 %v57, 2139095040
    %v2137 = vshrl.u32 %v2136, 23
    %v2138 = vsub.s32 %v2137, 127
    %v2139 = vand.u32 2147483647, %v57
    %v2140 = vand.u32 %v2139, 8388607
    %v2141 = vor.u32 %v2140, 8388608
    %v2142 = vsub.s32 0, %v2141
    %v2143 = vadd.s32 %v2138, 1
    %vm2144 = vcmp.gt.s32.totalorder %v2143, 0
    %v2145 = vsel %vm2144, %v2143, 0
    %v2146 = vshrl.u32 %v2145, 5
    %v2147 = vand.u32 %v2145, 31
    %v2148 = vsub.s32 32, %v2147
    %v2149 = vshrl.u32 683565275, %v2148
    %v2150 = vshll.u32 683565275, %v2147
    %v2151 = vshrl.u32 2475754826, %v2148
    %v2152 = vor.u32 %v2150, %v2151
    %v2153 = vshll.u32 2475754826, %v2147
    %v2154 = vshrl.u32 2131351028, %v2148
    %v2155 = vor.u32 %v2153, %v2154
    %v2156 = vshll.u32 2131351028, %v2147
    %v2157 = vshrl.u32 2102212464, %v2148
    %v2158 = vor.u32 %v2156, %v2157
    %v2159 = vshll.u32 2102212464, %v2147
    %v2160 = vshrl.u32 920167782, %v2148
    %v2161 = vor.u32 %v2159, %v2160
    %v2162 = vshll.u32 920167782, %v2147
    %v2163 = vshrl.u32 1326507024, %v2148
    %v2164 = vor.u32 %v2162, %v2163
    %vm2165 = vcmp.lt.s32.totalorder %v2146, 1
    %vm2166 = vcmp.lt.s32.totalorder %v2146, 2
    %vm2167 = vcmp.lt.s32.totalorder %v2146, 3
    %vm2168 = vcmp.lt.s32.totalorder %v2146, 4
    %v2169 = vsel %vm2165, %v2149, %v2152
    %v2170 = vsel %vm2168, %v2158, 2102212464
    %v2171 = vsel %vm2167, %v2155, %v2170
    %v2172 = vsel %vm2166, %v2169, %v2171
    %v2173 = vsel %vm2165, %v2152, %v2155
    %v2174 = vsel %vm2168, %v2161, 920167782
    %v2175 = vsel %vm2167, %v2158, %v2174
    %v2176 = vsel %vm2166, %v2173, %v2175
    %v2177 = vsel %vm2165, %v2155, %v2158
    %v2178 = vsel %vm2168, %v2164, 1326507024
    %v2179 = vsel %vm2167, %v2161, %v2178
    %v2180 = vsel %vm2166, %v2177, %v2179
    %v2181 = vshll.u32 %v2141, 8
    %v2182 = vmul.u32.u64.compose %v2181, %v2180
    %v2183 = vextract.low.u32 %v2182
    %v2184 = vextract.high.u32 %v2182
    %v2185 = vmul.u32.u64.compose %v2181, %v2176
    %v2186 = vextract.low.u32 %v2185
    %v2187 = vextract.high.u32 %v2185
    %v2188 = vmul.u32 %v2181, %v2172
    %v2189 = vadd.s32 %v2184, %v2186
    %vm2190 = vc.u32 %v2184, %v2186
    %v2191 = vadd.s32 %v2187, 1
    %v2192 = vsel %vm2190, %v2191, %v2187
    %v2193 = vadd.s32 %v2188, %v2192
    %v2194 = vadd.s32 %v2193, 536870912
    %v2195 = vshrl.u32 %v2194, 30
    %v2196 = vshll.u32 %v2195, 30
    %v2197 = vsub.s32 %v2193, %v2196
    %vm2198 = vcmp.lt.s32.totalorder %v2197, 0
    %v2199 = vsub.s32 0, %v2197
    %v2200 = vsel %vm2198, %v2199, %v2197
    %v2201 = vclz %v2200
    %v2202 = vsub.s32 %v2201, 2
    %vm2203 = vcmp.gt.s32.totalorder 0, %v2202
    %v2204 = vsel %vm2203, 0, %v2202
    %v2205 = vsub.s32 32, %v2204
    %v2206 = vshll.u32 %v2197, %v2204
    %v2207 = vshrl.u32 %v2189, %v2205
    %v2208 = vor.u32 %v2206, %v2207
    %v2209 = vsub.s32 4294967266, %v2204
    %v2210 = vadd.s32 %v2209, 127
    %v2211 = vshll.u32 %v2210, 23
    %v2212 = vor.u32 4788187, %v2211
    %v2213 = vand.u32 2147483647, %v2212
    %v2215 = vcvt.s32.f32 %v2208
    %v2216 = vmul.f32 %v2215, %v2213
    %v2217 = vxor.u32 %v2216, 2147483648
    %v2218 = vsel %vm2135, %v2217, %v2216
    %v2219 = vsub.s32 4, %v2195
    %v2220 = vsel %vm2135, %v2219, %v2195
    %v2221 = vsel %vm2134, %v57, %v2218
    %v2222 = vsel %vm2134, 0, %v2220
    %v2223 = vcosq.f32.pop %v2221
    %v2224 = vsinq.f32.pop %v2221
    %vm2225 = vweird.f32 %v57
    %v2226 = vadd.s32 %v2222, 3
    %v2227 = vand.u32 %v2226, 3
    %vm2228 = vcmp.lt.s32.totalorder %v2227, 2
    %vm2229 = vcmp.eq.s32.totalorder %v2227, 0
    %v2230 = vxor.u32 %v2224, 2147483648
    %v2231 = vsel %vm2229, %v2223, %v2230
    %vm2232 = vcmp.eq.s32.totalorder %v2227, 2
    %v2233 = vxor.u32 %v2223, 2147483648
    %v2234 = vsel %vm2232, %v2233, %v2224
    %v2235 = vsel %vm2228, %v2231, %v2234
    %v2236 = vsel %vm2225, nan, %v2235
    %v2237 = vand.u32 2147483647, %v58
    %vm2238 = vcmp.le.f32.partialorder %v2237, 0.7853982
    %vm2239 = vcmp.lt.s32.totalorder %v58, 0
    %v2240 = vand.u32 %v58, 2139095040
    %v2241 = vshrl.u32 %v2240, 23
    %v2242 = vsub.s32 %v2241, 127
    %v2243 = vand.u32 2147483647, %v58
    %v2244 = vand.u32 %v2243, 8388607
    %v2245 = vor.u32 %v2244, 8388608
    %v2246 = vsub.s32 0, %v2245
    %v2247 = vadd.s32 %v2242, 1
    %vm2248 = vcmp.gt.s32.totalorder %v2247, 0
    %v2249 = vsel %vm2248, %v2247, 0
    %v2250 = vshrl.u32 %v2249, 5
    %v2251 = vand.u32 %v2249, 31
    %v2252 = vsub.s32 32, %v2251
    %v2253 = vshrl.u32 683565275, %v2252
    %v2254 = vshll.u32 683565275, %v2251
    %v2255 = vshrl.u32 2475754826, %v2252
    %v2256 = vor.u32 %v2254, %v2255
    %v2257 = vshll.u32 2475754826, %v2251
    %v2258 = vshrl.u32 2131351028, %v2252
    %v2259 = vor.u32 %v2257, %v2258
    %v2260 = vshll.u32 2131351028, %v2251
    %v2261 = vshrl.u32 2102212464, %v2252
    %v2262 = vor.u32 %v2260, %v2261
    %v2263 = vshll.u32 2102212464, %v2251
    %v2264 = vshrl.u32 920167782, %v2252
    %v2265 = vor.u32 %v2263, %v2264
    %v2266 = vshll.u32 920167782, %v2251
    %v2267 = vshrl.u32 1326507024, %v2252
    %v2268 = vor.u32 %v2266, %v2267
    %vm2269 = vcmp.lt.s32.totalorder %v2250, 1
    %vm2270 = vcmp.lt.s32.totalorder %v2250, 2
    %vm2271 = vcmp.lt.s32.totalorder %v2250, 3
    %vm2272 = vcmp.lt.s32.totalorder %v2250, 4
    %v2273 = vsel %vm2269, %v2253, %v2256
    %v2274 = vsel %vm2272, %v2262, 2102212464
    %v2275 = vsel %vm2271, %v2259, %v2274
    %v2276 = vsel %vm2270, %v2273, %v2275
    %v2277 = vsel %vm2269, %v2256, %v2259
    %v2278 = vsel %vm2272, %v2265, 920167782
    %v2279 = vsel %vm2271, %v2262, %v2278
    %v2280 = vsel %vm2270, %v2277, %v2279
    %v2281 = vsel %vm2269, %v2259, %v2262
    %v2282 = vsel %vm2272, %v2268, 1326507024
    %v2283 = vsel %vm2271, %v2265, %v2282
    %v2284 = vsel %vm2270, %v2281, %v2283
    %v2285 = vshll.u32 %v2245, 8
    %v2286 = vmul.u32.u64.compose %v2285, %v2284
    %v2287 = vextract.low.u32 %v2286
    %v2288 = vextract.high.u32 %v2286
    %v2289 = vmul.u32.u64.compose %v2285, %v2280
    %v2290 = vextract.low.u32 %v2289
    %v2291 = vextract.high.u32 %v2289
    %v2292 = vmul.u32 %v2285, %v2276
    %v2293 = vadd.s32 %v2288, %v2290
    %vm2294 = vc.u32 %v2288, %v2290
    %v2295 = vadd.s32 %v2291, 1
    %v2296 = vsel %vm2294, %v2295, %v2291
    %v2297 = vadd.s32 %v2292, %v2296
    %v2298 = vadd.s32 %v2297, 536870912
    %v2299 = vshrl.u32 %v2298, 30
    %v2300 = vshll.u32 %v2299, 30
    %v2301 = vsub.s32 %v2297, %v2300
    %vm2302 = vcmp.lt.s32.totalorder %v2301, 0
    %v2303 = vsub.s32 0, %v2301
    %v2304 = vsel %vm2302, %v2303, %v2301
    %v2305 = vclz %v2304
    %v2306 = vsub.s32 %v2305, 2
    %vm2307 = vcmp.gt.s32.totalorder 0, %v2306
    %v2308 = vsel %vm2307, 0, %v2306
    %v2309 = vsub.s32 32, %v2308
    %v2310 = vshll.u32 %v2301, %v2308
    %v2311 = vshrl.u32 %v2293, %v2309
    %v2312 = vor.u32 %v2310, %v2311
    %v2313 = vsub.s32 4294967266, %v2308
    %v2314 = vadd.s32 %v2313, 127
    %v2315 = vshll.u32 %v2314, 23
    %v2316 = vor.u32 4788187, %v2315
    %v2317 = vand.u32 2147483647, %v2316
    %v2319 = vcvt.s32.f32 %v2312
    %v2320 = vmul.f32 %v2319, %v2317
    %v2321 = vxor.u32 %v2320, 2147483648
    %v2322 = vsel %vm2239, %v2321, %v2320
    %v2323 = vsub.s32 4, %v2299
    %v2324 = vsel %vm2239, %v2323, %v2299
    %v2325 = vsel %vm2238, %v58, %v2322
    %v2326 = vsel %vm2238, 0, %v2324
    %v2327 = vcosq.f32.pop %v2325
    %v2328 = vsinq.f32.pop %v2325
    %vm2329 = vweird.f32 %v58
    %v2330 = vadd.s32 %v2326, 3
    %v2331 = vand.u32 %v2330, 3
    %vm2332 = vcmp.lt.s32.totalorder %v2331, 2
    %vm2333 = vcmp.eq.s32.totalorder %v2331, 0
    %v2334 = vxor.u32 %v2328, 2147483648
    %v2335 = vsel %vm2333, %v2327, %v2334
    %vm2336 = vcmp.eq.s32.totalorder %v2331, 2
    %v2337 = vxor.u32 %v2327, 2147483648
    %v2338 = vsel %vm2336, %v2337, %v2328
    %v2339 = vsel %vm2332, %v2335, %v2338
    %v2340 = vsel %vm2329, nan, %v2339
    %v2341 = vand.u32 2147483647, %v59
    %vm2342 = vcmp.le.f32.partialorder %v2341, 0.7853982
    %vm2343 = vcmp.lt.s32.totalorder %v59, 0
    %v2344 = vand.u32 %v59, 2139095040
    %v2345 = vshrl.u32 %v2344, 23
    %v2346 = vsub.s32 %v2345, 127
    %v2347 = vand.u32 2147483647, %v59
    %v2348 = vand.u32 %v2347, 8388607
    %v2349 = vor.u32 %v2348, 8388608
    %v2350 = vsub.s32 0, %v2349
    %v2351 = vadd.s32 %v2346, 1
    %vm2352 = vcmp.gt.s32.totalorder %v2351, 0
    %v2353 = vsel %vm2352, %v2351, 0
    %v2354 = vshrl.u32 %v2353, 5
    %v2355 = vand.u32 %v2353, 31
    %v2356 = vsub.s32 32, %v2355
    %v2357 = vshrl.u32 683565275, %v2356
    %v2358 = vshll.u32 683565275, %v2355
    %v2359 = vshrl.u32 2475754826, %v2356
    %v2360 = vor.u32 %v2358, %v2359
    %v2361 = vshll.u32 2475754826, %v2355
    %v2362 = vshrl.u32 2131351028, %v2356
    %v2363 = vor.u32 %v2361, %v2362
    %v2364 = vshll.u32 2131351028, %v2355
    %v2365 = vshrl.u32 2102212464, %v2356
    %v2366 = vor.u32 %v2364, %v2365
    %v2367 = vshll.u32 2102212464, %v2355
    %v2368 = vshrl.u32 920167782, %v2356
    %v2369 = vor.u32 %v2367, %v2368
    %v2370 = vshll.u32 920167782, %v2355
    %v2371 = vshrl.u32 1326507024, %v2356
    %v2372 = vor.u32 %v2370, %v2371
    %vm2373 = vcmp.lt.s32.totalorder %v2354, 1
    %vm2374 = vcmp.lt.s32.totalorder %v2354, 2
    %vm2375 = vcmp.lt.s32.totalorder %v2354, 3
    %vm2376 = vcmp.lt.s32.totalorder %v2354, 4
    %v2377 = vsel %vm2373, %v2357, %v2360
    %v2378 = vsel %vm2376, %v2366, 2102212464
    %v2379 = vsel %vm2375, %v2363, %v2378
    %v2380 = vsel %vm2374, %v2377, %v2379
    %v2381 = vsel %vm2373, %v2360, %v2363
    %v2382 = vsel %vm2376, %v2369, 920167782
    %v2383 = vsel %vm2375, %v2366, %v2382
    %v2384 = vsel %vm2374, %v2381, %v2383
    %v2385 = vsel %vm2373, %v2363, %v2366
    %v2386 = vsel %vm2376, %v2372, 1326507024
    %v2387 = vsel %vm2375, %v2369, %v2386
    %v2388 = vsel %vm2374, %v2385, %v2387
    %v2389 = vshll.u32 %v2349, 8
    %v2390 = vmul.u32.u64.compose %v2389, %v2388
    %v2391 = vextract.low.u32 %v2390
    %v2392 = vextract.high.u32 %v2390
    %v2393 = vmul.u32.u64.compose %v2389, %v2384
    %v2394 = vextract.low.u32 %v2393
    %v2395 = vextract.high.u32 %v2393
    %v2396 = vmul.u32 %v2389, %v2380
    %v2397 = vadd.s32 %v2392, %v2394
    %vm2398 = vc.u32 %v2392, %v2394
    %v2399 = vadd.s32 %v2395, 1
    %v2400 = vsel %vm2398, %v2399, %v2395
    %v2401 = vadd.s32 %v2396, %v2400
    %v2402 = vadd.s32 %v2401, 536870912
    %v2403 = vshrl.u32 %v2402, 30
    %v2404 = vshll.u32 %v2403, 30
    %v2405 = vsub.s32 %v2401, %v2404
    %vm2406 = vcmp.lt.s32.totalorder %v2405, 0
    %v2407 = vsub.s32 0, %v2405
    %v2408 = vsel %vm2406, %v2407, %v2405
    %v2409 = vclz %v2408
    %v2410 = vsub.s32 %v2409, 2
    %vm2411 = vcmp.gt.s32.totalorder 0, %v2410
    %v2412 = vsel %vm2411, 0, %v2410
    %v2413 = vsub.s32 32, %v2412
    %v2414 = vshll.u32 %v2405, %v2412
    %v2415 = vshrl.u32 %v2397, %v2413
    %v2416 = vor.u32 %v2414, %v2415
    %v2417 = vsub.s32 4294967266, %v2412
    %v2418 = vadd.s32 %v2417, 127
    %v2419 = vshll.u32 %v2418, 23
    %v2420 = vor.u32 4788187, %v2419
    %v2421 = vand.u32 2147483647, %v2420
    %v2423 = vcvt.s32.f32 %v2416
    %v2424 = vmul.f32 %v2423, %v2421
    %v2425 = vxor.u32 %v2424, 2147483648
    %v2426 = vsel %vm2343, %v2425, %v2424
    %v2427 = vsub.s32 4, %v2403
    %v2428 = vsel %vm2343, %v2427, %v2403
    %v2429 = vsel %vm2342, %v59, %v2426
    %v2430 = vsel %vm2342, 0, %v2428
    %v2431 = vcosq.f32.pop %v2429
    %v2432 = vsinq.f32.pop %v2429
    %vm2433 = vweird.f32 %v59
    %v2434 = vadd.s32 %v2430, 3
    %v2435 = vand.u32 %v2434, 3
    %vm2436 = vcmp.lt.s32.totalorder %v2435, 2
    %vm2437 = vcmp.eq.s32.totalorder %v2435, 0
    %v2438 = vxor.u32 %v2432, 2147483648
    %v2439 = vsel %vm2437, %v2431, %v2438
    %vm2440 = vcmp.eq.s32.totalorder %v2435, 2
    %v2441 = vxor.u32 %v2431, 2147483648
    %v2442 = vsel %vm2440, %v2441, %v2432
    %v2443 = vsel %vm2436, %v2439, %v2442
    %v2444 = vsel %vm2433, nan, %v2443
    %v2445 = vand.u32 2147483647, %v60
    %vm2446 = vcmp.le.f32.partialorder %v2445, 0.7853982
    %vm2447 = vcmp.lt.s32.totalorder %v60, 0
    %v2448 = vand.u32 %v60, 2139095040
    %v2449 = vshrl.u32 %v2448, 23
    %v2450 = vsub.s32 %v2449, 127
    %v2451 = vand.u32 2147483647, %v60
    %v2452 = vand.u32 %v2451, 8388607
    %v2453 = vor.u32 %v2452, 8388608
    %v2454 = vsub.s32 0, %v2453
    %v2455 = vadd.s32 %v2450, 1
    %vm2456 = vcmp.gt.s32.totalorder %v2455, 0
    %v2457 = vsel %vm2456, %v2455, 0
    %v2458 = vshrl.u32 %v2457, 5
    %v2459 = vand.u32 %v2457, 31
    %v2460 = vsub.s32 32, %v2459
    %v2461 = vshrl.u32 683565275, %v2460
    %v2462 = vshll.u32 683565275, %v2459
    %v2463 = vshrl.u32 2475754826, %v2460
    %v2464 = vor.u32 %v2462, %v2463
    %v2465 = vshll.u32 2475754826, %v2459
    %v2466 = vshrl.u32 2131351028, %v2460
    %v2467 = vor.u32 %v2465, %v2466
    %v2468 = vshll.u32 2131351028, %v2459
    %v2469 = vshrl.u32 2102212464, %v2460
    %v2470 = vor.u32 %v2468, %v2469
    %v2471 = vshll.u32 2102212464, %v2459
    %v2472 = vshrl.u32 920167782, %v2460
    %v2473 = vor.u32 %v2471, %v2472
    %v2474 = vshll.u32 920167782, %v2459
    %v2475 = vshrl.u32 1326507024, %v2460
    %v2476 = vor.u32 %v2474, %v2475
    %vm2477 = vcmp.lt.s32.totalorder %v2458, 1
    %vm2478 = vcmp.lt.s32.totalorder %v2458, 2
    %vm2479 = vcmp.lt.s32.totalorder %v2458, 3
    %vm2480 = vcmp.lt.s32.totalorder %v2458, 4
    %v2481 = vsel %vm2477, %v2461, %v2464
    %v2482 = vsel %vm2480, %v2470, 2102212464
    %v2483 = vsel %vm2479, %v2467, %v2482
    %v2484 = vsel %vm2478, %v2481, %v2483
    %v2485 = vsel %vm2477, %v2464, %v2467
    %v2486 = vsel %vm2480, %v2473, 920167782
    %v2487 = vsel %vm2479, %v2470, %v2486
    %v2488 = vsel %vm2478, %v2485, %v2487
    %v2489 = vsel %vm2477, %v2467, %v2470
    %v2490 = vsel %vm2480, %v2476, 1326507024
    %v2491 = vsel %vm2479, %v2473, %v2490
    %v2492 = vsel %vm2478, %v2489, %v2491
    %v2493 = vshll.u32 %v2453, 8
    %v2494 = vmul.u32.u64.compose %v2493, %v2492
    %v2495 = vextract.low.u32 %v2494
    %v2496 = vextract.high.u32 %v2494
    %v2497 = vmul.u32.u64.compose %v2493, %v2488
    %v2498 = vextract.low.u32 %v2497
    %v2499 = vextract.high.u32 %v2497
    %v2500 = vmul.u32 %v2493, %v2484
    %v2501 = vadd.s32 %v2496, %v2498
    %vm2502 = vc.u32 %v2496, %v2498
    %v2503 = vadd.s32 %v2499, 1
    %v2504 = vsel %vm2502, %v2503, %v2499
    %v2505 = vadd.s32 %v2500, %v2504
    %v2506 = vadd.s32 %v2505, 536870912
    %v2507 = vshrl.u32 %v2506, 30
    %v2508 = vshll.u32 %v2507, 30
    %v2509 = vsub.s32 %v2505, %v2508
    %vm2510 = vcmp.lt.s32.totalorder %v2509, 0
    %v2511 = vsub.s32 0, %v2509
    %v2512 = vsel %vm2510, %v2511, %v2509
    %v2513 = vclz %v2512
    %v2514 = vsub.s32 %v2513, 2
    %vm2515 = vcmp.gt.s32.totalorder 0, %v2514
    %v2516 = vsel %vm2515, 0, %v2514
    %v2517 = vsub.s32 32, %v2516
    %v2518 = vshll.u32 %v2509, %v2516
    %v2519 = vshrl.u32 %v2501, %v2517
    %v2520 = vor.u32 %v2518, %v2519
    %v2521 = vsub.s32 4294967266, %v2516
    %v2522 = vadd.s32 %v2521, 127
    %v2523 = vshll.u32 %v2522, 23
    %v2524 = vor.u32 4788187, %v2523
    %v2525 = vand.u32 2147483647, %v2524
    %v2527 = vcvt.s32.f32 %v2520
    %v2528 = vmul.f32 %v2527, %v2525
    %v2529 = vxor.u32 %v2528, 2147483648
    %v2530 = vsel %vm2447, %v2529, %v2528
    %v2531 = vsub.s32 4, %v2507
    %v2532 = vsel %vm2447, %v2531, %v2507
    %v2533 = vsel %vm2446, %v60, %v2530
    %v2534 = vsel %vm2446, 0, %v2532
    %v2535 = vcosq.f32.pop %v2533
    %v2536 = vsinq.f32.pop %v2533
    %vm2537 = vweird.f32 %v60
    %v2538 = vadd.s32 %v2534, 3
    %v2539 = vand.u32 %v2538, 3
    %vm2540 = vcmp.lt.s32.totalorder %v2539, 2
    %vm2541 = vcmp.eq.s32.totalorder %v2539, 0
    %v2542 = vxor.u32 %v2536, 2147483648
    %v2543 = vsel %vm2541, %v2535, %v2542
    %vm2544 = vcmp.eq.s32.totalorder %v2539, 2
    %v2545 = vxor.u32 %v2535, 2147483648
    %v2546 = vsel %vm2544, %v2545, %v2536
    %v2547 = vsel %vm2540, %v2543, %v2546
    %v2548 = vsel %vm2537, nan, %v2547
    %v2549 = vand.u32 2147483647, %v61
    %vm2550 = vcmp.le.f32.partialorder %v2549, 0.7853982
    %vm2551 = vcmp.lt.s32.totalorder %v61, 0
    %v2552 = vand.u32 %v61, 2139095040
    %v2553 = vshrl.u32 %v2552, 23
    %v2554 = vsub.s32 %v2553, 127
    %v2555 = vand.u32 2147483647, %v61
    %v2556 = vand.u32 %v2555, 8388607
    %v2557 = vor.u32 %v2556, 8388608
    %v2558 = vsub.s32 0, %v2557
    %v2559 = vadd.s32 %v2554, 1
    %vm2560 = vcmp.gt.s32.totalorder %v2559, 0
    %v2561 = vsel %vm2560, %v2559, 0
    %v2562 = vshrl.u32 %v2561, 5
    %v2563 = vand.u32 %v2561, 31
    %v2564 = vsub.s32 32, %v2563
    %v2565 = vshrl.u32 683565275, %v2564
    %v2566 = vshll.u32 683565275, %v2563
    %v2567 = vshrl.u32 2475754826, %v2564
    %v2568 = vor.u32 %v2566, %v2567
    %v2569 = vshll.u32 2475754826, %v2563
    %v2570 = vshrl.u32 2131351028, %v2564
    %v2571 = vor.u32 %v2569, %v2570
    %v2572 = vshll.u32 2131351028, %v2563
    %v2573 = vshrl.u32 2102212464, %v2564
    %v2574 = vor.u32 %v2572, %v2573
    %v2575 = vshll.u32 2102212464, %v2563
    %v2576 = vshrl.u32 920167782, %v2564
    %v2577 = vor.u32 %v2575, %v2576
    %v2578 = vshll.u32 920167782, %v2563
    %v2579 = vshrl.u32 1326507024, %v2564
    %v2580 = vor.u32 %v2578, %v2579
    %vm2581 = vcmp.lt.s32.totalorder %v2562, 1
    %vm2582 = vcmp.lt.s32.totalorder %v2562, 2
    %vm2583 = vcmp.lt.s32.totalorder %v2562, 3
    %vm2584 = vcmp.lt.s32.totalorder %v2562, 4
    %v2585 = vsel %vm2581, %v2565, %v2568
    %v2586 = vsel %vm2584, %v2574, 2102212464
    %v2587 = vsel %vm2583, %v2571, %v2586
    %v2588 = vsel %vm2582, %v2585, %v2587
    %v2589 = vsel %vm2581, %v2568, %v2571
    %v2590 = vsel %vm2584, %v2577, 920167782
    %v2591 = vsel %vm2583, %v2574, %v2590
    %v2592 = vsel %vm2582, %v2589, %v2591
    %v2593 = vsel %vm2581, %v2571, %v2574
    %v2594 = vsel %vm2584, %v2580, 1326507024
    %v2595 = vsel %vm2583, %v2577, %v2594
    %v2596 = vsel %vm2582, %v2593, %v2595
    %v2597 = vshll.u32 %v2557, 8
    %v2598 = vmul.u32.u64.compose %v2597, %v2596
    %v2599 = vextract.low.u32 %v2598
    %v2600 = vextract.high.u32 %v2598
    %v2601 = vmul.u32.u64.compose %v2597, %v2592
    %v2602 = vextract.low.u32 %v2601
    %v2603 = vextract.high.u32 %v2601
    %v2604 = vmul.u32 %v2597, %v2588
    %v2605 = vadd.s32 %v2600, %v2602
    %vm2606 = vc.u32 %v2600, %v2602
    %v2607 = vadd.s32 %v2603, 1
    %v2608 = vsel %vm2606, %v2607, %v2603
    %v2609 = vadd.s32 %v2604, %v2608
    %v2610 = vadd.s32 %v2609, 536870912
    %v2611 = vshrl.u32 %v2610, 30
    %v2612 = vshll.u32 %v2611, 30
    %v2613 = vsub.s32 %v2609, %v2612
    %vm2614 = vcmp.lt.s32.totalorder %v2613, 0
    %v2615 = vsub.s32 0, %v2613
    %v2616 = vsel %vm2614, %v2615, %v2613
    %v2617 = vclz %v2616
    %v2618 = vsub.s32 %v2617, 2
    %vm2619 = vcmp.gt.s32.totalorder 0, %v2618
    %v2620 = vsel %vm2619, 0, %v2618
    %v2621 = vsub.s32 32, %v2620
    %v2622 = vshll.u32 %v2613, %v2620
    %v2623 = vshrl.u32 %v2605, %v2621
    %v2624 = vor.u32 %v2622, %v2623
    %v2625 = vsub.s32 4294967266, %v2620
    %v2626 = vadd.s32 %v2625, 127
    %v2627 = vshll.u32 %v2626, 23
    %v2628 = vor.u32 4788187, %v2627
    %v2629 = vand.u32 2147483647, %v2628
    %v2631 = vcvt.s32.f32 %v2624
    %v2632 = vmul.f32 %v2631, %v2629
    %v2633 = vxor.u32 %v2632, 2147483648
    %v2634 = vsel %vm2551, %v2633, %v2632
    %v2635 = vsub.s32 4, %v2611
    %v2636 = vsel %vm2551, %v2635, %v2611
    %v2637 = vsel %vm2550, %v61, %v2634
    %v2638 = vsel %vm2550, 0, %v2636
    %v2639 = vcosq.f32.pop %v2637
    %v2640 = vsinq.f32.pop %v2637
    %vm2641 = vweird.f32 %v61
    %v2642 = vadd.s32 %v2638, 3
    %v2643 = vand.u32 %v2642, 3
    %vm2644 = vcmp.lt.s32.totalorder %v2643, 2
    %vm2645 = vcmp.eq.s32.totalorder %v2643, 0
    %v2646 = vxor.u32 %v2640, 2147483648
    %v2647 = vsel %vm2645, %v2639, %v2646
    %vm2648 = vcmp.eq.s32.totalorder %v2643, 2
    %v2649 = vxor.u32 %v2639, 2147483648
    %v2650 = vsel %vm2648, %v2649, %v2640
    %v2651 = vsel %vm2644, %v2647, %v2650
    %v2652 = vsel %vm2641, nan, %v2651
    %v2653 = vand.u32 2147483647, %v62
    %vm2654 = vcmp.le.f32.partialorder %v2653, 0.7853982
    %vm2655 = vcmp.lt.s32.totalorder %v62, 0
    %v2656 = vand.u32 %v62, 2139095040
    %v2657 = vshrl.u32 %v2656, 23
    %v2658 = vsub.s32 %v2657, 127
    %v2659 = vand.u32 2147483647, %v62
    %v2660 = vand.u32 %v2659, 8388607
    %v2661 = vor.u32 %v2660, 8388608
    %v2662 = vsub.s32 0, %v2661
    %v2663 = vadd.s32 %v2658, 1
    %vm2664 = vcmp.gt.s32.totalorder %v2663, 0
    %v2665 = vsel %vm2664, %v2663, 0
    %v2666 = vshrl.u32 %v2665, 5
    %v2667 = vand.u32 %v2665, 31
    %v2668 = vsub.s32 32, %v2667
    %v2669 = vshrl.u32 683565275, %v2668
    %v2670 = vshll.u32 683565275, %v2667
    %v2671 = vshrl.u32 2475754826, %v2668
    %v2672 = vor.u32 %v2670, %v2671
    %v2673 = vshll.u32 2475754826, %v2667
    %v2674 = vshrl.u32 2131351028, %v2668
    %v2675 = vor.u32 %v2673, %v2674
    %v2676 = vshll.u32 2131351028, %v2667
    %v2677 = vshrl.u32 2102212464, %v2668
    %v2678 = vor.u32 %v2676, %v2677
    %v2679 = vshll.u32 2102212464, %v2667
    %v2680 = vshrl.u32 920167782, %v2668
    %v2681 = vor.u32 %v2679, %v2680
    %v2682 = vshll.u32 920167782, %v2667
    %v2683 = vshrl.u32 1326507024, %v2668
    %v2684 = vor.u32 %v2682, %v2683
    %vm2685 = vcmp.lt.s32.totalorder %v2666, 1
    %vm2686 = vcmp.lt.s32.totalorder %v2666, 2
    %vm2687 = vcmp.lt.s32.totalorder %v2666, 3
    %vm2688 = vcmp.lt.s32.totalorder %v2666, 4
    %v2689 = vsel %vm2685, %v2669, %v2672
    %v2690 = vsel %vm2688, %v2678, 2102212464
    %v2691 = vsel %vm2687, %v2675, %v2690
    %v2692 = vsel %vm2686, %v2689, %v2691
    %v2693 = vsel %vm2685, %v2672, %v2675
    %v2694 = vsel %vm2688, %v2681, 920167782
    %v2695 = vsel %vm2687, %v2678, %v2694
    %v2696 = vsel %vm2686, %v2693, %v2695
    %v2697 = vsel %vm2685, %v2675, %v2678
    %v2698 = vsel %vm2688, %v2684, 1326507024
    %v2699 = vsel %vm2687, %v2681, %v2698
    %v2700 = vsel %vm2686, %v2697, %v2699
    %v2701 = vshll.u32 %v2661, 8
    %v2702 = vmul.u32.u64.compose %v2701, %v2700
    %v2703 = vextract.low.u32 %v2702
    %v2704 = vextract.high.u32 %v2702
    %v2705 = vmul.u32.u64.compose %v2701, %v2696
    %v2706 = vextract.low.u32 %v2705
    %v2707 = vextract.high.u32 %v2705
    %v2708 = vmul.u32 %v2701, %v2692
    %v2709 = vadd.s32 %v2704, %v2706
    %vm2710 = vc.u32 %v2704, %v2706
    %v2711 = vadd.s32 %v2707, 1
    %v2712 = vsel %vm2710, %v2711, %v2707
    %v2713 = vadd.s32 %v2708, %v2712
    %v2714 = vadd.s32 %v2713, 536870912
    %v2715 = vshrl.u32 %v2714, 30
    %v2716 = vshll.u32 %v2715, 30
    %v2717 = vsub.s32 %v2713, %v2716
    %vm2718 = vcmp.lt.s32.totalorder %v2717, 0
    %v2719 = vsub.s32 0, %v2717
    %v2720 = vsel %vm2718, %v2719, %v2717
    %v2721 = vclz %v2720
    %v2722 = vsub.s32 %v2721, 2
    %vm2723 = vcmp.gt.s32.totalorder 0, %v2722
    %v2724 = vsel %vm2723, 0, %v2722
    %v2725 = vsub.s32 32, %v2724
    %v2726 = vshll.u32 %v2717, %v2724
    %v2727 = vshrl.u32 %v2709, %v2725
    %v2728 = vor.u32 %v2726, %v2727
    %v2729 = vsub.s32 4294967266, %v2724
    %v2730 = vadd.s32 %v2729, 127
    %v2731 = vshll.u32 %v2730, 23
    %v2732 = vor.u32 4788187, %v2731
    %v2733 = vand.u32 2147483647, %v2732
    %v2735 = vcvt.s32.f32 %v2728
    %v2736 = vmul.f32 %v2735, %v2733
    %v2737 = vxor.u32 %v2736, 2147483648
    %v2738 = vsel %vm2655, %v2737, %v2736
    %v2739 = vsub.s32 4, %v2715
    %v2740 = vsel %vm2655, %v2739, %v2715
    %v2741 = vsel %vm2654, %v62, %v2738
    %v2742 = vsel %vm2654, 0, %v2740
    %v2743 = vcosq.f32.pop %v2741
    %v2744 = vsinq.f32.pop %v2741
    %vm2745 = vweird.f32 %v62
    %v2746 = vadd.s32 %v2742, 3
    %v2747 = vand.u32 %v2746, 3
    %vm2748 = vcmp.lt.s32.totalorder %v2747, 2
    %vm2749 = vcmp.eq.s32.totalorder %v2747, 0
    %v2750 = vxor.u32 %v2744, 2147483648
    %v2751 = vsel %vm2749, %v2743, %v2750
    %vm2752 = vcmp.eq.s32.totalorder %v2747, 2
    %v2753 = vxor.u32 %v2743, 2147483648
    %v2754 = vsel %vm2752, %v2753, %v2744
    %v2755 = vsel %vm2748, %v2751, %v2754
    %v2756 = vsel %vm2745, nan, %v2755
    %v2757 = vand.u32 2147483647, %v63
    %vm2758 = vcmp.le.f32.partialorder %v2757, 0.7853982
    %vm2759 = vcmp.lt.s32.totalorder %v63, 0
    %v2760 = vand.u32 %v63, 2139095040
    %v2761 = vshrl.u32 %v2760, 23
    %v2762 = vsub.s32 %v2761, 127
    %v2763 = vand.u32 2147483647, %v63
    %v2764 = vand.u32 %v2763, 8388607
    %v2765 = vor.u32 %v2764, 8388608
    %v2766 = vsub.s32 0, %v2765
    %v2767 = vadd.s32 %v2762, 1
    %vm2768 = vcmp.gt.s32.totalorder %v2767, 0
    %v2769 = vsel %vm2768, %v2767, 0
    %v2770 = vshrl.u32 %v2769, 5
    %v2771 = vand.u32 %v2769, 31
    %v2772 = vsub.s32 32, %v2771
    %v2773 = vshrl.u32 683565275, %v2772
    %v2774 = vshll.u32 683565275, %v2771
    %v2775 = vshrl.u32 2475754826, %v2772
    %v2776 = vor.u32 %v2774, %v2775
    %v2777 = vshll.u32 2475754826, %v2771
    %v2778 = vshrl.u32 2131351028, %v2772
    %v2779 = vor.u32 %v2777, %v2778
    %v2780 = vshll.u32 2131351028, %v2771
    %v2781 = vshrl.u32 2102212464, %v2772
    %v2782 = vor.u32 %v2780, %v2781
    %v2783 = vshll.u32 2102212464, %v2771
    %v2784 = vshrl.u32 920167782, %v2772
    %v2785 = vor.u32 %v2783, %v2784
    %v2786 = vshll.u32 920167782, %v2771
    %v2787 = vshrl.u32 1326507024, %v2772
    %v2788 = vor.u32 %v2786, %v2787
    %vm2789 = vcmp.lt.s32.totalorder %v2770, 1
    %vm2790 = vcmp.lt.s32.totalorder %v2770, 2
    %vm2791 = vcmp.lt.s32.totalorder %v2770, 3
    %vm2792 = vcmp.lt.s32.totalorder %v2770, 4
    %v2793 = vsel %vm2789, %v2773, %v2776
    %v2794 = vsel %vm2792, %v2782, 2102212464
    %v2795 = vsel %vm2791, %v2779, %v2794
    %v2796 = vsel %vm2790, %v2793, %v2795
    %v2797 = vsel %vm2789, %v2776, %v2779
    %v2798 = vsel %vm2792, %v2785, 920167782
    %v2799 = vsel %vm2791, %v2782, %v2798
    %v2800 = vsel %vm2790, %v2797, %v2799
    %v2801 = vsel %vm2789, %v2779, %v2782
    %v2802 = vsel %vm2792, %v2788, 1326507024
    %v2803 = vsel %vm2791, %v2785, %v2802
    %v2804 = vsel %vm2790, %v2801, %v2803
    %v2805 = vshll.u32 %v2765, 8
    %v2806 = vmul.u32.u64.compose %v2805, %v2804
    %v2807 = vextract.low.u32 %v2806
    %v2808 = vextract.high.u32 %v2806
    %v2809 = vmul.u32.u64.compose %v2805, %v2800
    %v2810 = vextract.low.u32 %v2809
    %v2811 = vextract.high.u32 %v2809
    %v2812 = vmul.u32 %v2805, %v2796
    %v2813 = vadd.s32 %v2808, %v2810
    %vm2814 = vc.u32 %v2808, %v2810
    %v2815 = vadd.s32 %v2811, 1
    %v2816 = vsel %vm2814, %v2815, %v2811
    %v2817 = vadd.s32 %v2812, %v2816
    %v2818 = vadd.s32 %v2817, 536870912
    %v2819 = vshrl.u32 %v2818, 30
    %v2820 = vshll.u32 %v2819, 30
    %v2821 = vsub.s32 %v2817, %v2820
    %vm2822 = vcmp.lt.s32.totalorder %v2821, 0
    %v2823 = vsub.s32 0, %v2821
    %v2824 = vsel %vm2822, %v2823, %v2821
    %v2825 = vclz %v2824
    %v2826 = vsub.s32 %v2825, 2
    %vm2827 = vcmp.gt.s32.totalorder 0, %v2826
    %v2828 = vsel %vm2827, 0, %v2826
    %v2829 = vsub.s32 32, %v2828
    %v2830 = vshll.u32 %v2821, %v2828
    %v2831 = vshrl.u32 %v2813, %v2829
    %v2832 = vor.u32 %v2830, %v2831
    %v2833 = vsub.s32 4294967266, %v2828
    %v2834 = vadd.s32 %v2833, 127
    %v2835 = vshll.u32 %v2834, 23
    %v2836 = vor.u32 4788187, %v2835
    %v2837 = vand.u32 2147483647, %v2836
    %v2839 = vcvt.s32.f32 %v2832
    %v2840 = vmul.f32 %v2839, %v2837
    %v2841 = vxor.u32 %v2840, 2147483648
    %v2842 = vsel %vm2759, %v2841, %v2840
    %v2843 = vsub.s32 4, %v2819
    %v2844 = vsel %vm2759, %v2843, %v2819
    %v2845 = vsel %vm2758, %v63, %v2842
    %v2846 = vsel %vm2758, 0, %v2844
    %v2847 = vcosq.f32.pop %v2845
    %v2848 = vsinq.f32.pop %v2845
    %vm2849 = vweird.f32 %v63
    %v2850 = vadd.s32 %v2846, 3
    %v2851 = vand.u32 %v2850, 3
    %vm2852 = vcmp.lt.s32.totalorder %v2851, 2
    %vm2853 = vcmp.eq.s32.totalorder %v2851, 0
    %v2854 = vxor.u32 %v2848, 2147483648
    %v2855 = vsel %vm2853, %v2847, %v2854
    %vm2856 = vcmp.eq.s32.totalorder %v2851, 2
    %v2857 = vxor.u32 %v2847, 2147483648
    %v2858 = vsel %vm2856, %v2857, %v2848
    %v2859 = vsel %vm2852, %v2855, %v2858
    %v2860 = vsel %vm2849, nan, %v2859
    %v2861 = vand.u32 2147483647, %v64
    %vm2862 = vcmp.le.f32.partialorder %v2861, 0.7853982
    %vm2863 = vcmp.lt.s32.totalorder %v64, 0
    %v2864 = vand.u32 %v64, 2139095040
    %v2865 = vshrl.u32 %v2864, 23
    %v2866 = vsub.s32 %v2865, 127
    %v2867 = vand.u32 2147483647, %v64
    %v2868 = vand.u32 %v2867, 8388607
    %v2869 = vor.u32 %v2868, 8388608
    %v2870 = vsub.s32 0, %v2869
    %v2871 = vadd.s32 %v2866, 1
    %vm2872 = vcmp.gt.s32.totalorder %v2871, 0
    %v2873 = vsel %vm2872, %v2871, 0
    %v2874 = vshrl.u32 %v2873, 5
    %v2875 = vand.u32 %v2873, 31
    %v2876 = vsub.s32 32, %v2875
    %v2877 = vshrl.u32 683565275, %v2876
    %v2878 = vshll.u32 683565275, %v2875
    %v2879 = vshrl.u32 2475754826, %v2876
    %v2880 = vor.u32 %v2878, %v2879
    %v2881 = vshll.u32 2475754826, %v2875
    %v2882 = vshrl.u32 2131351028, %v2876
    %v2883 = vor.u32 %v2881, %v2882
    %v2884 = vshll.u32 2131351028, %v2875
    %v2885 = vshrl.u32 2102212464, %v2876
    %v2886 = vor.u32 %v2884, %v2885
    %v2887 = vshll.u32 2102212464, %v2875
    %v2888 = vshrl.u32 920167782, %v2876
    %v2889 = vor.u32 %v2887, %v2888
    %v2890 = vshll.u32 920167782, %v2875
    %v2891 = vshrl.u32 1326507024, %v2876
    %v2892 = vor.u32 %v2890, %v2891
    %vm2893 = vcmp.lt.s32.totalorder %v2874, 1
    %vm2894 = vcmp.lt.s32.totalorder %v2874, 2
    %vm2895 = vcmp.lt.s32.totalorder %v2874, 3
    %vm2896 = vcmp.lt.s32.totalorder %v2874, 4
    %v2897 = vsel %vm2893, %v2877, %v2880
    %v2898 = vsel %vm2896, %v2886, 2102212464
    %v2899 = vsel %vm2895, %v2883, %v2898
    %v2900 = vsel %vm2894, %v2897, %v2899
    %v2901 = vsel %vm2893, %v2880, %v2883
    %v2902 = vsel %vm2896, %v2889, 920167782
    %v2903 = vsel %vm2895, %v2886, %v2902
    %v2904 = vsel %vm2894, %v2901, %v2903
    %v2905 = vsel %vm2893, %v2883, %v2886
    %v2906 = vsel %vm2896, %v2892, 1326507024
    %v2907 = vsel %vm2895, %v2889, %v2906
    %v2908 = vsel %vm2894, %v2905, %v2907
    %v2909 = vshll.u32 %v2869, 8
    %v2910 = vmul.u32.u64.compose %v2909, %v2908
    %v2911 = vextract.low.u32 %v2910
    %v2912 = vextract.high.u32 %v2910
    %v2913 = vmul.u32.u64.compose %v2909, %v2904
    %v2914 = vextract.low.u32 %v2913
    %v2915 = vextract.high.u32 %v2913
    %v2916 = vmul.u32 %v2909, %v2900
    %v2917 = vadd.s32 %v2912, %v2914
    %vm2918 = vc.u32 %v2912, %v2914
    %v2919 = vadd.s32 %v2915, 1
    %v2920 = vsel %vm2918, %v2919, %v2915
    %v2921 = vadd.s32 %v2916, %v2920
    %v2922 = vadd.s32 %v2921, 536870912
    %v2923 = vshrl.u32 %v2922, 30
    %v2924 = vshll.u32 %v2923, 30
    %v2925 = vsub.s32 %v2921, %v2924
    %vm2926 = vcmp.lt.s32.totalorder %v2925, 0
    %v2927 = vsub.s32 0, %v2925
    %v2928 = vsel %vm2926, %v2927, %v2925
    %v2929 = vclz %v2928
    %v2930 = vsub.s32 %v2929, 2
    %vm2931 = vcmp.gt.s32.totalorder 0, %v2930
    %v2932 = vsel %vm2931, 0, %v2930
    %v2933 = vsub.s32 32, %v2932
    %v2934 = vshll.u32 %v2925, %v2932
    %v2935 = vshrl.u32 %v2917, %v2933
    %v2936 = vor.u32 %v2934, %v2935
    %v2937 = vsub.s32 4294967266, %v2932
    %v2938 = vadd.s32 %v2937, 127
    %v2939 = vshll.u32 %v2938, 23
    %v2940 = vor.u32 4788187, %v2939
    %v2941 = vand.u32 2147483647, %v2940
    %v2943 = vcvt.s32.f32 %v2936
    %v2944 = vmul.f32 %v2943, %v2941
    %v2945 = vxor.u32 %v2944, 2147483648
    %v2946 = vsel %vm2863, %v2945, %v2944
    %v2947 = vsub.s32 4, %v2923
    %v2948 = vsel %vm2863, %v2947, %v2923
    %v2949 = vsel %vm2862, %v64, %v2946
    %v2950 = vsel %vm2862, 0, %v2948
    %v2951 = vcosq.f32.pop %v2949
    %v2952 = vsinq.f32.pop %v2949
    %vm2953 = vweird.f32 %v64
    %v2954 = vadd.s32 %v2950, 3
    %v2955 = vand.u32 %v2954, 3
    %vm2956 = vcmp.lt.s32.totalorder %v2955, 2
    %vm2957 = vcmp.eq.s32.totalorder %v2955, 0
    %v2958 = vxor.u32 %v2952, 2147483648
    %v2959 = vsel %vm2957, %v2951, %v2958
    %vm2960 = vcmp.eq.s32.totalorder %v2955, 2
    %v2961 = vxor.u32 %v2951, 2147483648
    %v2962 = vsel %vm2960, %v2961, %v2952
    %v2963 = vsel %vm2956, %v2959, %v2962
    %v2964 = vsel %vm2953, nan, %v2963
    %v2965 = vand.u32 2147483647, %v65
    %vm2966 = vcmp.le.f32.partialorder %v2965, 0.7853982
    %vm2967 = vcmp.lt.s32.totalorder %v65, 0
    %v2968 = vand.u32 %v65, 2139095040
    %v2969 = vshrl.u32 %v2968, 23
    %v2970 = vsub.s32 %v2969, 127
    %v2971 = vand.u32 2147483647, %v65
    %v2972 = vand.u32 %v2971, 8388607
    %v2973 = vor.u32 %v2972, 8388608
    %v2974 = vsub.s32 0, %v2973
    %v2975 = vadd.s32 %v2970, 1
    %vm2976 = vcmp.gt.s32.totalorder %v2975, 0
    %v2977 = vsel %vm2976, %v2975, 0
    %v2978 = vshrl.u32 %v2977, 5
    %v2979 = vand.u32 %v2977, 31
    %v2980 = vsub.s32 32, %v2979
    %v2981 = vshrl.u32 683565275, %v2980
    %v2982 = vshll.u32 683565275, %v2979
    %v2983 = vshrl.u32 2475754826, %v2980
    %v2984 = vor.u32 %v2982, %v2983
    %v2985 = vshll.u32 2475754826, %v2979
    %v2986 = vshrl.u32 2131351028, %v2980
    %v2987 = vor.u32 %v2985, %v2986
    %v2988 = vshll.u32 2131351028, %v2979
    %v2989 = vshrl.u32 2102212464, %v2980
    %v2990 = vor.u32 %v2988, %v2989
    %v2991 = vshll.u32 2102212464, %v2979
    %v2992 = vshrl.u32 920167782, %v2980
    %v2993 = vor.u32 %v2991, %v2992
    %v2994 = vshll.u32 920167782, %v2979
    %v2995 = vshrl.u32 1326507024, %v2980
    %v2996 = vor.u32 %v2994, %v2995
    %vm2997 = vcmp.lt.s32.totalorder %v2978, 1
    %vm2998 = vcmp.lt.s32.totalorder %v2978, 2
    %vm2999 = vcmp.lt.s32.totalorder %v2978, 3
    %vm3000 = vcmp.lt.s32.totalorder %v2978, 4
    %v3001 = vsel %vm2997, %v2981, %v2984
    %v3002 = vsel %vm3000, %v2990, 2102212464
    %v3003 = vsel %vm2999, %v2987, %v3002
    %v3004 = vsel %vm2998, %v3001, %v3003
    %v3005 = vsel %vm2997, %v2984, %v2987
    %v3006 = vsel %vm3000, %v2993, 920167782
    %v3007 = vsel %vm2999, %v2990, %v3006
    %v3008 = vsel %vm2998, %v3005, %v3007
    %v3009 = vsel %vm2997, %v2987, %v2990
    %v3010 = vsel %vm3000, %v2996, 1326507024
    %v3011 = vsel %vm2999, %v2993, %v3010
    %v3012 = vsel %vm2998, %v3009, %v3011
    %v3013 = vshll.u32 %v2973, 8
    %v3014 = vmul.u32.u64.compose %v3013, %v3012
    %v3015 = vextract.low.u32 %v3014
    %v3016 = vextract.high.u32 %v3014
    %v3017 = vmul.u32.u64.compose %v3013, %v3008
    %v3018 = vextract.low.u32 %v3017
    %v3019 = vextract.high.u32 %v3017
    %v3020 = vmul.u32 %v3013, %v3004
    %v3021 = vadd.s32 %v3016, %v3018
    %vm3022 = vc.u32 %v3016, %v3018
    %v3023 = vadd.s32 %v3019, 1
    %v3024 = vsel %vm3022, %v3023, %v3019
    %v3025 = vadd.s32 %v3020, %v3024
    %v3026 = vadd.s32 %v3025, 536870912
    %v3027 = vshrl.u32 %v3026, 30
    %v3028 = vshll.u32 %v3027, 30
    %v3029 = vsub.s32 %v3025, %v3028
    %vm3030 = vcmp.lt.s32.totalorder %v3029, 0
    %v3031 = vsub.s32 0, %v3029
    %v3032 = vsel %vm3030, %v3031, %v3029
    %v3033 = vclz %v3032
    %v3034 = vsub.s32 %v3033, 2
    %vm3035 = vcmp.gt.s32.totalorder 0, %v3034
    %v3036 = vsel %vm3035, 0, %v3034
    %v3037 = vsub.s32 32, %v3036
    %v3038 = vshll.u32 %v3029, %v3036
    %v3039 = vshrl.u32 %v3021, %v3037
    %v3040 = vor.u32 %v3038, %v3039
    %v3041 = vsub.s32 4294967266, %v3036
    %v3042 = vadd.s32 %v3041, 127
    %v3043 = vshll.u32 %v3042, 23
    %v3044 = vor.u32 4788187, %v3043
    %v3045 = vand.u32 2147483647, %v3044
    %v3047 = vcvt.s32.f32 %v3040
    %v3048 = vmul.f32 %v3047, %v3045
    %v3049 = vxor.u32 %v3048, 2147483648
    %v3050 = vsel %vm2967, %v3049, %v3048
    %v3051 = vsub.s32 4, %v3027
    %v3052 = vsel %vm2967, %v3051, %v3027
    %v3053 = vsel %vm2966, %v65, %v3050
    %v3054 = vsel %vm2966, 0, %v3052
    %v3055 = vcosq.f32.pop %v3053
    %v3056 = vsinq.f32.pop %v3053
    %vm3057 = vweird.f32 %v65
    %v3058 = vadd.s32 %v3054, 3
    %v3059 = vand.u32 %v3058, 3
    %vm3060 = vcmp.lt.s32.totalorder %v3059, 2
    %vm3061 = vcmp.eq.s32.totalorder %v3059, 0
    %v3062 = vxor.u32 %v3056, 2147483648
    %v3063 = vsel %vm3061, %v3055, %v3062
    %vm3064 = vcmp.eq.s32.totalorder %v3059, 2
    %v3065 = vxor.u32 %v3055, 2147483648
    %v3066 = vsel %vm3064, %v3065, %v3056
    %v3067 = vsel %vm3060, %v3063, %v3066
    %v3068 = vsel %vm3057, nan, %v3067
    %v3069 = vand.u32 2147483647, %v66
    %vm3070 = vcmp.le.f32.partialorder %v3069, 0.7853982
    %vm3071 = vcmp.lt.s32.totalorder %v66, 0
    %v3072 = vand.u32 %v66, 2139095040
    %v3073 = vshrl.u32 %v3072, 23
    %v3074 = vsub.s32 %v3073, 127
    %v3075 = vand.u32 2147483647, %v66
    %v3076 = vand.u32 %v3075, 8388607
    %v3077 = vor.u32 %v3076, 8388608
    %v3078 = vsub.s32 0, %v3077
    %v3079 = vadd.s32 %v3074, 1
    %vm3080 = vcmp.gt.s32.totalorder %v3079, 0
    %v3081 = vsel %vm3080, %v3079, 0
    %v3082 = vshrl.u32 %v3081, 5
    %v3083 = vand.u32 %v3081, 31
    %v3084 = vsub.s32 32, %v3083
    %v3085 = vshrl.u32 683565275, %v3084
    %v3086 = vshll.u32 683565275, %v3083
    %v3087 = vshrl.u32 2475754826, %v3084
    %v3088 = vor.u32 %v3086, %v3087
    %v3089 = vshll.u32 2475754826, %v3083
    %v3090 = vshrl.u32 2131351028, %v3084
    %v3091 = vor.u32 %v3089, %v3090
    %v3092 = vshll.u32 2131351028, %v3083
    %v3093 = vshrl.u32 2102212464, %v3084
    %v3094 = vor.u32 %v3092, %v3093
    %v3095 = vshll.u32 2102212464, %v3083
    %v3096 = vshrl.u32 920167782, %v3084
    %v3097 = vor.u32 %v3095, %v3096
    %v3098 = vshll.u32 920167782, %v3083
    %v3099 = vshrl.u32 1326507024, %v3084
    %v3100 = vor.u32 %v3098, %v3099
    %vm3101 = vcmp.lt.s32.totalorder %v3082, 1
    %vm3102 = vcmp.lt.s32.totalorder %v3082, 2
    %vm3103 = vcmp.lt.s32.totalorder %v3082, 3
    %vm3104 = vcmp.lt.s32.totalorder %v3082, 4
    %v3105 = vsel %vm3101, %v3085, %v3088
    %v3106 = vsel %vm3104, %v3094, 2102212464
    %v3107 = vsel %vm3103, %v3091, %v3106
    %v3108 = vsel %vm3102, %v3105, %v3107
    %v3109 = vsel %vm3101, %v3088, %v3091
    %v3110 = vsel %vm3104, %v3097, 920167782
    %v3111 = vsel %vm3103, %v3094, %v3110
    %v3112 = vsel %vm3102, %v3109, %v3111
    %v3113 = vsel %vm3101, %v3091, %v3094
    %v3114 = vsel %vm3104, %v3100, 1326507024
    %v3115 = vsel %vm3103, %v3097, %v3114
    %v3116 = vsel %vm3102, %v3113, %v3115
    %v3117 = vshll.u32 %v3077, 8
    %v3118 = vmul.u32.u64.compose %v3117, %v3116
    %v3119 = vextract.low.u32 %v3118
    %v3120 = vextract.high.u32 %v3118
    %v3121 = vmul.u32.u64.compose %v3117, %v3112
    %v3122 = vextract.low.u32 %v3121
    %v3123 = vextract.high.u32 %v3121
    %v3124 = vmul.u32 %v3117, %v3108
    %v3125 = vadd.s32 %v3120, %v3122
    %vm3126 = vc.u32 %v3120, %v3122
    %v3127 = vadd.s32 %v3123, 1
    %v3128 = vsel %vm3126, %v3127, %v3123
    %v3129 = vadd.s32 %v3124, %v3128
    %v3130 = vadd.s32 %v3129, 536870912
    %v3131 = vshrl.u32 %v3130, 30
    %v3132 = vshll.u32 %v3131, 30
    %v3133 = vsub.s32 %v3129, %v3132
    %vm3134 = vcmp.lt.s32.totalorder %v3133, 0
    %v3135 = vsub.s32 0, %v3133
    %v3136 = vsel %vm3134, %v3135, %v3133
    %v3137 = vclz %v3136
    %v3138 = vsub.s32 %v3137, 2
    %vm3139 = vcmp.gt.s32.totalorder 0, %v3138
    %v3140 = vsel %vm3139, 0, %v3138
    %v3141 = vsub.s32 32, %v3140
    %v3142 = vshll.u32 %v3133, %v3140
    %v3143 = vshrl.u32 %v3125, %v3141
    %v3144 = vor.u32 %v3142, %v3143
    %v3145 = vsub.s32 4294967266, %v3140
    %v3146 = vadd.s32 %v3145, 127
    %v3147 = vshll.u32 %v3146, 23
    %v3148 = vor.u32 4788187, %v3147
    %v3149 = vand.u32 2147483647, %v3148
    %v3151 = vcvt.s32.f32 %v3144
    %v3152 = vmul.f32 %v3151, %v3149
    %v3153 = vxor.u32 %v3152, 2147483648
    %v3154 = vsel %vm3071, %v3153, %v3152
    %v3155 = vsub.s32 4, %v3131
    %v3156 = vsel %vm3071, %v3155, %v3131
    %v3157 = vsel %vm3070, %v66, %v3154
    %v3158 = vsel %vm3070, 0, %v3156
    %v3159 = vcosq.f32.pop %v3157
    %v3160 = vsinq.f32.pop %v3157
    %vm3161 = vweird.f32 %v66
    %v3162 = vadd.s32 %v3158, 3
    %v3163 = vand.u32 %v3162, 3
    %vm3164 = vcmp.lt.s32.totalorder %v3163, 2
    %vm3165 = vcmp.eq.s32.totalorder %v3163, 0
    %v3166 = vxor.u32 %v3160, 2147483648
    %v3167 = vsel %vm3165, %v3159, %v3166
    %vm3168 = vcmp.eq.s32.totalorder %v3163, 2
    %v3169 = vxor.u32 %v3159, 2147483648
    %v3170 = vsel %vm3168, %v3169, %v3160
    %v3171 = vsel %vm3164, %v3167, %v3170
    %v3172 = vsel %vm3161, nan, %v3171
    %v3173 = vand.u32 2147483647, %v67
    %vm3174 = vcmp.le.f32.partialorder %v3173, 0.7853982
    %vm3175 = vcmp.lt.s32.totalorder %v67, 0
    %v3176 = vand.u32 %v67, 2139095040
    %v3177 = vshrl.u32 %v3176, 23
    %v3178 = vsub.s32 %v3177, 127
    %v3179 = vand.u32 2147483647, %v67
    %v3180 = vand.u32 %v3179, 8388607
    %v3181 = vor.u32 %v3180, 8388608
    %v3182 = vsub.s32 0, %v3181
    %v3183 = vadd.s32 %v3178, 1
    %vm3184 = vcmp.gt.s32.totalorder %v3183, 0
    %v3185 = vsel %vm3184, %v3183, 0
    %v3186 = vshrl.u32 %v3185, 5
    %v3187 = vand.u32 %v3185, 31
    %v3188 = vsub.s32 32, %v3187
    %v3189 = vshrl.u32 683565275, %v3188
    %v3190 = vshll.u32 683565275, %v3187
    %v3191 = vshrl.u32 2475754826, %v3188
    %v3192 = vor.u32 %v3190, %v3191
    %v3193 = vshll.u32 2475754826, %v3187
    %v3194 = vshrl.u32 2131351028, %v3188
    %v3195 = vor.u32 %v3193, %v3194
    %v3196 = vshll.u32 2131351028, %v3187
    %v3197 = vshrl.u32 2102212464, %v3188
    %v3198 = vor.u32 %v3196, %v3197
    %v3199 = vshll.u32 2102212464, %v3187
    %v3200 = vshrl.u32 920167782, %v3188
    %v3201 = vor.u32 %v3199, %v3200
    %v3202 = vshll.u32 920167782, %v3187
    %v3203 = vshrl.u32 1326507024, %v3188
    %v3204 = vor.u32 %v3202, %v3203
    %vm3205 = vcmp.lt.s32.totalorder %v3186, 1
    %vm3206 = vcmp.lt.s32.totalorder %v3186, 2
    %vm3207 = vcmp.lt.s32.totalorder %v3186, 3
    %vm3208 = vcmp.lt.s32.totalorder %v3186, 4
    %v3209 = vsel %vm3205, %v3189, %v3192
    %v3210 = vsel %vm3208, %v3198, 2102212464
    %v3211 = vsel %vm3207, %v3195, %v3210
    %v3212 = vsel %vm3206, %v3209, %v3211
    %v3213 = vsel %vm3205, %v3192, %v3195
    %v3214 = vsel %vm3208, %v3201, 920167782
    %v3215 = vsel %vm3207, %v3198, %v3214
    %v3216 = vsel %vm3206, %v3213, %v3215
    %v3217 = vsel %vm3205, %v3195, %v3198
    %v3218 = vsel %vm3208, %v3204, 1326507024
    %v3219 = vsel %vm3207, %v3201, %v3218
    %v3220 = vsel %vm3206, %v3217, %v3219
    %v3221 = vshll.u32 %v3181, 8
    %v3222 = vmul.u32.u64.compose %v3221, %v3220
    %v3223 = vextract.low.u32 %v3222
    %v3224 = vextract.high.u32 %v3222
    %v3225 = vmul.u32.u64.compose %v3221, %v3216
    %v3226 = vextract.low.u32 %v3225
    %v3227 = vextract.high.u32 %v3225
    %v3228 = vmul.u32 %v3221, %v3212
    %v3229 = vadd.s32 %v3224, %v3226
    %vm3230 = vc.u32 %v3224, %v3226
    %v3231 = vadd.s32 %v3227, 1
    %v3232 = vsel %vm3230, %v3231, %v3227
    %v3233 = vadd.s32 %v3228, %v3232
    %v3234 = vadd.s32 %v3233, 536870912
    %v3235 = vshrl.u32 %v3234, 30
    %v3236 = vshll.u32 %v3235, 30
    %v3237 = vsub.s32 %v3233, %v3236
    %vm3238 = vcmp.lt.s32.totalorder %v3237, 0
    %v3239 = vsub.s32 0, %v3237
    %v3240 = vsel %vm3238, %v3239, %v3237
    %v3241 = vclz %v3240
    %v3242 = vsub.s32 %v3241, 2
    %vm3243 = vcmp.gt.s32.totalorder 0, %v3242
    %v3244 = vsel %vm3243, 0, %v3242
    %v3245 = vsub.s32 32, %v3244
    %v3246 = vshll.u32 %v3237, %v3244
    %v3247 = vshrl.u32 %v3229, %v3245
    %v3248 = vor.u32 %v3246, %v3247
    %v3249 = vsub.s32 4294967266, %v3244
    %v3250 = vadd.s32 %v3249, 127
    %v3251 = vshll.u32 %v3250, 23
    %v3252 = vor.u32 4788187, %v3251
    %v3253 = vand.u32 2147483647, %v3252
    %v3255 = vcvt.s32.f32 %v3248
    %v3256 = vmul.f32 %v3255, %v3253
    %v3257 = vxor.u32 %v3256, 2147483648
    %v3258 = vsel %vm3175, %v3257, %v3256
    %v3259 = vsub.s32 4, %v3235
    %v3260 = vsel %vm3175, %v3259, %v3235
    %v3261 = vsel %vm3174, %v67, %v3258
    %v3262 = vsel %vm3174, 0, %v3260
    %v3263 = vcosq.f32.pop %v3261
    %v3264 = vsinq.f32.pop %v3261
    %vm3265 = vweird.f32 %v67
    %v3266 = vadd.s32 %v3262, 3
    %v3267 = vand.u32 %v3266, 3
    %vm3268 = vcmp.lt.s32.totalorder %v3267, 2
    %vm3269 = vcmp.eq.s32.totalorder %v3267, 0
    %v3270 = vxor.u32 %v3264, 2147483648
    %v3271 = vsel %vm3269, %v3263, %v3270
    %vm3272 = vcmp.eq.s32.totalorder %v3267, 2
    %v3273 = vxor.u32 %v3263, 2147483648
    %v3274 = vsel %vm3272, %v3273, %v3264
    %v3275 = vsel %vm3268, %v3271, %v3274
    %v3276 = vsel %vm3265, nan, %v3275
    %v3277 = vand.u32 2147483647, %v68
    %vm3278 = vcmp.le.f32.partialorder %v3277, 0.7853982
    %vm3279 = vcmp.lt.s32.totalorder %v68, 0
    %v3280 = vand.u32 %v68, 2139095040
    %v3281 = vshrl.u32 %v3280, 23
    %v3282 = vsub.s32 %v3281, 127
    %v3283 = vand.u32 2147483647, %v68
    %v3284 = vand.u32 %v3283, 8388607
    %v3285 = vor.u32 %v3284, 8388608
    %v3286 = vsub.s32 0, %v3285
    %v3287 = vadd.s32 %v3282, 1
    %vm3288 = vcmp.gt.s32.totalorder %v3287, 0
    %v3289 = vsel %vm3288, %v3287, 0
    %v3290 = vshrl.u32 %v3289, 5
    %v3291 = vand.u32 %v3289, 31
    %v3292 = vsub.s32 32, %v3291
    %v3293 = vshrl.u32 683565275, %v3292
    %v3294 = vshll.u32 683565275, %v3291
    %v3295 = vshrl.u32 2475754826, %v3292
    %v3296 = vor.u32 %v3294, %v3295
    %v3297 = vshll.u32 2475754826, %v3291
    %v3298 = vshrl.u32 2131351028, %v3292
    %v3299 = vor.u32 %v3297, %v3298
    %v3300 = vshll.u32 2131351028, %v3291
    %v3301 = vshrl.u32 2102212464, %v3292
    %v3302 = vor.u32 %v3300, %v3301
    %v3303 = vshll.u32 2102212464, %v3291
    %v3304 = vshrl.u32 920167782, %v3292
    %v3305 = vor.u32 %v3303, %v3304
    %v3306 = vshll.u32 920167782, %v3291
    %v3307 = vshrl.u32 1326507024, %v3292
    %v3308 = vor.u32 %v3306, %v3307
    %vm3309 = vcmp.lt.s32.totalorder %v3290, 1
    %vm3310 = vcmp.lt.s32.totalorder %v3290, 2
    %vm3311 = vcmp.lt.s32.totalorder %v3290, 3
    %vm3312 = vcmp.lt.s32.totalorder %v3290, 4
    %v3313 = vsel %vm3309, %v3293, %v3296
    %v3314 = vsel %vm3312, %v3302, 2102212464
    %v3315 = vsel %vm3311, %v3299, %v3314
    %v3316 = vsel %vm3310, %v3313, %v3315
    %v3317 = vsel %vm3309, %v3296, %v3299
    %v3318 = vsel %vm3312, %v3305, 920167782
    %v3319 = vsel %vm3311, %v3302, %v3318
    %v3320 = vsel %vm3310, %v3317, %v3319
    %v3321 = vsel %vm3309, %v3299, %v3302
    %v3322 = vsel %vm3312, %v3308, 1326507024
    %v3323 = vsel %vm3311, %v3305, %v3322
    %v3324 = vsel %vm3310, %v3321, %v3323
    %v3325 = vshll.u32 %v3285, 8
    %v3326 = vmul.u32.u64.compose %v3325, %v3324
    %v3327 = vextract.low.u32 %v3326
    %v3328 = vextract.high.u32 %v3326
    %v3329 = vmul.u32.u64.compose %v3325, %v3320
    %v3330 = vextract.low.u32 %v3329
    %v3331 = vextract.high.u32 %v3329
    %v3332 = vmul.u32 %v3325, %v3316
    %v3333 = vadd.s32 %v3328, %v3330
    %vm3334 = vc.u32 %v3328, %v3330
    %v3335 = vadd.s32 %v3331, 1
    %v3336 = vsel %vm3334, %v3335, %v3331
    %v3337 = vadd.s32 %v3332, %v3336
    %v3338 = vadd.s32 %v3337, 536870912
    %v3339 = vshrl.u32 %v3338, 30
    %v3340 = vshll.u32 %v3339, 30
    %v3341 = vsub.s32 %v3337, %v3340
    %vm3342 = vcmp.lt.s32.totalorder %v3341, 0
    %v3343 = vsub.s32 0, %v3341
    %v3344 = vsel %vm3342, %v3343, %v3341
    %v3345 = vclz %v3344
    %v3346 = vsub.s32 %v3345, 2
    %vm3347 = vcmp.gt.s32.totalorder 0, %v3346
    %v3348 = vsel %vm3347, 0, %v3346
    %v3349 = vsub.s32 32, %v3348
    %v3350 = vshll.u32 %v3341, %v3348
    %v3351 = vshrl.u32 %v3333, %v3349
    %v3352 = vor.u32 %v3350, %v3351
    %v3353 = vsub.s32 4294967266, %v3348
    %v3354 = vadd.s32 %v3353, 127
    %v3355 = vshll.u32 %v3354, 23
    %v3356 = vor.u32 4788187, %v3355
    %v3357 = vand.u32 2147483647, %v3356
    %v3359 = vcvt.s32.f32 %v3352
    %v3360 = vmul.f32 %v3359, %v3357
    %v3361 = vxor.u32 %v3360, 2147483648
    %v3362 = vsel %vm3279, %v3361, %v3360
    %v3363 = vsub.s32 4, %v3339
    %v3364 = vsel %vm3279, %v3363, %v3339
    %v3365 = vsel %vm3278, %v68, %v3362
    %v3366 = vsel %vm3278, 0, %v3364
    %v3367 = vcosq.f32.pop %v3365
    %v3368 = vsinq.f32.pop %v3365
    %vm3369 = vweird.f32 %v68
    %v3370 = vadd.s32 %v3366, 3
    %v3371 = vand.u32 %v3370, 3
    %vm3372 = vcmp.lt.s32.totalorder %v3371, 2
    %vm3373 = vcmp.eq.s32.totalorder %v3371, 0
    %v3374 = vxor.u32 %v3368, 2147483648
    %v3375 = vsel %vm3373, %v3367, %v3374
    %vm3376 = vcmp.eq.s32.totalorder %v3371, 2
    %v3377 = vxor.u32 %v3367, 2147483648
    %v3378 = vsel %vm3376, %v3377, %v3368
    %v3379 = vsel %vm3372, %v3375, %v3378
    %v3380 = vsel %vm3369, nan, %v3379
    %v3381 = vld [vmem:[#allocation2] sm:$0xff]
    %v3382 = vld [vmem:[#allocation2 + $0x8] sm:$0xff]
    %v3383 = vld [vmem:[#allocation2 + $0x10] sm:$0xff]
    %v3384 = vld [vmem:[#allocation2 + $0x18] sm:$0xff]
    %v3385 = vld [vmem:[#allocation2 + $0x20] sm:$0xff]
    %v3386 = vld [vmem:[#allocation2 + $0x28] sm:$0xff]
    %v3387 = vld [vmem:[#allocation2 + $0x30] sm:$0xff]
    %v3388 = vld [vmem:[#allocation2 + $0x38] sm:$0xff]
    %v3389 = vld [vmem:[#allocation2 + $0x40] sm:$0xff]
    %v3390 = vld [vmem:[#allocation2 + $0x48] sm:$0xff]
    %v3391 = vld [vmem:[#allocation2 + $0x50] sm:$0xff]
    %v3392 = vld [vmem:[#allocation2 + $0x58] sm:$0xff]
    %v3393 = vld [vmem:[#allocation2 + $0x60] sm:$0xff]
    %v3394 = vld [vmem:[#allocation2 + $0x68] sm:$0xff]
    %v3395 = vld [vmem:[#allocation2 + $0x70] sm:$0xff]
    %v3396 = vld [vmem:[#allocation2 + $0x78] sm:$0xff]
    %v3397 = vld [vmem:[#allocation5] sm:$0xff]
    %v3398 = vld [vmem:[#allocation5 + $0x8] sm:$0xff]
    %v3399 = vld [vmem:[#allocation5 + $0x10] sm:$0xff]
    %v3400 = vld [vmem:[#allocation5 + $0x18] sm:$0xff]
    %v3401 = vld [vmem:[#allocation5 + $0x20] sm:$0xff]
    %v3402 = vld [vmem:[#allocation5 + $0x28] sm:$0xff]
    %v3403 = vld [vmem:[#allocation5 + $0x30] sm:$0xff]
    %v3404 = vld [vmem:[#allocation5 + $0x38] sm:$0xff]
    %v3405 = vld [vmem:[#allocation5 + $0x40] sm:$0xff]
    %v3406 = vld [vmem:[#allocation5 + $0x48] sm:$0xff]
    %v3407 = vld [vmem:[#allocation5 + $0x50] sm:$0xff]
    %v3408 = vld [vmem:[#allocation5 + $0x58] sm:$0xff]
    %v3409 = vld [vmem:[#allocation5 + $0x60] sm:$0xff]
    %v3410 = vld [vmem:[#allocation5 + $0x68] sm:$0xff]
    %v3411 = vld [vmem:[#allocation5 + $0x70] sm:$0xff]
    %v3412 = vld [vmem:[#allocation5 + $0x78] sm:$0xff]
    %v3413 = vmul.f32 %v3381, %v171
    %v3414 = vmul.f32 %v3382, %v274
    %v3415 = vmul.f32 %v3383, %v377
    %v3416 = vmul.f32 %v3384, %v480
    %v3417 = vmul.f32 %v3385, %v583
    %v3418 = vmul.f32 %v3386, %v686
    %v3419 = vmul.f32 %v3387, %v789
    %v3420 = vmul.f32 %v3388, %v892
    %v3421 = vmul.f32 %v3389, %v995
    %v3422 = vmul.f32 %v3390, %v1098
    %v3423 = vmul.f32 %v3391, %v1201
    %v3424 = vmul.f32 %v3392, %v1304
    %v3425 = vmul.f32 %v3393, %v1407
    %v3426 = vmul.f32 %v3394, %v1510
    %v3427 = vmul.f32 %v3395, %v1613
    %v3428 = vmul.f32 %v3396, %v1716
    %v3429 = vmul.f32 %v3397, %v1820
    %v3430 = vmul.f32 %v3398, %v1924
    %v3431 = vmul.f32 %v3399, %v2028
    %v3432 = vmul.f32 %v3400, %v2132
    %v3433 = vmul.f32 %v3401, %v2236
    %v3434 = vmul.f32 %v3402, %v2340
    %v3435 = vmul.f32 %v3403, %v2444
    %v3436 = vmul.f32 %v3404, %v2548
    %v3437 = vmul.f32 %v3405, %v2652
    %v3438 = vmul.f32 %v3406, %v2756
    %v3439 = vmul.f32 %v3407, %v2860
    %v3440 = vmul.f32 %v3408, %v2964
    %v3441 = vmul.f32 %v3409, %v3068
    %v3442 = vmul.f32 %v3410, %v3172
    %v3443 = vmul.f32 %v3411, %v3276
    %v3444 = vmul.f32 %v3412, %v3380
    %v3445 = vsub.f32 %v3413, %v3429
    %v3446 = vsub.f32 %v3414, %v3430
    %v3447 = vsub.f32 %v3415, %v3431
    %v3448 = vsub.f32 %v3416, %v3432
    %v3449 = vsub.f32 %v3417, %v3433
    %v3450 = vsub.f32 %v3418, %v3434
    %v3451 = vsub.f32 %v3419, %v3435
    %v3452 = vsub.f32 %v3420, %v3436
    %v3453 = vsub.f32 %v3421, %v3437
    %v3454 = vsub.f32 %v3422, %v3438
    %v3455 = vsub.f32 %v3423, %v3439
    %v3456 = vsub.f32 %v3424, %v3440
    %v3457 = vsub.f32 %v3425, %v3441
    %v3458 = vsub.f32 %v3426, %v3442
    %v3459 = vsub.f32 %v3427, %v3443
    %v3460 = vsub.f32 %v3428, %v3444
    %3461 = vst [vmem:[#allocation8] sm:$0xff] %v3445
    %3462 = vst [vmem:[#allocation8 + $0x8] sm:$0xff] %v3446
    %3463 = vst [vmem:[#allocation8 + $0x10] sm:$0xff] %v3447
    %3464 = vst [vmem:[#allocation8 + $0x18] sm:$0xff] %v3448
    %3465 = vst [vmem:[#allocation8 + $0x20] sm:$0xff] %v3449
    %3466 = vst [vmem:[#allocation8 + $0x28] sm:$0xff] %v3450
    %3467 = vst [vmem:[#allocation8 + $0x30] sm:$0xff] %v3451
    %3468 = vst [vmem:[#allocation8 + $0x38] sm:$0xff] %v3452
    %3469 = vst [vmem:[#allocation8 + $0x40] sm:$0xff] %v3453
    %3470 = vst [vmem:[#allocation8 + $0x48] sm:$0xff] %v3454
    %3471 = vst [vmem:[#allocation8 + $0x50] sm:$0xff] %v3455
    %3472 = vst [vmem:[#allocation8 + $0x58] sm:$0xff] %v3456
    %3473 = vst [vmem:[#allocation8 + $0x60] sm:$0xff] %v3457
    %3474 = vst [vmem:[#allocation8 + $0x68] sm:$0xff] %v3458
    %3475 = vst [vmem:[#allocation8 + $0x70] sm:$0xff] %v3459
    %3476 = vst [vmem:[#allocation8 + $0x78] sm:$0xff] %v3460
    %v3477 = vmul.f32 %v3381, %v1820
    %v3478 = vmul.f32 %v3382, %v1924
    %v3479 = vmul.f32 %v3383, %v2028
    %v3480 = vmul.f32 %v3384, %v2132
    %v3481 = vmul.f32 %v3385, %v2236
    %v3482 = vmul.f32 %v3386, %v2340
    %v3483 = vmul.f32 %v3387, %v2444
    %v3484 = vmul.f32 %v3388, %v2548
    %v3485 = vmul.f32 %v3389, %v2652
    %v3486 = vmul.f32 %v3390, %v2756
    %v3487 = vmul.f32 %v3391, %v2860
    %v3488 = vmul.f32 %v3392, %v2964
    %v3489 = vmul.f32 %v3393, %v3068
    %v3490 = vmul.f32 %v3394, %v3172
    %v3491 = vmul.f32 %v3395, %v3276
    %v3492 = vmul.f32 %v3396, %v3380
    %v3493 = vmul.f32 %v3397, %v171
    %v3494 = vmul.f32 %v3398, %v274
    %v3495 = vmul.f32 %v3399, %v377
    %v3496 = vmul.f32 %v3400, %v480
    %v3497 = vmul.f32 %v3401, %v583
    %v3498 = vmul.f32 %v3402, %v686
    %v3499 = vmul.f32 %v3403, %v789
    %v3500 = vmul.f32 %v3404, %v892
    %v3501 = vmul.f32 %v3405, %v995
    %v3502 = vmul.f32 %v3406, %v1098
    %v3503 = vmul.f32 %v3407, %v1201
    %v3504 = vmul.f32 %v3408, %v1304
    %v3505 = vmul.f32 %v3409, %v1407
    %v3506 = vmul.f32 %v3410, %v1510
    %v3507 = vmul.f32 %v3411, %v1613
    %v3508 = vmul.f32 %v3412, %v1716
    %v3509 = vadd.f32 %v3477, %v3493
    %v3510 = vadd.f32 %v3478, %v3494
    %v3511 = vadd.f32 %v3479, %v3495
    %v3512 = vadd.f32 %v3480, %v3496
    %v3513 = vadd.f32 %v3481, %v3497
    %v3514 = vadd.f32 %v3482, %v3498
    %v3515 = vadd.f32 %v3483, %v3499
    %v3516 = vadd.f32 %v3484, %v3500
    %v3517 = vadd.f32 %v3485, %v3501
    %v3518 = vadd.f32 %v3486, %v3502
    %v3519 = vadd.f32 %v3487, %v3503
    %v3520 = vadd.f32 %v3488, %v3504
    %v3521 = vadd.f32 %v3489, %v3505
    %v3522 = vadd.f32 %v3490, %v3506
    %v3523 = vadd.f32 %v3491, %v3507
    %v3524 = vadd.f32 %v3492, %v3508
    %3525 = vst [vmem:[#allocation9] sm:$0xff] %v3509
    %3526 = vst [vmem:[#allocation9 + $0x8] sm:$0xff] %v3510
    %3527 = vst [vmem:[#allocation9 + $0x10] sm:$0xff] %v3511
    %3528 = vst [vmem:[#allocation9 + $0x18] sm:$0xff] %v3512
    %3529 = vst [vmem:[#allocation9 + $0x20] sm:$0xff] %v3513
    %3530 = vst [vmem:[#allocation9 + $0x28] sm:$0xff] %v3514
    %3531 = vst [vmem:[#allocation9 + $0x30] sm:$0xff] %v3515
    %3532 = vst [vmem:[#allocation9 + $0x38] sm:$0xff] %v3516
    %3533 = vst [vmem:[#allocation9 + $0x40] sm:$0xff] %v3517
    %3534 = vst [vmem:[#allocation9 + $0x48] sm:$0xff] %v3518
    %3535 = vst [vmem:[#allocation9 + $0x50] sm:$0xff] %v3519
    %3536 = vst [vmem:[#allocation9 + $0x58] sm:$0xff] %v3520
    %3537 = vst [vmem:[#allocation9 + $0x60] sm:$0xff] %v3521
    %3538 = vst [vmem:[#allocation9 + $0x68] sm:$0xff] %v3522
    %3539 = vst [vmem:[#allocation9 + $0x70] sm:$0xff] %v3523
    %3540 = vst [vmem:[#allocation9 + $0x78] sm:$0xff] %v3524
    // Predicated region
    $region26: #{tpu_custom_call.1} parent=1 // pred_check
      _
    $region27: #{tpu_custom_call.1} parent=1 // pred_check_branch
      %3542 = sbr.rel (0) target = $region29
    $region28: #{tpu_custom_call.1} parent=1 // pred_region
      %s3544 = ssub.s32 2048, 2048
      %3545 = vsyncadd [#allocation4], %s3544
      %s3547 = sshll.u32 [#allocation8], 4
      %s3548 = int_to_ptr.vmem [resolvable:$true] %s3547
      %3550 = dma.vmem_to_hbm [thread:$0]  %s3548, 2048, %s3, [#allocation4]
    $region29: #{tpu_custom_call.1} parent=1 // pred_fallthru
      _
    // Predicated region
    $region30: #{tpu_custom_call.1} parent=1 // pred_check
      _
    $region31: #{tpu_custom_call.1} parent=1 // pred_check_branch
      %3552 = sbr.rel (0) target = $region33
    $region32: #{tpu_custom_call.1} parent=1 // pred_region
      %s3554 = ssub.s32 2048, 2048
      %3555 = vsyncadd [#allocation10], %s3554
      %s3557 = sshll.u32 [#allocation9], 4
      %s3558 = int_to_ptr.vmem [resolvable:$true] %s3557
      %3560 = dma.vmem_to_hbm [thread:$0]  %s3558, 2048, %s4, [#allocation10]
    $region33: #{tpu_custom_call.1} parent=1 // pred_fallthru
      _
    // Predicated region
    $region34: #{tpu_custom_call.1} parent=1 // pred_check
      _
    $region35: #{tpu_custom_call.1} parent=1 // pred_check_branch
      %3562 = sbr.rel (0) target = $region37
    $region36: #{tpu_custom_call.1} parent=1 // pred_region
      %3563 = dma.done [#allocation4], 2048
    $region37: #{tpu_custom_call.1} parent=1 // pred_fallthru
      _
    // Predicated region
    $region38: #{tpu_custom_call.1} parent=1 // pred_check
      _
    $region39: #{tpu_custom_call.1} parent=1 // pred_check_branch
      %3565 = sbr.rel (0) target = $region41
    $region40: #{tpu_custom_call.1} parent=1 // pred_region
      %3566 = dma.done [#allocation10], 2048
    $region41: #{tpu_custom_call.1} parent=1 // pred_fallthru
      _
    %3567 = vsyncpa [#allocation3], 1
    %3568 = vsyncpa [#allocation6], 1
    %3569 = vsyncpa [#allocation4], 1
    %3570 = vsyncpa [#allocation10], 1

</llo_original>
